<compile_context>
chip_gen: v7x
topology: tpu7x:2x2x1
jax: 0.10.0
libtpu: 0.0.40
codegen_flags: <defaults>
</compile_context>

<pallas_src>
import functools

import jax
import jax.numpy as jnp
import numpy as np
from jax.experimental import pallas as pl
from jax.experimental.pallas import tpu as pltpu

# ---------------------------------------------------------------------------
# configuration
# ---------------------------------------------------------------------------
MAX_BLOCK_B = 128               # samples per grid step (multiple of 16)
H_PAD = 64                      # fc1 hidden padded (50 real)
OUT_PAD = 128                   # output lanes (num_classes real), dense store
VMEM_LIMIT = 32 * 1024 * 1024   # safe scoped-VMEM budget on v5e/v6e/v7x


def _pick_block_b(batch):
    """Prefer big blocks, but keep >=2 grid steps when the batch allows (v7x)."""
    if batch >= 2 * MAX_BLOCK_B:
        return MAX_BLOCK_B
    half = (batch + 1) // 2
    bb = ((half + 15) // 16) * 16
    return max(16, min(bb, MAX_BLOCK_B))


# ---------------------------------------------------------------------------
# fused Pallas kernel
# ---------------------------------------------------------------------------
def _fused_cnn_kernel(img_ref, g_ref, b1t_ref, h2_ref, b2t_ref,
                      fw1_ref, fb1_ref, fw2_ref, fb2_ref, o_ref):
    """Whole CNN forward for one batch block.

    img_ref: (7, bb, 112) bf16   image super-rows (4 image rows = 112 lanes)
    g_ref  : (2, 112, 1024) bf16 conv1 weights, pool window folded into lanes
    b1t_ref: (1, 256) f32        conv1 bias tiled over (row parity, col, ch)
    h2_ref : (3, 256, 512) bf16  conv2 weights, pool window folded into lanes
    b2t_ref: (1, 128) f32        conv2 bias tiled over (col, ch)
    fw1_ref: (4, 128, 64) bf16   fc1 weight slabs (NCHW flatten pre-applied)
    fb1_ref: (1, 64) f32
    fw2_ref: (64, 128) bf16      fc2 weight padded to 128 lanes
    fb2_ref: (1, 128) f32        fc2 bias, pad lanes = -1e30 (softmax mask)
    o_ref  : (bb, 128) f32       log-probs (pad lanes ~ -1e30)
    """
    bb = img_ref.shape[1]
    f32 = jnp.float32

    # ---- conv1 (5x5, 1->10) + 2x2 maxpool + ReLU : 2 MXU matmuls ----------
    x = img_ref[...]                                   # (7, bb, 112)
    lhs0 = x[0:6].reshape(6 * bb, 112)                 # rows r = k*bb + b
    lhs1 = x[1:7].reshape(6 * bb, 112)                 # super-row k+1 per row
    res1 = jnp.dot(lhs0, g_ref[0], preferred_element_type=f32)
    res1 = res1 + jnp.dot(lhs1, g_ref[1], preferred_element_type=f32)
    # lanes = pool-window(4) x [row-parity(2) x 12 cols x 10 ch] -> max over window
    p1 = jnp.maximum(jnp.maximum(res1[:, 0:256], res1[:, 256:512]),
                     jnp.maximum(res1[:, 512:768], res1[:, 768:1024]))
    y1 = jnp.maximum(p1 + b1t_ref[...], 0.0)           # (6*bb, 256) f32
    y1 = y1.astype(jnp.bfloat16)

    # ---- conv2 (5x5, 10->20) + (dropout2d: identity) + pool + ReLU --------
    # overlapping row windows are contiguous slices thanks to k-major rows
    res2 = jnp.dot(y1[0:4 * bb], h2_ref[0], preferred_element_type=f32)
    res2 = res2 + jnp.dot(y1[bb:5 * bb], h2_ref[1], preferred_element_type=f32)
    res2 = res2 + jnp.dot(y1[2 * bb:6 * bb], h2_ref[2], preferred_element_type=f32)
    p2 = jnp.maximum(jnp.maximum(res2[:, 0:128], res2[:, 128:256]),
                     jnp.maximum(res2[:, 256:384], res2[:, 384:512]))
    y2 = jnp.maximum(p2 + b2t_ref[...], 0.0)           # (4*bb, 128), rows i2*bb+b
    y2 = y2.astype(jnp.bfloat16)

    # ---- fc1 + ReLU: NCHW flatten folded into 4 accumulated matmuls -------
    acc = jnp.dot(y2[0:bb], fw1_ref[0], preferred_element_type=f32)
    for i2 in range(1, 4):
        acc = acc + jnp.dot(y2[i2 * bb:(i2 + 1) * bb], fw1_ref[i2],
                            preferred_element_type=f32)
    h1 = jnp.maximum(acc + fb1_ref[...], 0.0)          # (bb, 64)
    # TODO(synk): F.dropout(training=True) stochastic masking not applied.

    # ---- fc2 + log_softmax (pad lanes masked via -1e30 bias) --------------
    logits = jnp.dot(h1.astype(jnp.bfloat16), fw2_ref[...],
                     preferred_element_type=f32) + fb2_ref[...]
    m = jnp.max(logits, axis=-1, keepdims=True)
    lse = m + jnp.log(jnp.sum(jnp.exp(logits - m), axis=-1, keepdims=True))
    o_ref[...] = logits - lse


def _fused_call(ximg, params, bb, bp):
    g, b1t, h2, b2t = params["g"], params["b1t"], params["h2"], params["b2t"]
    fw1, fb1, fw2, fb2 = params["fw1"], params["fb1"], params["fw2"], params["fb2"]
    return pl.pallas_call(
        _fused_cnn_kernel,
        out_shape=jax.ShapeDtypeStruct((bp, OUT_PAD), jnp.float32),
        grid=(bp // bb,),
        in_specs=[
            pl.BlockSpec((7, bb, 112), lambda i: (0, i, 0)),
            pl.BlockSpec(g.shape, lambda i: (0, 0, 0)),
            pl.BlockSpec(b1t.shape, lambda i: (0, 0)),
            pl.BlockSpec(h2.shape, lambda i: (0, 0, 0)),
            pl.BlockSpec(b2t.shape, lambda i: (0, 0)),
            pl.BlockSpec(fw1.shape, lambda i: (0, 0, 0)),
            pl.BlockSpec(fb1.shape, lambda i: (0, 0)),
            pl.BlockSpec(fw2.shape, lambda i: (0, 0)),
            pl.BlockSpec(fb2.shape, lambda i: (0, 0)),
        ],
        out_specs=pl.BlockSpec((bb, OUT_PAD), lambda i: (i, 0)),
        compiler_params=pltpu.CompilerParams(
            dimension_semantics=("parallel",),
            vmem_limit_bytes=VMEM_LIMIT),
    )(ximg, g, b1t, h2, b2t, fw1, fb1, fw2, fb2)


# ---------------------------------------------------------------------------
# full forward pass (inference mode, matches PyTorch CNN.forward)
# ---------------------------------------------------------------------------
@functools.partial(jax.jit, static_argnames=("num_classes",))
def cnn_forward(x, params, *, num_classes):
    """x: [B, 1, 28, 28] (NCHW) -> log-probs [B, num_classes]."""
    batch = x.shape[0]
    bb = _pick_block_b(batch)
    bp = ((batch + bb - 1) // bb) * bb

    img = x.reshape(batch, 28, 28).astype(jnp.bfloat16)     # cast before glue
    if bp != batch:
        img = jnp.pad(img, ((0, bp - batch), (0, 0), (0, 0)))
    # (7, Bp, 112): super-row-major, sample-minor — the only XLA-side glue.
    ximg = jnp.transpose(img.reshape(bp, 7, 112), (1, 0, 2))

    out = _fused_call(ximg, params, bb, bp)                  # (Bp, 128) f32
    return out[:batch, :num_classes]


# ---------------------------------------------------------------------------
# raw (PyTorch-layout) parameters
# ---------------------------------------------------------------------------
def init_raw_params(key, num_classes):
    ks = jax.random.split(key, 8)
    return dict(
        conv1_w=jax.random.normal(ks[0], (10, 1, 5, 5), jnp.float32) * 0.1,
        conv1_b=jax.random.normal(ks[1], (10,), jnp.float32) * 0.1,
        conv2_w=jax.random.normal(ks[2], (20, 10, 5, 5), jnp.float32) * 0.1,
        conv2_b=jax.random.normal(ks[3], (20,), jnp.float32) * 0.1,
        fc1_w=jax.random.normal(ks[4], (50, 320), jnp.float32) * 0.05,
        fc1_b=jax.random.normal(ks[5], (50,), jnp.float32) * 0.05,
        fc2_w=jax.random.normal(ks[6], (num_classes, 50), jnp.float32) * 0.05,
        fc2_b=jax.random.normal(ks[7], (num_classes,), jnp.float32) * 0.05,
    )


def prepare_params(raw):
    """Fold conv taps, pool windows, flatten permutation and padding into the
    dense matmul weights used by the fused kernel (runs once on the host)."""
    w1 = np.asarray(raw["conv1_w"], np.float32)     # (10, 1, 5, 5)
    b1 = np.asarray(raw["conv1_b"], np.float32)
    w2 = np.asarray(raw["conv2_w"], np.float32)     # (20, 10, 5, 5)
    b2 = np.asarray(raw["conv2_b"], np.float32)
    f1w = np.asarray(raw["fc1_w"], np.float32)      # (50, 320)
    f1b = np.asarray(raw["fc1_b"], np.float32)
    f2w = np.asarray(raw["fc2_w"], np.float32)      # (C, 50)
    f2b = np.asarray(raw["fc2_b"], np.float32)
    n_cls = f2w.shape[0]

    # conv1: G[m, r*28+w, pw*256 + q*128 + j*10 + ci] = w1[ci,0,kh,kw]
    #   output row (per sample) k=0..5; conv row y = 4k + 2q + py; col x = 2j + px
    #   image row used = 4(k+m) + r ; kh = 4m + r - 2q - py ; kw = w - 2j - px
    g = np.zeros((2, 112, 1024), np.float32)
    for m in range(2):
        for r in range(4):
            for q in range(2):
                for py in range(2):
                    kh = 4 * m + r - 2 * q - py
                    if not 0 <= kh <= 4:
                        continue
                    for px in range(2):
                        pw = py * 2 + px
                        for j in range(12):
                            c0 = pw * 256 + q * 128 + j * 10
                            for kw in range(5):
                                w = 2 * j + px + kw
                                g[m, r * 28 + w, c0:c0 + 10] = w1[:, 0, kh, kw]

    b1t = np.zeros((1, 256), np.float32)
    for q in range(2):
        for j in range(12):
            b1t[0, q * 128 + j * 10: q * 128 + j * 10 + 10] = b1

    # conv2: H[m, q*128 + j*10 + ci, pw2*128 + j2*20 + co] = w2[co,ci,kh,kw]
    #   kh = 2m + q - qy ; kw = j - 2*j2 - qx ; pw2 = qy*2 + qx
    h2 = np.zeros((3, 256, 512), np.float32)
    for m in range(3):
        for q in range(2):
            for qy in range(2):
                kh = 2 * m + q - qy
                if not 0 <= kh <= 4:
                    continue
                for qx in range(2):
                    pw2 = qy * 2 + qx
                    for j2 in range(4):
                        c0 = pw2 * 128 + j2 * 20
                        for kw in range(5):
                            j = 2 * j2 + qx + kw
                            r0 = q * 128 + j * 10
                            h2[m, r0:r0 + 10, c0:c0 + 20] = w2[:, :, kh, kw].T

    b2t = np.zeros((1, 128), np.float32)
    for j2 in range(4):
        b2t[0, j2 * 20:j2 * 20 + 20] = b2

    # fc1: absorb the PyTorch NCHW flatten (n = co*16 + i2*4 + j2) into 4 slabs
    fw1 = np.zeros((4, 128, H_PAD), np.float32)
    for i2 in range(4):
        for j2 in range(4):
            for co in range(20):
                fw1[i2, j2 * 20 + co, :50] = f1w[:, co * 16 + i2 * 4 + j2]
    fb1 = np.zeros((1, H_PAD), np.float32)
    fb1[0, :50] = f1b

    # fc2 padded to 128 lanes; pad bias = -1e30 masks pad lanes in log_softmax
    fw2 = np.zeros((H_PAD, OUT_PAD), np.float32)
    fw2[:50, :n_cls] = f2w.T
    fb2 = np.full((1, OUT_PAD), -1e30, np.float32)
    fb2[0, :n_cls] = f2b

    bf = jnp.bfloat16
    return dict(
        g=jnp.asarray(g, bf), b1t=jnp.asarray(b1t),
        h2=jnp.asarray(h2, bf), b2t=jnp.asarray(b2t),
        fw1=jnp.asarray(fw1, bf), fb1=jnp.asarray(fb1),
        fw2=jnp.asarray(fw2, bf), fb2=jnp.asarray(fb2),
    )


# ---------------------------------------------------------------------------
# pure-JAX reference (mirrors the bf16 casts used by the kernel)
# ---------------------------------------------------------------------------
def reference_forward(x, raw):
    bf = jnp.bfloat16

    def conv(a, w):
        return jax.lax.conv_general_dilated(
            a, w, window_strides=(1, 1), padding="VALID",
            dimension_numbers=("NCHW", "OIHW", "NCHW"),
            preferred_element_type=jnp.float32)

    def pool2(a):
        n, c, hh, ww = a.shape
        return a.reshape(n, c, hh // 2, 2, ww // 2, 2).max(axis=(3, 5))

    a = conv(x.astype(bf), raw["conv1_w"].astype(bf)) + raw["conv1_b"][None, :, None, None]
    a = jnp.maximum(pool2(a), 0.0)
    a = conv(a.astype(bf), raw["conv2_w"].astype(bf)) + raw["conv2_b"][None, :, None, None]
    a = jnp.maximum(pool2(a), 0.0)
    a = a.reshape(a.shape[0], -1)
    h = jnp.dot(a.astype(bf), raw["fc1_w"].T.astype(bf),
                preferred_element_type=jnp.float32) + raw["fc1_b"]
    h = jnp.maximum(h, 0.0)
    logits = jnp.dot(h.astype(bf), raw["fc2_w"].T.astype(bf),
                     preferred_element_type=jnp.float32) + raw["fc2_b"]
    return jax.nn.log_softmax(logits, axis=-1)


# ---------------------------------------------------------------------------
if __name__ == "__main__":
    num_classes = 10
    batch = 24   # not a multiple of the 16-sample block: exercises padding + 2 grid steps

    key = jax.random.PRNGKey(0)
    key_x, key_p = jax.random.split(key)
    x = jax.random.normal(key_x, (batch, 1, 28, 28), jnp.float32)
    raw = init_raw_params(key_p, num_classes)
    params = prepare_params(raw)

    out = cnn_forward(x, params, num_classes=num_classes)
    out = jax.block_until_ready(out)

    assert out.shape == (batch, num_classes)
    assert bool(jnp.all(jnp.isfinite(out)))
    # log_softmax rows should sum (in prob space) to ~1
    assert bool(jnp.all(jnp.abs(jnp.sum(jnp.exp(out), axis=1) - 1.0) < 1e-3))

    # numerical agreement with a pure-JAX reference of the same (bf16) precision
    ref = reference_forward(x, raw)
    assert float(jnp.max(jnp.abs(out - ref))) < 2e-2

    print("KERNEL_OK")
</pallas_src>

<mosaic_0001>
module attributes {stable_mosaic.version = 11 : i64} {
  func.func @_fused_cnn_kernel(%arg0: i32, %arg1: memref<7x16x112xbf16, #tpu.memory_space<vmem>>, %arg2: memref<2x112x1024xbf16, #tpu.memory_space<vmem>>, %arg3: memref<1x256xf32, #tpu.memory_space<vmem>>, %arg4: memref<3x256x512xbf16, #tpu.memory_space<vmem>>, %arg5: memref<1x128xf32, #tpu.memory_space<vmem>>, %arg6: memref<4x128x64xbf16, #tpu.memory_space<vmem>>, %arg7: memref<1x64xf32, #tpu.memory_space<vmem>>, %arg8: memref<64x128xbf16, #tpu.memory_space<vmem>>, %arg9: memref<1x128xf32, #tpu.memory_space<vmem>>, %arg10: memref<16x128xf32, #tpu.memory_space<vmem>>) attributes {dimension_semantics = [#tpu.dimension_semantics<parallel>], iteration_bounds = array<i64: 2>, scalar_prefetch = 0 : i64, scratch_operands = 0 : i64, tpu.core_type = #tpu.core_type<tc>, window_params = [{transform_indices = @transform_0, window_bounds = array<i64: 7, 16, 112>}, {pipeline_mode = #tpu.pipeline_mode<synchronous>, transform_indices = @transform_1, window_bounds = array<i64: 2, 112, 1024>}, {pipeline_mode = #tpu.pipeline_mode<synchronous>, transform_indices = @transform_2, window_bounds = array<i64: 1, 256>}, {pipeline_mode = #tpu.pipeline_mode<synchronous>, transform_indices = @transform_3, window_bounds = array<i64: 3, 256, 512>}, {pipeline_mode = #tpu.pipeline_mode<synchronous>, transform_indices = @transform_4, window_bounds = array<i64: 1, 128>}, {pipeline_mode = #tpu.pipeline_mode<synchronous>, transform_indices = @transform_5, window_bounds = array<i64: 4, 128, 64>}, {pipeline_mode = #tpu.pipeline_mode<synchronous>, transform_indices = @transform_6, window_bounds = array<i64: 1, 64>}, {pipeline_mode = #tpu.pipeline_mode<synchronous>, transform_indices = @transform_7, window_bounds = array<i64: 64, 128>}, {pipeline_mode = #tpu.pipeline_mode<synchronous>, transform_indices = @transform_8, window_bounds = array<i64: 1, 128>}, {transform_indices = @transform_9, window_bounds = array<i64: 16, 128>}]} {
    %c0 = arith.constant 0 : index
    %c0_0 = arith.constant 0 : index
    %c0_1 = arith.constant 0 : index
    %0 = vector.load %arg1[%c0, %c0_0, %c0_1] : memref<7x16x112xbf16, #tpu.memory_space<vmem>>, vector<7x16x112xbf16>
    %1 = vector.extract_strided_slice %0 {offsets = [0, 0, 0], sizes = [6, 16, 112], strides = [1, 1, 1]} : vector<7x16x112xbf16> to vector<6x16x112xbf16>
    %2 = vector.shape_cast %1 : vector<6x16x112xbf16> to vector<96x112xbf16>
    %3 = vector.extract_strided_slice %0 {offsets = [1, 0, 0], sizes = [6, 16, 112], strides = [1, 1, 1]} : vector<7x16x112xbf16> to vector<6x16x112xbf16>
    %4 = vector.shape_cast %3 : vector<6x16x112xbf16> to vector<96x112xbf16>
    %c0_2 = arith.constant 0 : index
    %c0_3 = arith.constant 0 : index
    %c0_4 = arith.constant 0 : index
    %5 = vector.load %arg2[%c0_2, %c0_3, %c0_4] : memref<2x112x1024xbf16, #tpu.memory_space<vmem>>, vector<1x112x1024xbf16>
    %6 = vector.shape_cast %5 : vector<1x112x1024xbf16> to vector<112x1024xbf16>
    %cst = arith.constant dense<0.000000e+00> : vector<96x1024xf32>
    %7 = tpu.matmul %2, %6, %cst {dimension_numbers = #tpu.dot_dimension_numbers<[1], [0], [0], [1], [0, 0, 1, 1], [], []>} : vector<96x112xbf16>, vector<112x1024xbf16>, vector<96x1024xf32> -> vector<96x1024xf32>
    %c1 = arith.constant 1 : index
    %c0_5 = arith.constant 0 : index
    %c0_6 = arith.constant 0 : index
    %8 = vector.load %arg2[%c1, %c0_5, %c0_6] : memref<2x112x1024xbf16, #tpu.memory_space<vmem>>, vector<1x112x1024xbf16>
    %9 = vector.shape_cast %8 : vector<1x112x1024xbf16> to vector<112x1024xbf16>
    %cst_7 = arith.constant dense<0.000000e+00> : vector<96x1024xf32>
    %10 = tpu.matmul %4, %9, %cst_7 {dimension_numbers = #tpu.dot_dimension_numbers<[1], [0], [0], [1], [0, 0, 1, 1], [], []>} : vector<96x112xbf16>, vector<112x1024xbf16>, vector<96x1024xf32> -> vector<96x1024xf32>
    %11 = arith.addf %7, %10 : vector<96x1024xf32>
    %12 = vector.extract_strided_slice %11 {offsets = [0, 0], sizes = [96, 256], strides = [1, 1]} : vector<96x1024xf32> to vector<96x256xf32>
    %13 = vector.extract_strided_slice %11 {offsets = [0, 256], sizes = [96, 256], strides = [1, 1]} : vector<96x1024xf32> to vector<96x256xf32>
    %14 = arith.maximumf %12, %13 : vector<96x256xf32>
    %15 = vector.extract_strided_slice %11 {offsets = [0, 512], sizes = [96, 256], strides = [1, 1]} : vector<96x1024xf32> to vector<96x256xf32>
    %16 = vector.extract_strided_slice %11 {offsets = [0, 768], sizes = [96, 256], strides = [1, 1]} : vector<96x1024xf32> to vector<96x256xf32>
    %17 = arith.maximumf %15, %16 : vector<96x256xf32>
    %18 = arith.maximumf %14, %17 : vector<96x256xf32>
    %c0_8 = arith.constant 0 : index
    %c0_9 = arith.constant 0 : index
    %19 = vector.load %arg3[%c0_8, %c0_9] : memref<1x256xf32, #tpu.memory_space<vmem>>, vector<1x256xf32>
    %20 = vector.broadcast %19 : vector<1x256xf32> to vector<96x256xf32>
    %21 = arith.addf %18, %20 : vector<96x256xf32>
    %cst_10 = arith.constant 0.000000e+00 : f32
    %22 = vector.broadcast %cst_10 : f32 to vector<96x256xf32>
    %23 = arith.maximumf %21, %22 : vector<96x256xf32>
    %24 = arith.truncf %23 : vector<96x256xf32> to vector<96x256xbf16>
    %25 = vector.extract_strided_slice %24 {offsets = [0, 0], sizes = [64, 256], strides = [1, 1]} : vector<96x256xbf16> to vector<64x256xbf16>
    %c0_11 = arith.constant 0 : index
    %c0_12 = arith.constant 0 : index
    %c0_13 = arith.constant 0 : index
    %26 = vector.load %arg4[%c0_11, %c0_12, %c0_13] : memref<3x256x512xbf16, #tpu.memory_space<vmem>>, vector<1x256x512xbf16>
    %27 = vector.shape_cast %26 : vector<1x256x512xbf16> to vector<256x512xbf16>
    %cst_14 = arith.constant dense<0.000000e+00> : vector<64x512xf32>
    %28 = tpu.matmul %25, %27, %cst_14 {dimension_numbers = #tpu.dot_dimension_numbers<[1], [0], [0], [1], [0, 0, 1, 1], [], []>} : vector<64x256xbf16>, vector<256x512xbf16>, vector<64x512xf32> -> vector<64x512xf32>
    %29 = vector.extract_strided_slice %24 {offsets = [16, 0], sizes = [64, 256], strides = [1, 1]} : vector<96x256xbf16> to vector<64x256xbf16>
    %c1_15 = arith.constant 1 : index
    %c0_16 = arith.constant 0 : index
    %c0_17 = arith.constant 0 : index
    %30 = vector.load %arg4[%c1_15, %c0_16, %c0_17] : memref<3x256x512xbf16, #tpu.memory_space<vmem>>, vector<1x256x512xbf16>
    %31 = vector.shape_cast %30 : vector<1x256x512xbf16> to vector<256x512xbf16>
    %cst_18 = arith.constant dense<0.000000e+00> : vector<64x512xf32>
    %32 = tpu.matmul %29, %31, %cst_18 {dimension_numbers = #tpu.dot_dimension_numbers<[1], [0], [0], [1], [0, 0, 1, 1], [], []>} : vector<64x256xbf16>, vector<256x512xbf16>, vector<64x512xf32> -> vector<64x512xf32>
    %33 = arith.addf %28, %32 : vector<64x512xf32>
    %34 = vector.extract_strided_slice %24 {offsets = [32, 0], sizes = [64, 256], strides = [1, 1]} : vector<96x256xbf16> to vector<64x256xbf16>
    %c2 = arith.constant 2 : index
    %c0_19 = arith.constant 0 : index
    %c0_20 = arith.constant 0 : index
    %35 = vector.load %arg4[%c2, %c0_19, %c0_20] : memref<3x256x512xbf16, #tpu.memory_space<vmem>>, vector<1x256x512xbf16>
    %36 = vector.shape_cast %35 : vector<1x256x512xbf16> to vector<256x512xbf16>
    %cst_21 = arith.constant dense<0.000000e+00> : vector<64x512xf32>
    %37 = tpu.matmul %34, %36, %cst_21 {dimension_numbers = #tpu.dot_dimension_numbers<[1], [0], [0], [1], [0, 0, 1, 1], [], []>} : vector<64x256xbf16>, vector<256x512xbf16>, vector<64x512xf32> -> vector<64x512xf32>
    %38 = arith.addf %33, %37 : vector<64x512xf32>
    %39 = vector.extract_strided_slice %38 {offsets = [0, 0], sizes = [64, 128], strides = [1, 1]} : vector<64x512xf32> to vector<64x128xf32>
    %40 = vector.extract_strided_slice %38 {offsets = [0, 128], sizes = [64, 128], strides = [1, 1]} : vector<64x512xf32> to vector<64x128xf32>
    %41 = arith.maximumf %39, %40 : vector<64x128xf32>
    %42 = vector.extract_strided_slice %38 {offsets = [0, 256], sizes = [64, 128], strides = [1, 1]} : vector<64x512xf32> to vector<64x128xf32>
    %43 = vector.extract_strided_slice %38 {offsets = [0, 384], sizes = [64, 128], strides = [1, 1]} : vector<64x512xf32> to vector<64x128xf32>
    %44 = arith.maximumf %42, %43 : vector<64x128xf32>
    %45 = arith.maximumf %41, %44 : vector<64x128xf32>
    %c0_22 = arith.constant 0 : index
    %c0_23 = arith.constant 0 : index
    %46 = vector.load %arg5[%c0_22, %c0_23] : memref<1x128xf32, #tpu.memory_space<vmem>>, vector<1x128xf32>
    %47 = vector.broadcast %46 : vector<1x128xf32> to vector<64x128xf32>
    %48 = arith.addf %45, %47 : vector<64x128xf32>
    %cst_24 = arith.constant 0.000000e+00 : f32
    %49 = vector.broadcast %cst_24 : f32 to vector<64x128xf32>
    %50 = arith.maximumf %48, %49 : vector<64x128xf32>
    %51 = arith.truncf %50 : vector<64x128xf32> to vector<64x128xbf16>
    %52 = vector.extract_strided_slice %51 {offsets = [0, 0], sizes = [16, 128], strides = [1, 1]} : vector<64x128xbf16> to vector<16x128xbf16>
    %c0_25 = arith.constant 0 : index
    %c0_26 = arith.constant 0 : index
    %c0_27 = arith.constant 0 : index
    %53 = vector.load %arg6[%c0_25, %c0_26, %c0_27] : memref<4x128x64xbf16, #tpu.memory_space<vmem>>, vector<1x128x64xbf16>
    %54 = vector.shape_cast %53 : vector<1x128x64xbf16> to vector<128x64xbf16>
    %cst_28 = arith.constant dense<0.000000e+00> : vector<16x64xf32>
    %55 = tpu.matmul %52, %54, %cst_28 {dimension_numbers = #tpu.dot_dimension_numbers<[1], [0], [0], [1], [0, 0, 1, 1], [], []>} : vector<16x128xbf16>, vector<128x64xbf16>, vector<16x64xf32> -> vector<16x64xf32>
    %56 = vector.extract_strided_slice %51 {offsets = [16, 0], sizes = [16, 128], strides = [1, 1]} : vector<64x128xbf16> to vector<16x128xbf16>
    %c1_29 = arith.constant 1 : index
    %c0_30 = arith.constant 0 : index
    %c0_31 = arith.constant 0 : index
    %57 = vector.load %arg6[%c1_29, %c0_30, %c0_31] : memref<4x128x64xbf16, #tpu.memory_space<vmem>>, vector<1x128x64xbf16>
    %58 = vector.shape_cast %57 : vector<1x128x64xbf16> to vector<128x64xbf16>
    %cst_32 = arith.constant dense<0.000000e+00> : vector<16x64xf32>
    %59 = tpu.matmul %56, %58, %cst_32 {dimension_numbers = #tpu.dot_dimension_numbers<[1], [0], [0], [1], [0, 0, 1, 1], [], []>} : vector<16x128xbf16>, vector<128x64xbf16>, vector<16x64xf32> -> vector<16x64xf32>
    %60 = arith.addf %55, %59 : vector<16x64xf32>
    %61 = vector.extract_strided_slice %51 {offsets = [32, 0], sizes = [16, 128], strides = [1, 1]} : vector<64x128xbf16> to vector<16x128xbf16>
    %c2_33 = arith.constant 2 : index
    %c0_34 = arith.constant 0 : index
    %c0_35 = arith.constant 0 : index
    %62 = vector.load %arg6[%c2_33, %c0_34, %c0_35] : memref<4x128x64xbf16, #tpu.memory_space<vmem>>, vector<1x128x64xbf16>
    %63 = vector.shape_cast %62 : vector<1x128x64xbf16> to vector<128x64xbf16>
    %cst_36 = arith.constant dense<0.000000e+00> : vector<16x64xf32>
    %64 = tpu.matmul %61, %63, %cst_36 {dimension_numbers = #tpu.dot_dimension_numbers<[1], [0], [0], [1], [0, 0, 1, 1], [], []>} : vector<16x128xbf16>, vector<128x64xbf16>, vector<16x64xf32> -> vector<16x64xf32>
    %65 = arith.addf %60, %64 : vector<16x64xf32>
    %66 = vector.extract_strided_slice %51 {offsets = [48, 0], sizes = [16, 128], strides = [1, 1]} : vector<64x128xbf16> to vector<16x128xbf16>
    %c3 = arith.constant 3 : index
    %c0_37 = arith.constant 0 : index
    %c0_38 = arith.constant 0 : index
    %67 = vector.load %arg6[%c3, %c0_37, %c0_38] : memref<4x128x64xbf16, #tpu.memory_space<vmem>>, vector<1x128x64xbf16>
    %68 = vector.shape_cast %67 : vector<1x128x64xbf16> to vector<128x64xbf16>
    %cst_39 = arith.constant dense<0.000000e+00> : vector<16x64xf32>
    %69 = tpu.matmul %66, %68, %cst_39 {dimension_numbers = #tpu.dot_dimension_numbers<[1], [0], [0], [1], [0, 0, 1, 1], [], []>} : vector<16x128xbf16>, vector<128x64xbf16>, vector<16x64xf32> -> vector<16x64xf32>
    %70 = arith.addf %65, %69 : vector<16x64xf32>
    %c0_40 = arith.constant 0 : index
    %c0_41 = arith.constant 0 : index
    %71 = vector.load %arg7[%c0_40, %c0_41] : memref<1x64xf32, #tpu.memory_space<vmem>>, vector<1x64xf32>
    %72 = vector.broadcast %71 : vector<1x64xf32> to vector<16x64xf32>
    %73 = arith.addf %70, %72 : vector<16x64xf32>
    %cst_42 = arith.constant 0.000000e+00 : f32
    %74 = vector.broadcast %cst_42 : f32 to vector<16x64xf32>
    %75 = arith.maximumf %73, %74 : vector<16x64xf32>
    %76 = arith.truncf %75 : vector<16x64xf32> to vector<16x64xbf16>
    %c0_43 = arith.constant 0 : index
    %c0_44 = arith.constant 0 : index
    %77 = vector.load %arg8[%c0_43, %c0_44] : memref<64x128xbf16, #tpu.memory_space<vmem>>, vector<64x128xbf16>
    %cst_45 = arith.constant dense<0.000000e+00> : vector<16x128xf32>
    %78 = tpu.matmul %76, %77, %cst_45 {dimension_numbers = #tpu.dot_dimension_numbers<[1], [0], [0], [1], [0, 0, 1, 1], [], []>} : vector<16x64xbf16>, vector<64x128xbf16>, vector<16x128xf32> -> vector<16x128xf32>
    %c0_46 = arith.constant 0 : index
    %c0_47 = arith.constant 0 : index
    %79 = vector.load %arg9[%c0_46, %c0_47] : memref<1x128xf32, #tpu.memory_space<vmem>>, vector<1x128xf32>
    %80 = vector.broadcast %79 : vector<1x128xf32> to vector<16x128xf32>
    %81 = arith.addf %78, %80 : vector<16x128xf32>
    %cst_48 = arith.constant dense<0xFF800000> : vector<16xf32>
    %82 = vector.multi_reduction <maximumf>, %81, %cst_48 [1] : vector<16x128xf32> to vector<16xf32>
    %83 = vector.shape_cast %82 : vector<16xf32> to vector<16x1xf32>
    %84 = vector.broadcast %83 : vector<16x1xf32> to vector<16x128xf32>
    %85 = arith.subf %81, %84 : vector<16x128xf32>
    %86 = math.exp %85 : vector<16x128xf32>
    %cst_49 = arith.constant dense<0.000000e+00> : vector<16xf32>
    %87 = vector.multi_reduction <add>, %86, %cst_49 [1] : vector<16x128xf32> to vector<16xf32>
    %88 = vector.shape_cast %87 : vector<16xf32> to vector<16x1xf32>
    %89 = math.log %88 : vector<16x1xf32>
    %90 = arith.addf %83, %89 : vector<16x1xf32>
    %91 = vector.broadcast %90 : vector<16x1xf32> to vector<16x128xf32>
    %92 = arith.subf %81, %91 : vector<16x128xf32>
    %c0_50 = arith.constant 0 : index
    %c0_51 = arith.constant 0 : index
    %93 = vector.load %arg10[%c0_50, %c0_51] : memref<16x128xf32, #tpu.memory_space<vmem>>, vector<16x128xf32>
    tpu.vector_store %arg10[%c0_50, %c0_51], %92 {strides = array<i32>} : memref<16x128xf32, #tpu.memory_space<vmem>>, vector<16x128xf32>,
    return
  }
  func.func @transform_0(%arg0: i32) -> (i32, i32, i32) {
    %c0_i32 = arith.constant 0 : i32
    %c0_i32_0 = arith.constant 0 : i32
    %c0_i32_1 = arith.constant 0 : i32
    return %c0_i32, %arg0, %c0_i32_0 : i32, i32, i32
  }
  func.func @transform_1(%arg0: i32) -> (i32, i32, i32) {
    %c0_i32 = arith.constant 0 : i32
    %c0_i32_0 = arith.constant 0 : i32
    %c0_i32_1 = arith.constant 0 : i32
    %c0_i32_2 = arith.constant 0 : i32
    return %c0_i32, %c0_i32_0, %c0_i32_1 : i32, i32, i32
  }
  func.func @transform_2(%arg0: i32) -> (i32, i32) {
    %c0_i32 = arith.constant 0 : i32
    %c0_i32_0 = arith.constant 0 : i32
    %c0_i32_1 = arith.constant 0 : i32
    return %c0_i32, %c0_i32_0 : i32, i32
  }
  func.func @transform_3(%arg0: i32) -> (i32, i32, i32) {
    %c0_i32 = arith.constant 0 : i32
    %c0_i32_0 = arith.constant 0 : i32
    %c0_i32_1 = arith.constant 0 : i32
    %c0_i32_2 = arith.constant 0 : i32
    return %c0_i32, %c0_i32_0, %c0_i32_1 : i32, i32, i32
  }
  func.func @transform_4(%arg0: i32) -> (i32, i32) {
    %c0_i32 = arith.constant 0 : i32
    %c0_i32_0 = arith.constant 0 : i32
    %c0_i32_1 = arith.constant 0 : i32
    return %c0_i32, %c0_i32_0 : i32, i32
  }
  func.func @transform_5(%arg0: i32) -> (i32, i32, i32) {
    %c0_i32 = arith.constant 0 : i32
    %c0_i32_0 = arith.constant 0 : i32
    %c0_i32_1 = arith.constant 0 : i32
    %c0_i32_2 = arith.constant 0 : i32
    return %c0_i32, %c0_i32_0, %c0_i32_1 : i32, i32, i32
  }
  func.func @transform_6(%arg0: i32) -> (i32, i32) {
    %c0_i32 = arith.constant 0 : i32
    %c0_i32_0 = arith.constant 0 : i32
    %c0_i32_1 = arith.constant 0 : i32
    return %c0_i32, %c0_i32_0 : i32, i32
  }
  func.func @transform_7(%arg0: i32) -> (i32, i32) {
    %c0_i32 = arith.constant 0 : i32
    %c0_i32_0 = arith.constant 0 : i32
    %c0_i32_1 = arith.constant 0 : i32
    return %c0_i32, %c0_i32_0 : i32, i32
  }
  func.func @transform_8(%arg0: i32) -> (i32, i32) {
    %c0_i32 = arith.constant 0 : i32
    %c0_i32_0 = arith.constant 0 : i32
    %c0_i32_1 = arith.constant 0 : i32
    return %c0_i32, %c0_i32_0 : i32, i32
  }
  func.func @transform_9(%arg0: i32) -> (i32, i32) {
    %c0_i32 = arith.constant 0 : i32
    %c0_i32_0 = arith.constant 0 : i32
    return %arg0, %c0_i32 : i32, i32
  }
}

</mosaic_0001>

<llo_original>
// kernel: cnn_forward.1
$region0: #{cnn_forward.1}
  #allocation0 [shape = 'u32[]', space=smem, size = 0x4, offset = 0x4, fixed_abs, tag = 'smem constant byte address 0x4 - core index']
  #allocation1 [shape = 'u32[144,128]{1,0:T(1,128)}', space=vmem, size = 0x12000, scoped, tag = 'internal scratch']
  %s0 = inlined_call_operand.vmem [shape: bf16[7,32,112], index: 0, kind: input, shape index: {}]
  %s1 = inlined_call_operand.vmem [shape: bf16[2,112,1024], index: 1, kind: input, shape index: {}]
  %s2 = inlined_call_operand.vmem [shape: f32[1,256], index: 2, kind: input, shape index: {}]
  %s3 = inlined_call_operand.vmem [shape: bf16[3,256,512], index: 3, kind: input, shape index: {}]
  %s4 = inlined_call_operand.vmem [shape: f32[1,128], index: 4, kind: input, shape index: {}]
  %s5 = inlined_call_operand.vmem [shape: bf16[4,128,64], index: 5, kind: input, shape index: {}]
  %s6 = inlined_call_operand.vmem [shape: f32[1,64], index: 6, kind: input, shape index: {}]
  %s7 = inlined_call_operand.vmem [shape: bf16[64,128], index: 7, kind: input, shape index: {}]
  %s8 = inlined_call_operand.vmem [shape: f32[1,128], index: 8, kind: input, shape index: {}]
  %s9 = inlined_call_operand.vmem [shape: f32[32,128], index: 9, kind: output, shape index: {}]
  %s10 = sld [smem:[#allocation0]]
  $region110: #{cnn_forward.1} parent=0
    _
  %s12 = ssub.s32 1, %s10
  %s13 = scalar_select 0, %s12, %s10
  $region1: #{cnn_forward.1} parent=0
    #allocation2 [shape = 'u8[57344]{0}', space=vmem, size = 0xe000, scoped, tag = 'input window, operand 0']
    loop: start=0, step=1, limit=4
    $region2: #{cnn_forward.1} parent=1 // loop_pre_header
      _
    $region3: #{cnn_forward.1} parent=1 // loop_header
      %s15 = sphi 0, %s19
      %p16 = scmp.ge.s32.totalorder %s15, 4
      %s25 = sphi 0, %s27
      %s28 = sphi 0, %s25
      %s29 = sphi 0, %s28
      %s45 = sphi 0, %s29
      %s49 = sphi 0, %s49
      %s51 = sphi 0, %s49
      %s52 = sphi 0, %s51
      %s66 = sphi 0, %s52
      %s70 = sphi 0, %s70
      %s72 = sphi 0, %s70
      %s73 = sphi 0, %s72
      %s87 = sphi 0, %s73
      %s91 = sphi 0, %s91
      %s93 = sphi 0, %s91
      %s94 = sphi 0, %s93
      %s108 = sphi 0, %s94
      %s112 = sphi 0, %s112
      %s114 = sphi 0, %s112
      %s115 = sphi 0, %s114
      %s129 = sphi 0, %s115
      %s133 = sphi 0, %s133
      %s135 = sphi 0, %s133
      %s136 = sphi 0, %s135
      %s150 = sphi 0, %s136
      %s154 = sphi 0, %s154
      %s156 = sphi 0, %s154
      %s157 = sphi 0, %s156
      %s171 = sphi 0, %s157
      %s175 = sphi 0, %s175
      %s177 = sphi 0, %s175
      %s178 = sphi 0, %s177
      %s192 = sphi 0, %s178
      %s196 = sphi 0, %s196
      %s198 = sphi 0, %s196
      %s199 = sphi 0, %s198
      %s213 = sphi 0, %s199
      %s219 = sphi 0, %s221
      %s222 = sphi 0, %s219
      %s223 = sphi 0, %s222
      %s239 = sphi 0, %s223
    $region4: #{cnn_forward.1} parent=1 // loop_header_branch
      %18 = sbr.rel (%p16) target = $region8
    $region5: #{cnn_forward.1} parent=1 // loop_body
      %s20 = ssub.s32 %s15, 1
      %s21 = ssub.s32 %s15, 2
      %s22 = sadd.s32 %s15, 1
      %s23 = ssub.s32 %s15, %s22
      %p24 = scmp.eq.s32.totalorder %s23, 0
      %s26 = sadd.s32 %s25, 1
      %s27 = scalar_select %p24, %s25, %s26
      %p30 = pneg %p24
      %p31 = scmp.eq.s32.totalorder %s15, 1
      %p32 = por %p30, %p31
      %p33 = scmp.ne.s32.totalorder %s25, %s28
      %p34 = scmp.eq.s32.totalorder %s15, 0
      %p35 = por %p33, %p34
      %p36 = scmp.ne.s32.totalorder %s25, %s28
      %p37 = scmp.eq.s32.totalorder %s20, 1
      %p38 = por %p36, %p37
      %p39 = scmp.ne.s32.totalorder %s28, %s29
      %p40 = scmp.eq.s32.totalorder %s20, 0
      %p41 = por %p39, %p40
      %p42 = scmp.ne.s32.totalorder %s28, %s29
      %p43 = scmp.eq.s32.totalorder %s21, 1
      %p44 = por %p42, %p43
      %p46 = scmp.ne.s32.totalorder %s29, %s45
      %p47 = scmp.eq.s32.totalorder %s21, 0
      %p48 = por %p46, %p47
      %s50 = sadd.s32 %s49, 1
      %p53 = scmp.eq.s32.totalorder %s15, 1
      %p54 = scmp.ne.s32.totalorder %s49, %s51
      %p55 = scmp.eq.s32.totalorder %s15, 0
      %p56 = por %p54, %p55
      %p57 = scmp.ne.s32.totalorder %s49, %s51
      %p58 = scmp.eq.s32.totalorder %s20, 1
      %p59 = por %p57, %p58
      %p60 = scmp.ne.s32.totalorder %s51, %s52
      %p61 = scmp.eq.s32.totalorder %s20, 0
      %p62 = por %p60, %p61
      %p63 = scmp.ne.s32.totalorder %s51, %s52
      %p64 = scmp.eq.s32.totalorder %s21, 1
      %p65 = por %p63, %p64
      %p67 = scmp.ne.s32.totalorder %s52, %s66
      %p68 = scmp.eq.s32.totalorder %s21, 0
      %p69 = por %p67, %p68
      %s71 = sadd.s32 %s70, 1
      %p74 = scmp.eq.s32.totalorder %s15, 1
      %p75 = scmp.ne.s32.totalorder %s70, %s72
      %p76 = scmp.eq.s32.totalorder %s15, 0
      %p77 = por %p75, %p76
      %p78 = scmp.ne.s32.totalorder %s70, %s72
      %p79 = scmp.eq.s32.totalorder %s20, 1
      %p80 = por %p78, %p79
      %p81 = scmp.ne.s32.totalorder %s72, %s73
      %p82 = scmp.eq.s32.totalorder %s20, 0
      %p83 = por %p81, %p82
      %p84 = scmp.ne.s32.totalorder %s72, %s73
      %p85 = scmp.eq.s32.totalorder %s21, 1
      %p86 = por %p84, %p85
      %p88 = scmp.ne.s32.totalorder %s73, %s87
      %p89 = scmp.eq.s32.totalorder %s21, 0
      %p90 = por %p88, %p89
      %s92 = sadd.s32 %s91, 1
      %p95 = scmp.eq.s32.totalorder %s15, 1
      %p96 = scmp.ne.s32.totalorder %s91, %s93
      %p97 = scmp.eq.s32.totalorder %s15, 0
      %p98 = por %p96, %p97
      %p99 = scmp.ne.s32.totalorder %s91, %s93
      %p100 = scmp.eq.s32.totalorder %s20, 1
      %p101 = por %p99, %p100
      %p102 = scmp.ne.s32.totalorder %s93, %s94
      %p103 = scmp.eq.s32.totalorder %s20, 0
      %p104 = por %p102, %p103
      %p105 = scmp.ne.s32.totalorder %s93, %s94
      %p106 = scmp.eq.s32.totalorder %s21, 1
      %p107 = por %p105, %p106
      %p109 = scmp.ne.s32.totalorder %s94, %s108
      %p110 = scmp.eq.s32.totalorder %s21, 0
      %p111 = por %p109, %p110
      %s113 = sadd.s32 %s112, 1
      %p116 = scmp.eq.s32.totalorder %s15, 1
      %p117 = scmp.ne.s32.totalorder %s112, %s114
      %p118 = scmp.eq.s32.totalorder %s15, 0
      %p119 = por %p117, %p118
      %p120 = scmp.ne.s32.totalorder %s112, %s114
      %p121 = scmp.eq.s32.totalorder %s20, 1
      %p122 = por %p120, %p121
      %p123 = scmp.ne.s32.totalorder %s114, %s115
      %p124 = scmp.eq.s32.totalorder %s20, 0
      %p125 = por %p123, %p124
      %p126 = scmp.ne.s32.totalorder %s114, %s115
      %p127 = scmp.eq.s32.totalorder %s21, 1
      %p128 = por %p126, %p127
      %p130 = scmp.ne.s32.totalorder %s115, %s129
      %p131 = scmp.eq.s32.totalorder %s21, 0
      %p132 = por %p130, %p131
      %s134 = sadd.s32 %s133, 1
      %p137 = scmp.eq.s32.totalorder %s15, 1
      %p138 = scmp.ne.s32.totalorder %s133, %s135
      %p139 = scmp.eq.s32.totalorder %s15, 0
      %p140 = por %p138, %p139
      %p141 = scmp.ne.s32.totalorder %s133, %s135
      %p142 = scmp.eq.s32.totalorder %s20, 1
      %p143 = por %p141, %p142
      %p144 = scmp.ne.s32.totalorder %s135, %s136
      %p145 = scmp.eq.s32.totalorder %s20, 0
      %p146 = por %p144, %p145
      %p147 = scmp.ne.s32.totalorder %s135, %s136
      %p148 = scmp.eq.s32.totalorder %s21, 1
      %p149 = por %p147, %p148
      %p151 = scmp.ne.s32.totalorder %s136, %s150
      %p152 = scmp.eq.s32.totalorder %s21, 0
      %p153 = por %p151, %p152
      %s155 = sadd.s32 %s154, 1
      %p158 = scmp.eq.s32.totalorder %s15, 1
      %p159 = scmp.ne.s32.totalorder %s154, %s156
      %p160 = scmp.eq.s32.totalorder %s15, 0
      %p161 = por %p159, %p160
      %p162 = scmp.ne.s32.totalorder %s154, %s156
      %p163 = scmp.eq.s32.totalorder %s20, 1
      %p164 = por %p162, %p163
      %p165 = scmp.ne.s32.totalorder %s156, %s157
      %p166 = scmp.eq.s32.totalorder %s20, 0
      %p167 = por %p165, %p166
      %p168 = scmp.ne.s32.totalorder %s156, %s157
      %p169 = scmp.eq.s32.totalorder %s21, 1
      %p170 = por %p168, %p169
      %p172 = scmp.ne.s32.totalorder %s157, %s171
      %p173 = scmp.eq.s32.totalorder %s21, 0
      %p174 = por %p172, %p173
      %s176 = sadd.s32 %s175, 1
      %p179 = scmp.eq.s32.totalorder %s15, 1
      %p180 = scmp.ne.s32.totalorder %s175, %s177
      %p181 = scmp.eq.s32.totalorder %s15, 0
      %p182 = por %p180, %p181
      %p183 = scmp.ne.s32.totalorder %s175, %s177
      %p184 = scmp.eq.s32.totalorder %s20, 1
      %p185 = por %p183, %p184
      %p186 = scmp.ne.s32.totalorder %s177, %s178
      %p187 = scmp.eq.s32.totalorder %s20, 0
      %p188 = por %p186, %p187
      %p189 = scmp.ne.s32.totalorder %s177, %s178
      %p190 = scmp.eq.s32.totalorder %s21, 1
      %p191 = por %p189, %p190
      %p193 = scmp.ne.s32.totalorder %s178, %s192
      %p194 = scmp.eq.s32.totalorder %s21, 0
      %p195 = por %p193, %p194
      %s197 = sadd.s32 %s196, 1
      %p200 = scmp.eq.s32.totalorder %s15, 1
      %p201 = scmp.ne.s32.totalorder %s196, %s198
      %p202 = scmp.eq.s32.totalorder %s15, 0
      %p203 = por %p201, %p202
      %p204 = scmp.ne.s32.totalorder %s196, %s198
      %p205 = scmp.eq.s32.totalorder %s20, 1
      %p206 = por %p204, %p205
      %p207 = scmp.ne.s32.totalorder %s198, %s199
      %p208 = scmp.eq.s32.totalorder %s20, 0
      %p209 = por %p207, %p208
      %p210 = scmp.ne.s32.totalorder %s198, %s199
      %p211 = scmp.eq.s32.totalorder %s21, 1
      %p212 = por %p210, %p211
      %p214 = scmp.ne.s32.totalorder %s199, %s213
      %p215 = scmp.eq.s32.totalorder %s21, 0
      %p216 = por %p214, %p215
      %s217 = ssub.s32 %s15, %s22
      %p218 = scmp.eq.s32.totalorder %s217, 0
      %s220 = sadd.s32 %s219, 1
      %s221 = scalar_select %p218, %s219, %s220
      %p224 = pneg %p218
      %p225 = scmp.eq.s32.totalorder %s15, 1
      %p226 = por %p224, %p225
      %p227 = scmp.ne.s32.totalorder %s219, %s222
      %p228 = scmp.eq.s32.totalorder %s15, 0
      %p229 = por %p227, %p228
      %p230 = scmp.ne.s32.totalorder %s219, %s222
      %p231 = scmp.eq.s32.totalorder %s20, 1
      %p232 = por %p230, %p231
      %p233 = scmp.ne.s32.totalorder %s222, %s223
      %p234 = scmp.eq.s32.totalorder %s20, 0
      %p235 = por %p233, %p234
      %p236 = scmp.ne.s32.totalorder %s222, %s223
      %p237 = scmp.eq.s32.totalorder %s21, 1
      %p238 = por %p236, %p237
      %p240 = scmp.ne.s32.totalorder %s223, %s239
      %p241 = scmp.eq.s32.totalorder %s21, 0
      %p242 = por %p240, %p241
      %p243 = scmp.le.s32.totalorder 1, %s15
      %p244 = scmp.lt.s32.totalorder %s15, 3
      %p245 = pnand %p243, %p244
      %p246 = pneg %p245
      // Predicated region
      $region9: #{cnn_forward.1} parent=5 // pred_check
        _
      $region10: #{cnn_forward.1} parent=5 // pred_check_branch
        %248 = sbr.rel (%p245) target = $region12
      $region11: #{cnn_forward.1} parent=5 // pred_region
        %s249 = ssub.s32 %s15, 1
        // Predicated region
        $region13: #{cnn_forward.1} parent=11 // pred_check
          %p250 = pneg %p62
        $region14: #{cnn_forward.1} parent=11 // pred_check_branch
          %252 = sbr.rel (%p250) target = $region16
        $region15: #{cnn_forward.1} parent=11 // pred_region
          _
        $region16: #{cnn_forward.1} parent=11 // pred_fallthru
          _
        // Predicated region
        $region17: #{cnn_forward.1} parent=11 // pred_check
          %p253 = pneg %p83
        $region18: #{cnn_forward.1} parent=11 // pred_check_branch
          %255 = sbr.rel (%p253) target = $region20
        $region19: #{cnn_forward.1} parent=11 // pred_region
          _
        $region20: #{cnn_forward.1} parent=11 // pred_fallthru
          _
        // Predicated region
        $region21: #{cnn_forward.1} parent=11 // pred_check
          %p256 = pneg %p104
        $region22: #{cnn_forward.1} parent=11 // pred_check_branch
          %258 = sbr.rel (%p256) target = $region24
        $region23: #{cnn_forward.1} parent=11 // pred_region
          _
        $region24: #{cnn_forward.1} parent=11 // pred_fallthru
          _
        // Predicated region
        $region25: #{cnn_forward.1} parent=11 // pred_check
          %p259 = pneg %p125
        $region26: #{cnn_forward.1} parent=11 // pred_check_branch
          %261 = sbr.rel (%p259) target = $region28
        $region27: #{cnn_forward.1} parent=11 // pred_region
          _
        $region28: #{cnn_forward.1} parent=11 // pred_fallthru
          _
        // Predicated region
        $region29: #{cnn_forward.1} parent=11 // pred_check
          %p262 = pneg %p146
        $region30: #{cnn_forward.1} parent=11 // pred_check_branch
          %264 = sbr.rel (%p262) target = $region32
        $region31: #{cnn_forward.1} parent=11 // pred_region
          _
        $region32: #{cnn_forward.1} parent=11 // pred_fallthru
          _
        // Predicated region
        $region33: #{cnn_forward.1} parent=11 // pred_check
          %p265 = pneg %p167
        $region34: #{cnn_forward.1} parent=11 // pred_check_branch
          %267 = sbr.rel (%p265) target = $region36
        $region35: #{cnn_forward.1} parent=11 // pred_region
          _
        $region36: #{cnn_forward.1} parent=11 // pred_fallthru
          _
        // Predicated region
        $region37: #{cnn_forward.1} parent=11 // pred_check
          %p268 = pneg %p188
        $region38: #{cnn_forward.1} parent=11 // pred_check_branch
          %270 = sbr.rel (%p268) target = $region40
        $region39: #{cnn_forward.1} parent=11 // pred_region
          _
        $region40: #{cnn_forward.1} parent=11 // pred_fallthru
          _
        // Predicated region
        $region41: #{cnn_forward.1} parent=11 // pred_check
          %p271 = pneg %p209
        $region42: #{cnn_forward.1} parent=11 // pred_check_branch
          %273 = sbr.rel (%p271) target = $region44
        $region43: #{cnn_forward.1} parent=11 // pred_region
          _
        $region44: #{cnn_forward.1} parent=11 // pred_fallthru
          _
      $region12: #{cnn_forward.1} parent=5 // pred_fallthru
        _
      %p274 = scmp.lt.s32.totalorder %s15, 2
      // Predicated region
      $region45: #{cnn_forward.1} parent=5 // pred_check
        %p275 = pneg %p274
      $region46: #{cnn_forward.1} parent=5 // pred_check_branch
        %277 = sbr.rel (%p275) target = $region48
      $region47: #{cnn_forward.1} parent=5 // pred_region
        // Predicated region
        $region49: #{cnn_forward.1} parent=47 // pred_check
          %p278 = pneg %p35
        $region50: #{cnn_forward.1} parent=47 // pred_check_branch
          %280 = sbr.rel (%p278) target = $region52
        $region51: #{cnn_forward.1} parent=47 // pred_region
          %s281 = sand.u32 %s25, 1
          %s282 = sand.u32 %s25, 1
          %s283 = smul.addr %s282, 56
          %s284 = scalar_lea.vmem [#allocation2], %s283
          %s285 = smul.u32 2, %s15
          %s286 = smul.addr %s285, 4
          %s287 = scalar_lea.vmem %s0, %s286
          // Predicated region
          $region53: #{cnn_forward.1} parent=51 // pred_check
            _
          $region54: #{cnn_forward.1} parent=51 // pred_check_branch
            %289 = sbr.rel (0) target = $region56
          $region55: #{cnn_forward.1} parent=51 // pred_region
            // Predicated region
            $region57: #{cnn_forward.1} parent=55 // pred_check
              _
            $region58: #{cnn_forward.1} parent=55 // pred_check_branch
              %291 = sbr.rel target = $region60
            $region59: #{cnn_forward.1} parent=55 // pred_region
              // Predicated region
              $region72: #{cnn_forward.1} parent=59 // pred_check
                _
              $region73: #{cnn_forward.1} parent=59 // pred_check_branch
                %332 = sbr.rel (0) target = $region75
              $region74: #{cnn_forward.1} parent=59 // pred_region
                loop: start=0, step=1, limit=1
                $region76: #{cnn_forward.1} parent=74 // loop_pre_header
                  _
                $region77: #{cnn_forward.1} parent=74 // loop_header
                  %s334 = sphi 0, %s338
                  %p335 = scmp.ge.s32.totalorder %s334, 1
                  %s339 = sphi %s287, %s287
                  %s340 = sphi %s284, %s284
                $region78: #{cnn_forward.1} parent=74 // loop_header_branch
                  %337 = sbr.rel (%p335) target = $region82
                $region79: #{cnn_forward.1} parent=74 // loop_body
                  _
                $region80: #{cnn_forward.1} parent=74 // loop_footer
                  %s338 = sadd.s32 1, %s334
                $region81: #{cnn_forward.1} parent=74 // loop_footer_branch
                  %333 = sbr.rel target = $region77
                $region82: #{cnn_forward.1} parent=74 // loop_exit
                  _
                loop: start=0, step=1, limit=1
                $region83: #{cnn_forward.1} parent=74 // loop_pre_header
                  _
                $region84: #{cnn_forward.1} parent=74 // loop_header
                  %s343 = sphi 0, %s347
                  %p344 = scmp.ge.s32.totalorder %s343, 1
                  %s348 = sphi %s287, %s287
                  %s349 = sphi %s284, %s284
                $region85: #{cnn_forward.1} parent=74 // loop_header_branch
                  %346 = sbr.rel (%p344) target = $region89
                $region86: #{cnn_forward.1} parent=74 // loop_body
                  %v350 = vld [vmem:[%s348] sm:$0xf]
                  %351 = vst [vmem:[%s349] sm:$0xf] %v350
                  %v352 = vld [vmem:[%s348 + $0x4] sm:$0xf]
                  %353 = vst [vmem:[%s349 + $0x4] sm:$0xf] %v352
                  %v354 = vld [vmem:[%s348 + $0x10] sm:$0xf]
                  %355 = vst [vmem:[%s349 + $0x8] sm:$0xf] %v354
                  %v356 = vld [vmem:[%s348 + $0x14] sm:$0xf]
                  %357 = vst [vmem:[%s349 + $0xc] sm:$0xf] %v356
                  %v358 = vld [vmem:[%s348 + $0x20] sm:$0xf]
                  %359 = vst [vmem:[%s349 + $0x10] sm:$0xf] %v358
                  %v360 = vld [vmem:[%s348 + $0x24] sm:$0xf]
                  %361 = vst [vmem:[%s349 + $0x14] sm:$0xf] %v360
                  %v362 = vld [vmem:[%s348 + $0x30] sm:$0xf]
                  %363 = vst [vmem:[%s349 + $0x18] sm:$0xf] %v362
                  %v364 = vld [vmem:[%s348 + $0x34] sm:$0xf]
                  %365 = vst [vmem:[%s349 + $0x1c] sm:$0xf] %v364
                  %v366 = vld [vmem:[%s348 + $0x40] sm:$0xf]
                  %367 = vst [vmem:[%s349 + $0x20] sm:$0xf] %v366
                  %v368 = vld [vmem:[%s348 + $0x44] sm:$0xf]
                  %369 = vst [vmem:[%s349 + $0x24] sm:$0xf] %v368
                  %v370 = vld [vmem:[%s348 + $0x50] sm:$0xf]
                  %371 = vst [vmem:[%s349 + $0x28] sm:$0xf] %v370
                  %v372 = vld [vmem:[%s348 + $0x54] sm:$0xf]
                  %373 = vst [vmem:[%s349 + $0x2c] sm:$0xf] %v372
                  %v374 = vld [vmem:[%s348 + $0x60] sm:$0xf]
                  %375 = vst [vmem:[%s349 + $0x30] sm:$0xf] %v374
                  %v376 = vld [vmem:[%s348 + $0x64] sm:$0xf]
                  %377 = vst [vmem:[%s349 + $0x34] sm:$0xf] %v376
                $region87: #{cnn_forward.1} parent=74 // loop_footer
                  %s347 = sadd.s32 1, %s343
                $region88: #{cnn_forward.1} parent=74 // loop_footer_branch
                  %342 = sbr.rel target = $region84
                $region89: #{cnn_forward.1} parent=74 // loop_exit
                  _
              $region75: #{cnn_forward.1} parent=59 // pred_fallthru
                _
            $region60: #{cnn_forward.1} parent=55 // pred_fallthru
              _
            // Predicated region
            $region61: #{cnn_forward.1} parent=55 // pred_check
              _
            $region62: #{cnn_forward.1} parent=55 // pred_check_branch
              %293 = sbr.rel (0) target = $region64
            $region63: #{cnn_forward.1} parent=55 // pred_region
              loop: start=0, step=1, limit=1
              $region65: #{cnn_forward.1} parent=63 // loop_pre_header
                _
              $region66: #{cnn_forward.1} parent=63 // loop_header
                %s296 = sphi 0, %s300
                %p297 = scmp.ge.s32.totalorder %s296, 1
                %s301 = sphi %s287, %s287
                %s302 = sphi %s284, %s284
              $region67: #{cnn_forward.1} parent=63 // loop_header_branch
                %299 = sbr.rel (%p297) target = $region71
              $region68: #{cnn_forward.1} parent=63 // loop_body
                %v303 = vld [vmem:[%s301] sm:$0xf]
                %304 = vst [vmem:[%s302] sm:$0xf] %v303
                %v305 = vld [vmem:[%s301 + $0x4] sm:$0xf]
                %306 = vst [vmem:[%s302 + $0x4] sm:$0xf] %v305
                %v307 = vld [vmem:[%s301 + $0x10] sm:$0xf]
                %308 = vst [vmem:[%s302 + $0x8] sm:$0xf] %v307
                %v309 = vld [vmem:[%s301 + $0x14] sm:$0xf]
                %310 = vst [vmem:[%s302 + $0xc] sm:$0xf] %v309
                %v311 = vld [vmem:[%s301 + $0x20] sm:$0xf]
                %312 = vst [vmem:[%s302 + $0x10] sm:$0xf] %v311
                %v313 = vld [vmem:[%s301 + $0x24] sm:$0xf]
                %314 = vst [vmem:[%s302 + $0x14] sm:$0xf] %v313
                %v315 = vld [vmem:[%s301 + $0x30] sm:$0xf]
                %316 = vst [vmem:[%s302 + $0x18] sm:$0xf] %v315
                %v317 = vld [vmem:[%s301 + $0x34] sm:$0xf]
                %318 = vst [vmem:[%s302 + $0x1c] sm:$0xf] %v317
                %v319 = vld [vmem:[%s301 + $0x40] sm:$0xf]
                %320 = vst [vmem:[%s302 + $0x20] sm:$0xf] %v319
                %v321 = vld [vmem:[%s301 + $0x44] sm:$0xf]
                %322 = vst [vmem:[%s302 + $0x24] sm:$0xf] %v321
                %v323 = vld [vmem:[%s301 + $0x50] sm:$0xf]
                %324 = vst [vmem:[%s302 + $0x28] sm:$0xf] %v323
                %v325 = vld [vmem:[%s301 + $0x54] sm:$0xf]
                %326 = vst [vmem:[%s302 + $0x2c] sm:$0xf] %v325
                %v327 = vld [vmem:[%s301 + $0x60] sm:$0xf]
                %328 = vst [vmem:[%s302 + $0x30] sm:$0xf] %v327
                %v329 = vld [vmem:[%s301 + $0x64] sm:$0xf]
                %330 = vst [vmem:[%s302 + $0x34] sm:$0xf] %v329
              $region69: #{cnn_forward.1} parent=63 // loop_footer
                %s300 = sadd.s32 1, %s296
              $region70: #{cnn_forward.1} parent=63 // loop_footer_branch
                %295 = sbr.rel target = $region66
              $region71: #{cnn_forward.1} parent=63 // loop_exit
                _
            $region64: #{cnn_forward.1} parent=55 // pred_fallthru
              _
          $region56: #{cnn_forward.1} parent=51 // pred_fallthru
            _
          %378 = vnop
        $region52: #{cnn_forward.1} parent=47 // pred_fallthru
          _
      $region48: #{cnn_forward.1} parent=5 // pred_fallthru
        _
      %p379 = scmp.le.s32.totalorder 1, %s15
      %p380 = scmp.lt.s32.totalorder %s15, 3
      %p381 = pnand %p379, %p380
      %p382 = pneg %p381
      // Predicated region
      $region90: #{cnn_forward.1} parent=5 // pred_check
        _
      $region91: #{cnn_forward.1} parent=5 // pred_check_branch
        %384 = sbr.rel (%p381) target = $region93
      $region92: #{cnn_forward.1} parent=5 // pred_region
        %s385 = ssub.s32 %s15, 1
        %s386 = sand.u32 %s28, 1
        %s387 = sand.u32 %s28, 1
        %s388 = smul.addr %s387, 56
        %s389 = scalar_lea.vmem [#allocation2], %s388
        // Predicated region
        $region94: #{cnn_forward.1} parent=92 // pred_check
          %p390 = pneg %p41
        $region95: #{cnn_forward.1} parent=92 // pred_check_branch
          %392 = sbr.rel (%p390) target = $region97
        $region96: #{cnn_forward.1} parent=92 // pred_region
          _
        $region97: #{cnn_forward.1} parent=92 // pred_fallthru
          _
        %s393 = sand.u32 %s28, 1
        %s394 = sand.u32 %s28, 1
        %s395 = smul.addr %s394, 56
        %s396 = scalar_lea.vmem [#allocation2], %s395
        %p397 = pneg %p41
        %p398 = pneg %p38
        %p399 = pneg %p62
        %p400 = pneg %p59
        %p401 = pneg %p83
        %p402 = pneg %p80
        %p403 = pneg %p104
        %p404 = pneg %p101
        %p405 = pneg %p125
        %p406 = pneg %p122
        %p407 = pneg %p146
        %p408 = pneg %p143
        %p409 = pneg %p167
        %p410 = pneg %p164
        %p411 = pneg %p188
        %p412 = pneg %p185
        %p413 = pneg %p209
        %p414 = pneg %p206
        %p415 = pneg %p235
        %p416 = pneg %p232
        %s417 = smul.u32 2, %s20
        %p418 = scmp.lt.s32.totalorder %s417, 3
        %s419 = scalar_select %p418, %s417, 3
        %s420 = smul.addr %s419, 8
        %s421 = scalar_lea.vmem %s9, %s420
        %s422 = smul.u32 2, %s20
        %s423 = smul.u32 2, %s20
        %p424 = scmp.lt.s32.totalorder %s423, 3
        %s425 = scalar_select %p424, %s423, 3
        %s426 = smul.addr %s425, 8
        %s427 = scalar_lea.vmem %s9, %s426
        %s428 = smul.u32 2, %s20
        %v430 = vld [vmem:[%s389] sm:$0xf]
        %v431 = vld [vmem:[%s389 + $0x4] sm:$0xf]
        %v432 = vld [vmem:[%s389 + $0x8] sm:$0xf]
        %v433 = vld [vmem:[%s389 + $0xc] sm:$0xf]
        %v434 = vld [vmem:[%s389 + $0x10] sm:$0xf]
        %v435 = vld [vmem:[%s389 + $0x14] sm:$0xf]
        %v436 = vld [vmem:[%s389 + $0x18] sm:$0xf]
        %v437 = vld [vmem:[%s389 + $0x1c] sm:$0xf]
        %v438 = vld [vmem:[%s389 + $0x20] sm:$0xf]
        %v439 = vld [vmem:[%s389 + $0x24] sm:$0xf]
        %v440 = vld [vmem:[%s389 + $0x28] sm:$0xf]
        %v441 = vld [vmem:[%s389 + $0x2c] sm:$0xf]
        %v442 = vld [vmem:[%s389 + $0x30] sm:$0xf]
        %v443 = vld [vmem:[%s389 + $0x34] sm:$0xf]
        %v444 = vld [vmem:[%s1] sm:$0xff]
        %v445 = vld [vmem:[%s1 + $0x8] sm:$0xff]
        %v446 = vld [vmem:[%s1 + $0x10] sm:$0xff]
        %v447 = vld [vmem:[%s1 + $0x18] sm:$0xff]
        %v448 = vld [vmem:[%s1 + $0x20] sm:$0xff]
        %v449 = vld [vmem:[%s1 + $0x28] sm:$0xff]
        %v450 = vld [vmem:[%s1 + $0x30] sm:$0xff]
        %v451 = vld [vmem:[%s1 + $0x38] sm:$0xff]
        %v452 = vld [vmem:[%s1 + $0x40] sm:$0xff]
        %v453 = vld [vmem:[%s1 + $0x48] sm:$0xff]
        %v454 = vld [vmem:[%s1 + $0x50] sm:$0xff]
        %v455 = vld [vmem:[%s1 + $0x58] sm:$0xff]
        %v456 = vld [vmem:[%s1 + $0x60] sm:$0xff]
        %v457 = vld [vmem:[%s1 + $0x68] sm:$0xff]
        %v458 = vld [vmem:[%s1 + $0x70] sm:$0xff]
        %v459 = vld [vmem:[%s1 + $0x78] sm:$0xff]
        %v460 = vld [vmem:[%s1 + $0x80] sm:$0xff]
        %v461 = vld [vmem:[%s1 + $0x88] sm:$0xff]
        %v462 = vld [vmem:[%s1 + $0x90] sm:$0xff]
        %v463 = vld [vmem:[%s1 + $0x98] sm:$0xff]
        %v464 = vld [vmem:[%s1 + $0xa0] sm:$0xff]
        %v465 = vld [vmem:[%s1 + $0xa8] sm:$0xff]
        %v466 = vld [vmem:[%s1 + $0xb0] sm:$0xff]
        %v467 = vld [vmem:[%s1 + $0xb8] sm:$0xff]
        %v468 = vld [vmem:[%s1 + $0xc0] sm:$0xff]
        %v469 = vld [vmem:[%s1 + $0xc8] sm:$0xff]
        %v470 = vld [vmem:[%s1 + $0xd0] sm:$0xff]
        %v471 = vld [vmem:[%s1 + $0xd8] sm:$0xff]
        %v472 = vld [vmem:[%s1 + $0xe0] sm:$0xff]
        %v473 = vld [vmem:[%s1 + $0xe8] sm:$0xff]
        %v474 = vld [vmem:[%s1 + $0xf0] sm:$0xff]
        %v475 = vld [vmem:[%s1 + $0xf8] sm:$0xff]
        %v476 = vld [vmem:[%s1 + $0x100] sm:$0xff]
        %v477 = vld [vmem:[%s1 + $0x108] sm:$0xff]
        %v478 = vld [vmem:[%s1 + $0x110] sm:$0xff]
        %v479 = vld [vmem:[%s1 + $0x118] sm:$0xff]
        %v480 = vld [vmem:[%s1 + $0x120] sm:$0xff]
        %v481 = vld [vmem:[%s1 + $0x128] sm:$0xff]
        %v482 = vld [vmem:[%s1 + $0x130] sm:$0xff]
        %v483 = vld [vmem:[%s1 + $0x138] sm:$0xff]
        %v484 = vld [vmem:[%s1 + $0x140] sm:$0xff]
        %v485 = vld [vmem:[%s1 + $0x148] sm:$0xff]
        %v486 = vld [vmem:[%s1 + $0x150] sm:$0xff]
        %v487 = vld [vmem:[%s1 + $0x158] sm:$0xff]
        %v488 = vld [vmem:[%s1 + $0x160] sm:$0xff]
        %v489 = vld [vmem:[%s1 + $0x168] sm:$0xff]
        %v490 = vld [vmem:[%s1 + $0x170] sm:$0xff]
        %v491 = vld [vmem:[%s1 + $0x178] sm:$0xff]
        %v492 = vld [vmem:[%s1 + $0x180] sm:$0xff]
        %v493 = vld [vmem:[%s1 + $0x188] sm:$0xff]
        %v494 = vld [vmem:[%s1 + $0x190] sm:$0xff]
        %v495 = vld [vmem:[%s1 + $0x198] sm:$0xff]
        %v496 = vld [vmem:[%s1 + $0x1a0] sm:$0xff]
        %v497 = vld [vmem:[%s1 + $0x1a8] sm:$0xff]
        %v498 = vld [vmem:[%s1 + $0x1b0] sm:$0xff]
        %v499 = vld [vmem:[%s1 + $0x1b8] sm:$0xff]
        %s500 = scalar_lea.vmem %s1, 448
        %v501 = vld [vmem:[%s500] sm:$0xff]
        %v502 = vld [vmem:[%s500 + $0x8] sm:$0xff]
        %v503 = vld [vmem:[%s500 + $0x10] sm:$0xff]
        %v504 = vld [vmem:[%s500 + $0x18] sm:$0xff]
        %v505 = vld [vmem:[%s500 + $0x20] sm:$0xff]
        %v506 = vld [vmem:[%s500 + $0x28] sm:$0xff]
        %v507 = vld [vmem:[%s500 + $0x30] sm:$0xff]
        %v508 = vld [vmem:[%s500 + $0x38] sm:$0xff]
        %v509 = vld [vmem:[%s500 + $0x40] sm:$0xff]
        %v510 = vld [vmem:[%s500 + $0x48] sm:$0xff]
        %v511 = vld [vmem:[%s500 + $0x50] sm:$0xff]
        %v512 = vld [vmem:[%s500 + $0x58] sm:$0xff]
        %v513 = vld [vmem:[%s500 + $0x60] sm:$0xff]
        %v514 = vld [vmem:[%s500 + $0x68] sm:$0xff]
        %v515 = vld [vmem:[%s500 + $0x70] sm:$0xff]
        %v516 = vld [vmem:[%s500 + $0x78] sm:$0xff]
        %v517 = vld [vmem:[%s500 + $0x80] sm:$0xff]
        %v518 = vld [vmem:[%s500 + $0x88] sm:$0xff]
        %v519 = vld [vmem:[%s500 + $0x90] sm:$0xff]
        %v520 = vld [vmem:[%s500 + $0x98] sm:$0xff]
        %v521 = vld [vmem:[%s500 + $0xa0] sm:$0xff]
        %v522 = vld [vmem:[%s500 + $0xa8] sm:$0xff]
        %v523 = vld [vmem:[%s500 + $0xb0] sm:$0xff]
        %v524 = vld [vmem:[%s500 + $0xb8] sm:$0xff]
        %v525 = vld [vmem:[%s500 + $0xc0] sm:$0xff]
        %v526 = vld [vmem:[%s500 + $0xc8] sm:$0xff]
        %v527 = vld [vmem:[%s500 + $0xd0] sm:$0xff]
        %v528 = vld [vmem:[%s500 + $0xd8] sm:$0xff]
        %v529 = vld [vmem:[%s500 + $0xe0] sm:$0xff]
        %v530 = vld [vmem:[%s500 + $0xe8] sm:$0xff]
        %v531 = vld [vmem:[%s500 + $0xf0] sm:$0xff]
        %v532 = vld [vmem:[%s500 + $0xf8] sm:$0xff]
        %v533 = vld [vmem:[%s500 + $0x100] sm:$0xff]
        %v534 = vld [vmem:[%s500 + $0x108] sm:$0xff]
        %v535 = vld [vmem:[%s500 + $0x110] sm:$0xff]
        %v536 = vld [vmem:[%s500 + $0x118] sm:$0xff]
        %v537 = vld [vmem:[%s500 + $0x120] sm:$0xff]
        %v538 = vld [vmem:[%s500 + $0x128] sm:$0xff]
        %v539 = vld [vmem:[%s500 + $0x130] sm:$0xff]
        %v540 = vld [vmem:[%s500 + $0x138] sm:$0xff]
        %v541 = vld [vmem:[%s500 + $0x140] sm:$0xff]
        %v542 = vld [vmem:[%s500 + $0x148] sm:$0xff]
        %v543 = vld [vmem:[%s500 + $0x150] sm:$0xff]
        %v544 = vld [vmem:[%s500 + $0x158] sm:$0xff]
        %v545 = vld [vmem:[%s500 + $0x160] sm:$0xff]
        %v546 = vld [vmem:[%s500 + $0x168] sm:$0xff]
        %v547 = vld [vmem:[%s500 + $0x170] sm:$0xff]
        %v548 = vld [vmem:[%s500 + $0x178] sm:$0xff]
        %v549 = vld [vmem:[%s500 + $0x180] sm:$0xff]
        %v550 = vld [vmem:[%s500 + $0x188] sm:$0xff]
        %v551 = vld [vmem:[%s500 + $0x190] sm:$0xff]
        %v552 = vld [vmem:[%s500 + $0x198] sm:$0xff]
        %v553 = vld [vmem:[%s500 + $0x1a0] sm:$0xff]
        %v554 = vld [vmem:[%s500 + $0x1a8] sm:$0xff]
        %v555 = vld [vmem:[%s500 + $0x1b0] sm:$0xff]
        %v556 = vld [vmem:[%s500 + $0x1b8] sm:$0xff]
        %v569 = vunpack.c.l.b16 %v432
        %v570 = vunpack.c.l.b16 %v433
        %v571 = vunpack.c.l.b16 %v434
        %v572 = vunpack.c.l.b16 %v435
        %v573 = vunpack.c.l.b16 %v436
        %v574 = vunpack.c.l.b16 %v437
        %v575 = vunpack.c.l.b16 %v438
        %v576 = vunpack.c.l.b16 %v439
        %v577 = vunpack.c.l.b16 %v440
        %v578 = vunpack.c.l.b16 %v441
        %v579 = vunpack.c.l.b16 %v442
        %v580 = vunpack.c.l.b16 %v443
        %v581 = vpack.c.b16 %v570, %v569
        %v582 = vpack.c.b16 %v572, %v571
        %v583 = vpack.c.b16 %v574, %v573
        %v584 = vpack.c.b16 %v576, %v575
        %v585 = vpack.c.b16 %v578, %v577
        %v586 = vpack.c.b16 %v580, %v579
        %v643 = vunpack.c.l.b16 %v501
        %v644 = vunpack.c.h.b16 %v501
        %v645 = vunpack.c.l.b16 %v502
        %v646 = vunpack.c.h.b16 %v502
        %v647 = vunpack.c.l.b16 %v503
        %v648 = vunpack.c.h.b16 %v503
        %v649 = vunpack.c.l.b16 %v504
        %v650 = vunpack.c.h.b16 %v504
        %v651 = vunpack.c.l.b16 %v505
        %v652 = vunpack.c.h.b16 %v505
        %v653 = vunpack.c.l.b16 %v506
        %v654 = vunpack.c.h.b16 %v506
        %v655 = vunpack.c.l.b16 %v507
        %v656 = vunpack.c.h.b16 %v507
        %v657 = vunpack.c.l.b16 %v508
        %v658 = vunpack.c.h.b16 %v508
        %v659 = vunpack.c.l.b16 %v509
        %v660 = vunpack.c.h.b16 %v509
        %v661 = vunpack.c.l.b16 %v510
        %v662 = vunpack.c.h.b16 %v510
        %v663 = vunpack.c.l.b16 %v511
        %v664 = vunpack.c.h.b16 %v511
        %v665 = vunpack.c.l.b16 %v512
        %v666 = vunpack.c.h.b16 %v512
        %v667 = vunpack.c.l.b16 %v513
        %v668 = vunpack.c.h.b16 %v513
        %v669 = vunpack.c.l.b16 %v514
        %v670 = vunpack.c.h.b16 %v514
        %v671 = vunpack.c.l.b16 %v515
        %v672 = vunpack.c.h.b16 %v515
        %v673 = vunpack.c.l.b16 %v516
        %v674 = vunpack.c.h.b16 %v516
        %v675 = vunpack.c.l.b16 %v517
        %v676 = vunpack.c.h.b16 %v517
        %v677 = vunpack.c.l.b16 %v518
        %v678 = vunpack.c.h.b16 %v518
        %v679 = vunpack.c.l.b16 %v519
        %v680 = vunpack.c.h.b16 %v519
        %v681 = vunpack.c.l.b16 %v520
        %v682 = vunpack.c.h.b16 %v520
        %v683 = vunpack.c.l.b16 %v521
        %v684 = vunpack.c.h.b16 %v521
        %v685 = vunpack.c.l.b16 %v522
        %v686 = vunpack.c.h.b16 %v522
        %v687 = vunpack.c.l.b16 %v523
        %v688 = vunpack.c.h.b16 %v523
        %v689 = vunpack.c.l.b16 %v524
        %v690 = vunpack.c.h.b16 %v524
        %v691 = vunpack.c.l.b16 %v525
        %v692 = vunpack.c.h.b16 %v525
        %v693 = vunpack.c.l.b16 %v526
        %v694 = vunpack.c.h.b16 %v526
        %v695 = vunpack.c.l.b16 %v527
        %v696 = vunpack.c.h.b16 %v527
        %v697 = vunpack.c.l.b16 %v528
        %v698 = vunpack.c.h.b16 %v528
        %v699 = vunpack.c.l.b16 %v529
        %v700 = vunpack.c.h.b16 %v529
        %v701 = vunpack.c.l.b16 %v530
        %v702 = vunpack.c.h.b16 %v530
        %v703 = vunpack.c.l.b16 %v531
        %v704 = vunpack.c.h.b16 %v531
        %v705 = vunpack.c.l.b16 %v532
        %v706 = vunpack.c.h.b16 %v532
        %v707 = vunpack.c.l.b16 %v533
        %v708 = vunpack.c.h.b16 %v533
        %v709 = vunpack.c.l.b16 %v534
        %v710 = vunpack.c.h.b16 %v534
        %v711 = vunpack.c.l.b16 %v535
        %v712 = vunpack.c.h.b16 %v535
        %v713 = vunpack.c.l.b16 %v536
        %v714 = vunpack.c.h.b16 %v536
        %v715 = vunpack.c.l.b16 %v537
        %v716 = vunpack.c.h.b16 %v537
        %v717 = vunpack.c.l.b16 %v538
        %v718 = vunpack.c.h.b16 %v538
        %v719 = vunpack.c.l.b16 %v539
        %v720 = vunpack.c.h.b16 %v539
        %v721 = vunpack.c.l.b16 %v540
        %v722 = vunpack.c.h.b16 %v540
        %v723 = vunpack.c.l.b16 %v541
        %v724 = vunpack.c.h.b16 %v541
        %v725 = vunpack.c.l.b16 %v542
        %v726 = vunpack.c.h.b16 %v542
        %v727 = vunpack.c.l.b16 %v543
        %v728 = vunpack.c.h.b16 %v543
        %v729 = vunpack.c.l.b16 %v544
        %v730 = vunpack.c.h.b16 %v544
        %v731 = vunpack.c.l.b16 %v545
        %v732 = vunpack.c.h.b16 %v545
        %v733 = vunpack.c.l.b16 %v546
        %v734 = vunpack.c.h.b16 %v546
        %v735 = vunpack.c.l.b16 %v547
        %v736 = vunpack.c.h.b16 %v547
        %v737 = vunpack.c.l.b16 %v548
        %v738 = vunpack.c.h.b16 %v548
        %v739 = vunpack.c.l.b16 %v549
        %v740 = vunpack.c.h.b16 %v549
        %v741 = vunpack.c.l.b16 %v550
        %v742 = vunpack.c.h.b16 %v550
        %v743 = vunpack.c.l.b16 %v551
        %v744 = vunpack.c.h.b16 %v551
        %v745 = vunpack.c.l.b16 %v552
        %v746 = vunpack.c.h.b16 %v552
        %v747 = vunpack.c.l.b16 %v553
        %v748 = vunpack.c.h.b16 %v553
        %v749 = vunpack.c.l.b16 %v554
        %v750 = vunpack.c.h.b16 %v554
        %v751 = vunpack.c.l.b16 %v555
        %v752 = vunpack.c.h.b16 %v555
        %v753 = vunpack.c.l.b16 %v556
        %v754 = vunpack.c.h.b16 %v556
        %v755 = vpack.c.b16 %v651, %v643
        %v756 = vpack.c.b16 %v652, %v644
        %v757 = vpack.c.b16 %v653, %v645
        %v758 = vpack.c.b16 %v654, %v646
        %v759 = vpack.c.b16 %v655, %v647
        %v760 = vpack.c.b16 %v656, %v648
        %v761 = vpack.c.b16 %v657, %v649
        %v762 = vpack.c.b16 %v658, %v650
        %v763 = vpack.c.b16 %v667, %v659
        %v764 = vpack.c.b16 %v668, %v660
        %v765 = vpack.c.b16 %v669, %v661
        %v766 = vpack.c.b16 %v670, %v662
        %v767 = vpack.c.b16 %v671, %v663
        %v768 = vpack.c.b16 %v672, %v664
        %v769 = vpack.c.b16 %v673, %v665
        %v770 = vpack.c.b16 %v674, %v666
        %v771 = vpack.c.b16 %v683, %v675
        %v772 = vpack.c.b16 %v684, %v676
        %v773 = vpack.c.b16 %v685, %v677
        %v774 = vpack.c.b16 %v686, %v678
        %v775 = vpack.c.b16 %v687, %v679
        %v776 = vpack.c.b16 %v688, %v680
        %v777 = vpack.c.b16 %v689, %v681
        %v778 = vpack.c.b16 %v690, %v682
        %v779 = vpack.c.b16 %v699, %v691
        %v780 = vpack.c.b16 %v700, %v692
        %v781 = vpack.c.b16 %v701, %v693
        %v782 = vpack.c.b16 %v702, %v694
        %v783 = vpack.c.b16 %v703, %v695
        %v784 = vpack.c.b16 %v704, %v696
        %v785 = vpack.c.b16 %v705, %v697
        %v786 = vpack.c.b16 %v706, %v698
        %v787 = vpack.c.b16 %v715, %v707
        %v788 = vpack.c.b16 %v716, %v708
        %v789 = vpack.c.b16 %v717, %v709
        %v790 = vpack.c.b16 %v718, %v710
        %v791 = vpack.c.b16 %v719, %v711
        %v792 = vpack.c.b16 %v720, %v712
        %v793 = vpack.c.b16 %v721, %v713
        %v794 = vpack.c.b16 %v722, %v714
        %v795 = vpack.c.b16 %v731, %v723
        %v796 = vpack.c.b16 %v732, %v724
        %v797 = vpack.c.b16 %v733, %v725
        %v798 = vpack.c.b16 %v734, %v726
        %v799 = vpack.c.b16 %v735, %v727
        %v800 = vpack.c.b16 %v736, %v728
        %v801 = vpack.c.b16 %v737, %v729
        %v802 = vpack.c.b16 %v738, %v730
        %v803 = vpack.c.b16 %v747, %v739
        %v804 = vpack.c.b16 %v748, %v740
        %v805 = vpack.c.b16 %v749, %v741
        %v806 = vpack.c.b16 %v750, %v742
        %v807 = vpack.c.b16 %v751, %v743
        %v808 = vpack.c.b16 %v752, %v744
        %v809 = vpack.c.b16 %v753, %v745
        %v810 = vpack.c.b16 %v754, %v746
        %vm867 = vcmask 916480
        %v869 = vsel %vm867, %v581, 0
        %v872 = vsel %vm867, %v582, 0
        %v875 = vsel %vm867, %v583, 0
        %v878 = vsel %vm867, %v584, 0
        %v881 = vsel %vm867, %v585, 0
        %v884 = vsel %vm867, %v586, 0
        %886 = vmatprep.subr.bf16.mxu0 %v756
        %887 = vmatpush1.bf16.msra.mxu0 %v755
        %888 = vmatprep.subr.bf16.mxu0 %v764
        %889 = vmatpush1.bf16.msra.mxu0 %v763
        %890 = vmatprep.subr.bf16.mxu0 %v772
        %891 = vmatpush1.bf16.msra.mxu0 %v771
        %892 = vmatprep.subr.bf16.mxu0 %v780
        %893 = vmatpush1.bf16.msra.mxu0 %v779
        %894 = vmatprep.subr.bf16.mxu0 %v788
        %895 = vmatpush1.bf16.msra.mxu0 %v787
        %896 = vmatprep.subr.bf16.mxu0 %v796
        %897 = vmatpush1.bf16.msra.mxu0 %v795
        %898 = vmatprep.subr.bf16.mxu0 %v804
        %899 = vmatpush1.bf16.msra.mxu0 %v803
        %900 = vmatprep.subr.bf16.mxu0 0
        %901 = vmatpush1.bf16.msra.mxu0 0
        %902 = vmatprep.subr.bf16.mxu0 0
        %903 = vmatpush1.bf16.msra.mxu0 0
        %904 = vmatprep.subr.bf16.mxu0 0
        %905 = vmatpush1.bf16.msra.mxu0 0
        %906 = vmatprep.subr.bf16.mxu0 0
        %907 = vmatpush1.bf16.msra.mxu0 0
        %908 = vmatprep.subr.bf16.mxu0 0
        %909 = vmatpush1.bf16.msra.mxu0 0
        %910 = vmatprep.subr.bf16.mxu0 0
        %911 = vmatpush1.bf16.msra.mxu0 0
        %912 = vmatprep.subr.bf16.mxu0 0
        %913 = vmatpush1.bf16.msra.mxu0 0
        %914 = vmatprep.subr.bf16.mxu0 0
        %915 = vmatpush1.bf16.msra.mxu0 0
        %916 = vmatprep.subr.bf16.mxu0 0
        %917 = vmatpush1.bf16.msra.mxu0 0
        %918 = vmatprep.mubr.bf16.mxu0 0
        %919 = vmatmul.mubr.bf16.gmra.mrb[0].mxu0 %v869
        %v920 = vpop.f32.mrb[0].mxu0
        %v921 = vadd.f32 0.0, %v920
        %v922 = vpop.f32.mrb[0].mxu0
        %v923 = vadd.f32 0.0, %v922
        %v924 = vpop.f32.mrb[0].mxu0
        %v925 = vadd.f32 0.0, %v924
        %v926 = vpop.f32.mrb[0].mxu0
        %v927 = vadd.f32 0.0, %v926
        %928 = vmatprep.mubr.bf16.mxu0 0
        %929 = vmatmul.mubr.bf16.gmra.mrb[0].mxu0 %v872
        %v930 = vpop.f32.mrb[0].mxu0
        %v931 = vadd.f32 0.0, %v930
        %v932 = vpop.f32.mrb[0].mxu0
        %v933 = vadd.f32 0.0, %v932
        %v934 = vpop.f32.mrb[0].mxu0
        %v935 = vadd.f32 0.0, %v934
        %v936 = vpop.f32.mrb[0].mxu0
        %v937 = vadd.f32 0.0, %v936
        %938 = vmatprep.mubr.bf16.mxu0 0
        %939 = vmatmul.mubr.bf16.gmra.mrb[0].mxu0 %v875
        %v940 = vpop.f32.mrb[0].mxu0
        %v941 = vadd.f32 0.0, %v940
        %v942 = vpop.f32.mrb[0].mxu0
        %v943 = vadd.f32 0.0, %v942
        %v944 = vpop.f32.mrb[0].mxu0
        %v945 = vadd.f32 0.0, %v944
        %v946 = vpop.f32.mrb[0].mxu0
        %v947 = vadd.f32 0.0, %v946
        %948 = vmatprep.mubr.bf16.mxu0 0
        %949 = vmatmul.mubr.bf16.gmra.mrb[0].mxu0 %v878
        %v950 = vpop.f32.mrb[0].mxu0
        %v951 = vadd.f32 0.0, %v950
        %v952 = vpop.f32.mrb[0].mxu0
        %v953 = vadd.f32 0.0, %v952
        %v954 = vpop.f32.mrb[0].mxu0
        %v955 = vadd.f32 0.0, %v954
        %v956 = vpop.f32.mrb[0].mxu0
        %v957 = vadd.f32 0.0, %v956
        %958 = vmatprep.mubr.bf16.mxu0 0
        %959 = vmatmul.mubr.bf16.gmra.mrb[0].mxu0 %v881
        %v960 = vpop.f32.mrb[0].mxu0
        %v961 = vadd.f32 0.0, %v960
        %v962 = vpop.f32.mrb[0].mxu0
        %v963 = vadd.f32 0.0, %v962
        %v964 = vpop.f32.mrb[0].mxu0
        %v965 = vadd.f32 0.0, %v964
        %v966 = vpop.f32.mrb[0].mxu0
        %v967 = vadd.f32 0.0, %v966
        %968 = vmatprep.mubr.bf16.mxu0 0
        %969 = vmatmul.mubr.bf16.gmra.mrb[0].mxu0 %v884
        %v970 = vpop.f32.mrb[0].mxu0
        %v971 = vadd.f32 0.0, %v970
        %v972 = vpop.f32.mrb[0].mxu0
        %v973 = vadd.f32 0.0, %v972
        %v974 = vpop.f32.mrb[0].mxu0
        %v975 = vadd.f32 0.0, %v974
        %v976 = vpop.f32.mrb[0].mxu0
        %v977 = vadd.f32 0.0, %v976
        %978 = vdwg.mxu0
        %979 = vmatprep.subr.bf16.mxu0 %v758
        %980 = vmatpush1.bf16.msra.mxu0 %v757
        %981 = vmatprep.subr.bf16.mxu0 %v766
        %982 = vmatpush1.bf16.msra.mxu0 %v765
        %983 = vmatprep.subr.bf16.mxu0 %v774
        %984 = vmatpush1.bf16.msra.mxu0 %v773
        %985 = vmatprep.subr.bf16.mxu0 %v782
        %986 = vmatpush1.bf16.msra.mxu0 %v781
        %987 = vmatprep.subr.bf16.mxu0 %v790
        %988 = vmatpush1.bf16.msra.mxu0 %v789
        %989 = vmatprep.subr.bf16.mxu0 %v798
        %990 = vmatpush1.bf16.msra.mxu0 %v797
        %991 = vmatprep.subr.bf16.mxu0 %v806
        %992 = vmatpush1.bf16.msra.mxu0 %v805
        %993 = vmatprep.subr.bf16.mxu0 0
        %994 = vmatpush1.bf16.msra.mxu0 0
        %995 = vmatprep.subr.bf16.mxu0 0
        %996 = vmatpush1.bf16.msra.mxu0 0
        %997 = vmatprep.subr.bf16.mxu0 0
        %998 = vmatpush1.bf16.msra.mxu0 0
        %999 = vmatprep.subr.bf16.mxu0 0
        %1000 = vmatpush1.bf16.msra.mxu0 0
        %1001 = vmatprep.subr.bf16.mxu0 0
        %1002 = vmatpush1.bf16.msra.mxu0 0
        %1003 = vmatprep.subr.bf16.mxu0 0
        %1004 = vmatpush1.bf16.msra.mxu0 0
        %1005 = vmatprep.subr.bf16.mxu0 0
        %1006 = vmatpush1.bf16.msra.mxu0 0
        %1007 = vmatprep.subr.bf16.mxu0 0
        %1008 = vmatpush1.bf16.msra.mxu0 0
        %1009 = vmatprep.subr.bf16.mxu0 0
        %1010 = vmatpush1.bf16.msra.mxu0 0
        %1011 = vmatprep.mubr.bf16.mxu0 0
        %1012 = vmatmul.mubr.bf16.gmra.mrb[0].mxu0 %v869
        %v1013 = vpop.f32.mrb[0].mxu0
        %v1014 = vadd.f32 0.0, %v1013
        %v1015 = vpop.f32.mrb[0].mxu0
        %v1016 = vadd.f32 0.0, %v1015
        %v1017 = vpop.f32.mrb[0].mxu0
        %v1018 = vadd.f32 0.0, %v1017
        %v1019 = vpop.f32.mrb[0].mxu0
        %v1020 = vadd.f32 0.0, %v1019
        %1021 = vmatprep.mubr.bf16.mxu0 0
        %1022 = vmatmul.mubr.bf16.gmra.mrb[0].mxu0 %v872
        %v1023 = vpop.f32.mrb[0].mxu0
        %v1024 = vadd.f32 0.0, %v1023
        %v1025 = vpop.f32.mrb[0].mxu0
        %v1026 = vadd.f32 0.0, %v1025
        %v1027 = vpop.f32.mrb[0].mxu0
        %v1028 = vadd.f32 0.0, %v1027
        %v1029 = vpop.f32.mrb[0].mxu0
        %v1030 = vadd.f32 0.0, %v1029
        %1031 = vmatprep.mubr.bf16.mxu0 0
        %1032 = vmatmul.mubr.bf16.gmra.mrb[0].mxu0 %v875
        %v1033 = vpop.f32.mrb[0].mxu0
        %v1034 = vadd.f32 0.0, %v1033
        %v1035 = vpop.f32.mrb[0].mxu0
        %v1036 = vadd.f32 0.0, %v1035
        %v1037 = vpop.f32.mrb[0].mxu0
        %v1038 = vadd.f32 0.0, %v1037
        %v1039 = vpop.f32.mrb[0].mxu0
        %v1040 = vadd.f32 0.0, %v1039
        %1041 = vmatprep.mubr.bf16.mxu0 0
        %1042 = vmatmul.mubr.bf16.gmra.mrb[0].mxu0 %v878
        %v1043 = vpop.f32.mrb[0].mxu0
        %v1044 = vadd.f32 0.0, %v1043
        %v1045 = vpop.f32.mrb[0].mxu0
        %v1046 = vadd.f32 0.0, %v1045
        %v1047 = vpop.f32.mrb[0].mxu0
        %v1048 = vadd.f32 0.0, %v1047
        %v1049 = vpop.f32.mrb[0].mxu0
        %v1050 = vadd.f32 0.0, %v1049
        %1051 = vmatprep.mubr.bf16.mxu0 0
        %1052 = vmatmul.mubr.bf16.gmra.mrb[0].mxu0 %v881
        %v1053 = vpop.f32.mrb[0].mxu0
        %v1054 = vadd.f32 0.0, %v1053
        %v1055 = vpop.f32.mrb[0].mxu0
        %v1056 = vadd.f32 0.0, %v1055
        %v1057 = vpop.f32.mrb[0].mxu0
        %v1058 = vadd.f32 0.0, %v1057
        %v1059 = vpop.f32.mrb[0].mxu0
        %v1060 = vadd.f32 0.0, %v1059
        %1061 = vmatprep.mubr.bf16.mxu0 0
        %1062 = vmatmul.mubr.bf16.gmra.mrb[0].mxu0 %v884
        %v1063 = vpop.f32.mrb[0].mxu0
        %v1064 = vadd.f32 0.0, %v1063
        %v1065 = vpop.f32.mrb[0].mxu0
        %v1066 = vadd.f32 0.0, %v1065
        %v1067 = vpop.f32.mrb[0].mxu0
        %v1068 = vadd.f32 0.0, %v1067
        %v1069 = vpop.f32.mrb[0].mxu0
        %v1070 = vadd.f32 0.0, %v1069
        %1071 = vdwg.mxu0
        %1072 = vmatprep.subr.bf16.mxu0 %v760
        %1073 = vmatpush1.bf16.msra.mxu0 %v759
        %1074 = vmatprep.subr.bf16.mxu0 %v768
        %1075 = vmatpush1.bf16.msra.mxu0 %v767
        %1076 = vmatprep.subr.bf16.mxu0 %v776
        %1077 = vmatpush1.bf16.msra.mxu0 %v775
        %1078 = vmatprep.subr.bf16.mxu0 %v784
        %1079 = vmatpush1.bf16.msra.mxu0 %v783
        %1080 = vmatprep.subr.bf16.mxu0 %v792
        %1081 = vmatpush1.bf16.msra.mxu0 %v791
        %1082 = vmatprep.subr.bf16.mxu0 %v800
        %1083 = vmatpush1.bf16.msra.mxu0 %v799
        %1084 = vmatprep.subr.bf16.mxu0 %v808
        %1085 = vmatpush1.bf16.msra.mxu0 %v807
        %1086 = vmatprep.subr.bf16.mxu0 0
        %1087 = vmatpush1.bf16.msra.mxu0 0
        %1088 = vmatprep.subr.bf16.mxu0 0
        %1089 = vmatpush1.bf16.msra.mxu0 0
        %1090 = vmatprep.subr.bf16.mxu0 0
        %1091 = vmatpush1.bf16.msra.mxu0 0
        %1092 = vmatprep.subr.bf16.mxu0 0
        %1093 = vmatpush1.bf16.msra.mxu0 0
        %1094 = vmatprep.subr.bf16.mxu0 0
        %1095 = vmatpush1.bf16.msra.mxu0 0
        %1096 = vmatprep.subr.bf16.mxu0 0
        %1097 = vmatpush1.bf16.msra.mxu0 0
        %1098 = vmatprep.subr.bf16.mxu0 0
        %1099 = vmatpush1.bf16.msra.mxu0 0
        %1100 = vmatprep.subr.bf16.mxu0 0
        %1101 = vmatpush1.bf16.msra.mxu0 0
        %1102 = vmatprep.subr.bf16.mxu0 0
        %1103 = vmatpush1.bf16.msra.mxu0 0
        %1104 = vmatprep.mubr.bf16.mxu0 0
        %1105 = vmatmul.mubr.bf16.gmra.mrb[0].mxu0 %v869
        %v1106 = vpop.f32.mrb[0].mxu0
        %v1107 = vadd.f32 0.0, %v1106
        %v1108 = vpop.f32.mrb[0].mxu0
        %v1109 = vadd.f32 0.0, %v1108
        %v1110 = vpop.f32.mrb[0].mxu0
        %v1111 = vadd.f32 0.0, %v1110
        %v1112 = vpop.f32.mrb[0].mxu0
        %v1113 = vadd.f32 0.0, %v1112
        %1114 = vmatprep.mubr.bf16.mxu0 0
        %1115 = vmatmul.mubr.bf16.gmra.mrb[0].mxu0 %v872
        %v1116 = vpop.f32.mrb[0].mxu0
        %v1117 = vadd.f32 0.0, %v1116
        %v1118 = vpop.f32.mrb[0].mxu0
        %v1119 = vadd.f32 0.0, %v1118
        %v1120 = vpop.f32.mrb[0].mxu0
        %v1121 = vadd.f32 0.0, %v1120
        %v1122 = vpop.f32.mrb[0].mxu0
        %v1123 = vadd.f32 0.0, %v1122
        %1124 = vmatprep.mubr.bf16.mxu0 0
        %1125 = vmatmul.mubr.bf16.gmra.mrb[0].mxu0 %v875
        %v1126 = vpop.f32.mrb[0].mxu0
        %v1127 = vadd.f32 0.0, %v1126
        %v1128 = vpop.f32.mrb[0].mxu0
        %v1129 = vadd.f32 0.0, %v1128
        %v1130 = vpop.f32.mrb[0].mxu0
        %v1131 = vadd.f32 0.0, %v1130
        %v1132 = vpop.f32.mrb[0].mxu0
        %v1133 = vadd.f32 0.0, %v1132
        %1134 = vmatprep.mubr.bf16.mxu0 0
        %1135 = vmatmul.mubr.bf16.gmra.mrb[0].mxu0 %v878
        %v1136 = vpop.f32.mrb[0].mxu0
        %v1137 = vadd.f32 0.0, %v1136
        %v1138 = vpop.f32.mrb[0].mxu0
        %v1139 = vadd.f32 0.0, %v1138
        %v1140 = vpop.f32.mrb[0].mxu0
        %v1141 = vadd.f32 0.0, %v1140
        %v1142 = vpop.f32.mrb[0].mxu0
        %v1143 = vadd.f32 0.0, %v1142
        %1144 = vmatprep.mubr.bf16.mxu0 0
        %1145 = vmatmul.mubr.bf16.gmra.mrb[0].mxu0 %v881
        %v1146 = vpop.f32.mrb[0].mxu0
        %v1147 = vadd.f32 0.0, %v1146
        %v1148 = vpop.f32.mrb[0].mxu0
        %v1149 = vadd.f32 0.0, %v1148
        %v1150 = vpop.f32.mrb[0].mxu0
        %v1151 = vadd.f32 0.0, %v1150
        %v1152 = vpop.f32.mrb[0].mxu0
        %v1153 = vadd.f32 0.0, %v1152
        %1154 = vmatprep.mubr.bf16.mxu0 0
        %1155 = vmatmul.mubr.bf16.gmra.mrb[0].mxu0 %v884
        %v1156 = vpop.f32.mrb[0].mxu0
        %v1157 = vadd.f32 0.0, %v1156
        %v1158 = vpop.f32.mrb[0].mxu0
        %v1159 = vadd.f32 0.0, %v1158
        %v1160 = vpop.f32.mrb[0].mxu0
        %v1161 = vadd.f32 0.0, %v1160
        %v1162 = vpop.f32.mrb[0].mxu0
        %v1163 = vadd.f32 0.0, %v1162
        %1164 = vdwg.mxu0
        %1165 = vmatprep.subr.bf16.mxu0 %v762
        %1166 = vmatpush1.bf16.msra.mxu0 %v761
        %1167 = vmatprep.subr.bf16.mxu0 %v770
        %1168 = vmatpush1.bf16.msra.mxu0 %v769
        %1169 = vmatprep.subr.bf16.mxu0 %v778
        %1170 = vmatpush1.bf16.msra.mxu0 %v777
        %1171 = vmatprep.subr.bf16.mxu0 %v786
        %1172 = vmatpush1.bf16.msra.mxu0 %v785
        %1173 = vmatprep.subr.bf16.mxu0 %v794
        %1174 = vmatpush1.bf16.msra.mxu0 %v793
        %1175 = vmatprep.subr.bf16.mxu0 %v802
        %1176 = vmatpush1.bf16.msra.mxu0 %v801
        %1177 = vmatprep.subr.bf16.mxu0 %v810
        %1178 = vmatpush1.bf16.msra.mxu0 %v809
        %1179 = vmatprep.subr.bf16.mxu0 0
        %1180 = vmatpush1.bf16.msra.mxu0 0
        %1181 = vmatprep.subr.bf16.mxu0 0
        %1182 = vmatpush1.bf16.msra.mxu0 0
        %1183 = vmatprep.subr.bf16.mxu0 0
        %1184 = vmatpush1.bf16.msra.mxu0 0
        %1185 = vmatprep.subr.bf16.mxu0 0
        %1186 = vmatpush1.bf16.msra.mxu0 0
        %1187 = vmatprep.subr.bf16.mxu0 0
        %1188 = vmatpush1.bf16.msra.mxu0 0
        %1189 = vmatprep.subr.bf16.mxu0 0
        %1190 = vmatpush1.bf16.msra.mxu0 0
        %1191 = vmatprep.subr.bf16.mxu0 0
        %1192 = vmatpush1.bf16.msra.mxu0 0
        %1193 = vmatprep.subr.bf16.mxu0 0
        %1194 = vmatpush1.bf16.msra.mxu0 0
        %1195 = vmatprep.subr.bf16.mxu0 0
        %1196 = vmatpush1.bf16.msra.mxu0 0
        %1197 = vmatprep.mubr.bf16.mxu0 0
        %1198 = vmatmul.mubr.bf16.gmra.mrb[0].mxu0 %v869
        %v1199 = vpop.f32.mrb[0].mxu0
        %v1200 = vadd.f32 0.0, %v1199
        %v1201 = vpop.f32.mrb[0].mxu0
        %v1202 = vadd.f32 0.0, %v1201
        %v1203 = vpop.f32.mrb[0].mxu0
        %v1204 = vadd.f32 0.0, %v1203
        %v1205 = vpop.f32.mrb[0].mxu0
        %v1206 = vadd.f32 0.0, %v1205
        %1207 = vmatprep.mubr.bf16.mxu0 0
        %1208 = vmatmul.mubr.bf16.gmra.mrb[0].mxu0 %v872
        %v1209 = vpop.f32.mrb[0].mxu0
        %v1210 = vadd.f32 0.0, %v1209
        %v1211 = vpop.f32.mrb[0].mxu0
        %v1212 = vadd.f32 0.0, %v1211
        %v1213 = vpop.f32.mrb[0].mxu0
        %v1214 = vadd.f32 0.0, %v1213
        %v1215 = vpop.f32.mrb[0].mxu0
        %v1216 = vadd.f32 0.0, %v1215
        %1217 = vmatprep.mubr.bf16.mxu0 0
        %1218 = vmatmul.mubr.bf16.gmra.mrb[0].mxu0 %v875
        %v1219 = vpop.f32.mrb[0].mxu0
        %v1220 = vadd.f32 0.0, %v1219
        %v1221 = vpop.f32.mrb[0].mxu0
        %v1222 = vadd.f32 0.0, %v1221
        %v1223 = vpop.f32.mrb[0].mxu0
        %v1224 = vadd.f32 0.0, %v1223
        %v1225 = vpop.f32.mrb[0].mxu0
        %v1226 = vadd.f32 0.0, %v1225
        %1227 = vmatprep.mubr.bf16.mxu0 0
        %1228 = vmatmul.mubr.bf16.gmra.mrb[0].mxu0 %v878
        %v1229 = vpop.f32.mrb[0].mxu0
        %v1230 = vadd.f32 0.0, %v1229
        %v1231 = vpop.f32.mrb[0].mxu0
        %v1232 = vadd.f32 0.0, %v1231
        %v1233 = vpop.f32.mrb[0].mxu0
        %v1234 = vadd.f32 0.0, %v1233
        %v1235 = vpop.f32.mrb[0].mxu0
        %v1236 = vadd.f32 0.0, %v1235
        %1237 = vmatprep.mubr.bf16.mxu0 0
        %1238 = vmatmul.mubr.bf16.gmra.mrb[0].mxu0 %v881
        %v1239 = vpop.f32.mrb[0].mxu0
        %v1240 = vadd.f32 0.0, %v1239
        %v1241 = vpop.f32.mrb[0].mxu0
        %v1242 = vadd.f32 0.0, %v1241
        %v1243 = vpop.f32.mrb[0].mxu0
        %v1244 = vadd.f32 0.0, %v1243
        %v1245 = vpop.f32.mrb[0].mxu0
        %v1246 = vadd.f32 0.0, %v1245
        %1247 = vmatprep.mubr.bf16.mxu0 0
        %1248 = vmatmul.mubr.bf16.gmra.mrb[0].mxu0 %v884
        %v1249 = vpop.f32.mrb[0].mxu0
        %v1250 = vadd.f32 0.0, %v1249
        %v1251 = vpop.f32.mrb[0].mxu0
        %v1252 = vadd.f32 0.0, %v1251
        %v1253 = vpop.f32.mrb[0].mxu0
        %v1254 = vadd.f32 0.0, %v1253
        %v1255 = vpop.f32.mrb[0].mxu0
        %v1256 = vadd.f32 0.0, %v1255
        %1257 = vdwg.mxu0
        %v1260 = vunpack.c.l.b16 %v430
        %v1261 = vunpack.c.l.b16 %v431
        %v1262 = vpack.c.b16 %v1261, %v1260
        %v1319 = vunpack.c.l.b16 %v444
        %v1320 = vunpack.c.h.b16 %v444
        %v1321 = vunpack.c.l.b16 %v445
        %v1322 = vunpack.c.h.b16 %v445
        %v1323 = vunpack.c.l.b16 %v446
        %v1324 = vunpack.c.h.b16 %v446
        %v1325 = vunpack.c.l.b16 %v447
        %v1326 = vunpack.c.h.b16 %v447
        %v1327 = vunpack.c.l.b16 %v448
        %v1328 = vunpack.c.h.b16 %v448
        %v1329 = vunpack.c.l.b16 %v449
        %v1330 = vunpack.c.h.b16 %v449
        %v1331 = vunpack.c.l.b16 %v450
        %v1332 = vunpack.c.h.b16 %v450
        %v1333 = vunpack.c.l.b16 %v451
        %v1334 = vunpack.c.h.b16 %v451
        %v1335 = vunpack.c.l.b16 %v452
        %v1336 = vunpack.c.h.b16 %v452
        %v1337 = vunpack.c.l.b16 %v453
        %v1338 = vunpack.c.h.b16 %v453
        %v1339 = vunpack.c.l.b16 %v454
        %v1340 = vunpack.c.h.b16 %v454
        %v1341 = vunpack.c.l.b16 %v455
        %v1342 = vunpack.c.h.b16 %v455
        %v1343 = vunpack.c.l.b16 %v456
        %v1344 = vunpack.c.h.b16 %v456
        %v1345 = vunpack.c.l.b16 %v457
        %v1346 = vunpack.c.h.b16 %v457
        %v1347 = vunpack.c.l.b16 %v458
        %v1348 = vunpack.c.h.b16 %v458
        %v1349 = vunpack.c.l.b16 %v459
        %v1350 = vunpack.c.h.b16 %v459
        %v1351 = vunpack.c.l.b16 %v460
        %v1352 = vunpack.c.h.b16 %v460
        %v1353 = vunpack.c.l.b16 %v461
        %v1354 = vunpack.c.h.b16 %v461
        %v1355 = vunpack.c.l.b16 %v462
        %v1356 = vunpack.c.h.b16 %v462
        %v1357 = vunpack.c.l.b16 %v463
        %v1358 = vunpack.c.h.b16 %v463
        %v1359 = vunpack.c.l.b16 %v464
        %v1360 = vunpack.c.h.b16 %v464
        %v1361 = vunpack.c.l.b16 %v465
        %v1362 = vunpack.c.h.b16 %v465
        %v1363 = vunpack.c.l.b16 %v466
        %v1364 = vunpack.c.h.b16 %v466
        %v1365 = vunpack.c.l.b16 %v467
        %v1366 = vunpack.c.h.b16 %v467
        %v1367 = vunpack.c.l.b16 %v468
        %v1368 = vunpack.c.h.b16 %v468
        %v1369 = vunpack.c.l.b16 %v469
        %v1370 = vunpack.c.h.b16 %v469
        %v1371 = vunpack.c.l.b16 %v470
        %v1372 = vunpack.c.h.b16 %v470
        %v1373 = vunpack.c.l.b16 %v471
        %v1374 = vunpack.c.h.b16 %v471
        %v1375 = vunpack.c.l.b16 %v472
        %v1376 = vunpack.c.h.b16 %v472
        %v1377 = vunpack.c.l.b16 %v473
        %v1378 = vunpack.c.h.b16 %v473
        %v1379 = vunpack.c.l.b16 %v474
        %v1380 = vunpack.c.h.b16 %v474
        %v1381 = vunpack.c.l.b16 %v475
        %v1382 = vunpack.c.h.b16 %v475
        %v1383 = vunpack.c.l.b16 %v476
        %v1384 = vunpack.c.h.b16 %v476
        %v1385 = vunpack.c.l.b16 %v477
        %v1386 = vunpack.c.h.b16 %v477
        %v1387 = vunpack.c.l.b16 %v478
        %v1388 = vunpack.c.h.b16 %v478
        %v1389 = vunpack.c.l.b16 %v479
        %v1390 = vunpack.c.h.b16 %v479
        %v1391 = vunpack.c.l.b16 %v480
        %v1392 = vunpack.c.h.b16 %v480
        %v1393 = vunpack.c.l.b16 %v481
        %v1394 = vunpack.c.h.b16 %v481
        %v1395 = vunpack.c.l.b16 %v482
        %v1396 = vunpack.c.h.b16 %v482
        %v1397 = vunpack.c.l.b16 %v483
        %v1398 = vunpack.c.h.b16 %v483
        %v1399 = vunpack.c.l.b16 %v484
        %v1400 = vunpack.c.h.b16 %v484
        %v1401 = vunpack.c.l.b16 %v485
        %v1402 = vunpack.c.h.b16 %v485
        %v1403 = vunpack.c.l.b16 %v486
        %v1404 = vunpack.c.h.b16 %v486
        %v1405 = vunpack.c.l.b16 %v487
        %v1406 = vunpack.c.h.b16 %v487
        %v1407 = vunpack.c.l.b16 %v488
        %v1408 = vunpack.c.h.b16 %v488
        %v1409 = vunpack.c.l.b16 %v489
        %v1410 = vunpack.c.h.b16 %v489
        %v1411 = vunpack.c.l.b16 %v490
        %v1412 = vunpack.c.h.b16 %v490
        %v1413 = vunpack.c.l.b16 %v491
        %v1414 = vunpack.c.h.b16 %v491
        %v1415 = vunpack.c.l.b16 %v492
        %v1416 = vunpack.c.h.b16 %v492
        %v1417 = vunpack.c.l.b16 %v493
        %v1418 = vunpack.c.h.b16 %v493
        %v1419 = vunpack.c.l.b16 %v494
        %v1420 = vunpack.c.h.b16 %v494
        %v1421 = vunpack.c.l.b16 %v495
        %v1422 = vunpack.c.h.b16 %v495
        %v1423 = vunpack.c.l.b16 %v496
        %v1424 = vunpack.c.h.b16 %v496
        %v1425 = vunpack.c.l.b16 %v497
        %v1426 = vunpack.c.h.b16 %v497
        %v1427 = vunpack.c.l.b16 %v498
        %v1428 = vunpack.c.h.b16 %v498
        %v1429 = vunpack.c.l.b16 %v499
        %v1430 = vunpack.c.h.b16 %v499
        %v1431 = vpack.c.b16 %v1327, %v1319
        %v1432 = vpack.c.b16 %v1328, %v1320
        %v1433 = vpack.c.b16 %v1329, %v1321
        %v1434 = vpack.c.b16 %v1330, %v1322
        %v1435 = vpack.c.b16 %v1331, %v1323
        %v1436 = vpack.c.b16 %v1332, %v1324
        %v1437 = vpack.c.b16 %v1333, %v1325
        %v1438 = vpack.c.b16 %v1334, %v1326
        %v1439 = vpack.c.b16 %v1343, %v1335
        %v1440 = vpack.c.b16 %v1344, %v1336
        %v1441 = vpack.c.b16 %v1345, %v1337
        %v1442 = vpack.c.b16 %v1346, %v1338
        %v1443 = vpack.c.b16 %v1347, %v1339
        %v1444 = vpack.c.b16 %v1348, %v1340
        %v1445 = vpack.c.b16 %v1349, %v1341
        %v1446 = vpack.c.b16 %v1350, %v1342
        %v1447 = vpack.c.b16 %v1359, %v1351
        %v1448 = vpack.c.b16 %v1360, %v1352
        %v1449 = vpack.c.b16 %v1361, %v1353
        %v1450 = vpack.c.b16 %v1362, %v1354
        %v1451 = vpack.c.b16 %v1363, %v1355
        %v1452 = vpack.c.b16 %v1364, %v1356
        %v1453 = vpack.c.b16 %v1365, %v1357
        %v1454 = vpack.c.b16 %v1366, %v1358
        %v1455 = vpack.c.b16 %v1375, %v1367
        %v1456 = vpack.c.b16 %v1376, %v1368
        %v1457 = vpack.c.b16 %v1377, %v1369
        %v1458 = vpack.c.b16 %v1378, %v1370
        %v1459 = vpack.c.b16 %v1379, %v1371
        %v1460 = vpack.c.b16 %v1380, %v1372
        %v1461 = vpack.c.b16 %v1381, %v1373
        %v1462 = vpack.c.b16 %v1382, %v1374
        %v1463 = vpack.c.b16 %v1391, %v1383
        %v1464 = vpack.c.b16 %v1392, %v1384
        %v1465 = vpack.c.b16 %v1393, %v1385
        %v1466 = vpack.c.b16 %v1394, %v1386
        %v1467 = vpack.c.b16 %v1395, %v1387
        %v1468 = vpack.c.b16 %v1396, %v1388
        %v1469 = vpack.c.b16 %v1397, %v1389
        %v1470 = vpack.c.b16 %v1398, %v1390
        %v1471 = vpack.c.b16 %v1407, %v1399
        %v1472 = vpack.c.b16 %v1408, %v1400
        %v1473 = vpack.c.b16 %v1409, %v1401
        %v1474 = vpack.c.b16 %v1410, %v1402
        %v1475 = vpack.c.b16 %v1411, %v1403
        %v1476 = vpack.c.b16 %v1412, %v1404
        %v1477 = vpack.c.b16 %v1413, %v1405
        %v1478 = vpack.c.b16 %v1414, %v1406
        %v1479 = vpack.c.b16 %v1423, %v1415
        %v1480 = vpack.c.b16 %v1424, %v1416
        %v1481 = vpack.c.b16 %v1425, %v1417
        %v1482 = vpack.c.b16 %v1426, %v1418
        %v1483 = vpack.c.b16 %v1427, %v1419
        %v1484 = vpack.c.b16 %v1428, %v1420
        %v1485 = vpack.c.b16 %v1429, %v1421
        %v1486 = vpack.c.b16 %v1430, %v1422
        %v1544 = vsel %vm867, %v1262, 0
        %1546 = vmatprep.subr.bf16.mxu0 %v1432
        %1547 = vmatpush1.bf16.msra.mxu0 %v1431
        %1548 = vmatprep.subr.bf16.mxu0 %v1440
        %1549 = vmatpush1.bf16.msra.mxu0 %v1439
        %1550 = vmatprep.subr.bf16.mxu0 %v1448
        %1551 = vmatpush1.bf16.msra.mxu0 %v1447
        %1552 = vmatprep.subr.bf16.mxu0 %v1456
        %1553 = vmatpush1.bf16.msra.mxu0 %v1455
        %1554 = vmatprep.subr.bf16.mxu0 %v1464
        %1555 = vmatpush1.bf16.msra.mxu0 %v1463
        %1556 = vmatprep.subr.bf16.mxu0 %v1472
        %1557 = vmatpush1.bf16.msra.mxu0 %v1471
        %1558 = vmatprep.subr.bf16.mxu0 %v1480
        %1559 = vmatpush1.bf16.msra.mxu0 %v1479
        %1560 = vmatprep.subr.bf16.mxu0 0
        %1561 = vmatpush1.bf16.msra.mxu0 0
        %1562 = vmatprep.subr.bf16.mxu0 0
        %1563 = vmatpush1.bf16.msra.mxu0 0
        %1564 = vmatprep.subr.bf16.mxu0 0
        %1565 = vmatpush1.bf16.msra.mxu0 0
        %1566 = vmatprep.subr.bf16.mxu0 0
        %1567 = vmatpush1.bf16.msra.mxu0 0
        %1568 = vmatprep.subr.bf16.mxu0 0
        %1569 = vmatpush1.bf16.msra.mxu0 0
        %1570 = vmatprep.subr.bf16.mxu0 0
        %1571 = vmatpush1.bf16.msra.mxu0 0
        %1572 = vmatprep.subr.bf16.mxu0 0
        %1573 = vmatpush1.bf16.msra.mxu0 0
        %1574 = vmatprep.subr.bf16.mxu0 0
        %1575 = vmatpush1.bf16.msra.mxu0 0
        %1576 = vmatprep.subr.bf16.mxu0 0
        %1577 = vmatpush1.bf16.msra.mxu0 0
        %1578 = vmatprep.mubr.bf16.mxu0 0
        %1579 = vmatmul.mubr.bf16.gmra.mrb[0].mxu0 %v1544
        %v1580 = vpop.f32.mrb[0].mxu0
        %v1581 = vadd.f32 %v921, %v1580
        %v1582 = vpop.f32.mrb[0].mxu0
        %v1583 = vadd.f32 %v923, %v1582
        %v1584 = vpop.f32.mrb[0].mxu0
        %v1585 = vadd.f32 %v925, %v1584
        %v1586 = vpop.f32.mrb[0].mxu0
        %v1587 = vadd.f32 %v927, %v1586
        %1588 = vmatprep.mubr.bf16.mxu0 0
        %1589 = vmatmul.mubr.bf16.gmra.mrb[0].mxu0 %v869
        %v1590 = vpop.f32.mrb[0].mxu0
        %v1591 = vadd.f32 %v931, %v1590
        %v1592 = vpop.f32.mrb[0].mxu0
        %v1593 = vadd.f32 %v933, %v1592
        %v1594 = vpop.f32.mrb[0].mxu0
        %v1595 = vadd.f32 %v935, %v1594
        %v1596 = vpop.f32.mrb[0].mxu0
        %v1597 = vadd.f32 %v937, %v1596
        %1598 = vmatprep.mubr.bf16.mxu0 0
        %1599 = vmatmul.mubr.bf16.gmra.mrb[0].mxu0 %v872
        %v1600 = vpop.f32.mrb[0].mxu0
        %v1601 = vadd.f32 %v941, %v1600
        %v1602 = vpop.f32.mrb[0].mxu0
        %v1603 = vadd.f32 %v943, %v1602
        %v1604 = vpop.f32.mrb[0].mxu0
        %v1605 = vadd.f32 %v945, %v1604
        %v1606 = vpop.f32.mrb[0].mxu0
        %v1607 = vadd.f32 %v947, %v1606
        %1608 = vmatprep.mubr.bf16.mxu0 0
        %1609 = vmatmul.mubr.bf16.gmra.mrb[0].mxu0 %v875
        %v1610 = vpop.f32.mrb[0].mxu0
        %v1611 = vadd.f32 %v951, %v1610
        %v1612 = vpop.f32.mrb[0].mxu0
        %v1613 = vadd.f32 %v953, %v1612
        %v1614 = vpop.f32.mrb[0].mxu0
        %v1615 = vadd.f32 %v955, %v1614
        %v1616 = vpop.f32.mrb[0].mxu0
        %v1617 = vadd.f32 %v957, %v1616
        %1618 = vmatprep.mubr.bf16.mxu0 0
        %1619 = vmatmul.mubr.bf16.gmra.mrb[0].mxu0 %v878
        %v1620 = vpop.f32.mrb[0].mxu0
        %v1621 = vadd.f32 %v961, %v1620
        %v1622 = vpop.f32.mrb[0].mxu0
        %v1623 = vadd.f32 %v963, %v1622
        %v1624 = vpop.f32.mrb[0].mxu0
        %v1625 = vadd.f32 %v965, %v1624
        %v1626 = vpop.f32.mrb[0].mxu0
        %v1627 = vadd.f32 %v967, %v1626
        %1628 = vmatprep.mubr.bf16.mxu0 0
        %1629 = vmatmul.mubr.bf16.gmra.mrb[0].mxu0 %v881
        %v1630 = vpop.f32.mrb[0].mxu0
        %v1631 = vadd.f32 %v971, %v1630
        %v1632 = vpop.f32.mrb[0].mxu0
        %v1633 = vadd.f32 %v973, %v1632
        %v1634 = vpop.f32.mrb[0].mxu0
        %v1635 = vadd.f32 %v975, %v1634
        %v1636 = vpop.f32.mrb[0].mxu0
        %v1637 = vadd.f32 %v977, %v1636
        %1638 = vdwg.mxu0
        %1639 = vmatprep.subr.bf16.mxu0 %v1434
        %1640 = vmatpush1.bf16.msra.mxu0 %v1433
        %1641 = vmatprep.subr.bf16.mxu0 %v1442
        %1642 = vmatpush1.bf16.msra.mxu0 %v1441
        %1643 = vmatprep.subr.bf16.mxu0 %v1450
        %1644 = vmatpush1.bf16.msra.mxu0 %v1449
        %1645 = vmatprep.subr.bf16.mxu0 %v1458
        %1646 = vmatpush1.bf16.msra.mxu0 %v1457
        %1647 = vmatprep.subr.bf16.mxu0 %v1466
        %1648 = vmatpush1.bf16.msra.mxu0 %v1465
        %1649 = vmatprep.subr.bf16.mxu0 %v1474
        %1650 = vmatpush1.bf16.msra.mxu0 %v1473
        %1651 = vmatprep.subr.bf16.mxu0 %v1482
        %1652 = vmatpush1.bf16.msra.mxu0 %v1481
        %1653 = vmatprep.subr.bf16.mxu0 0
        %1654 = vmatpush1.bf16.msra.mxu0 0
        %1655 = vmatprep.subr.bf16.mxu0 0
        %1656 = vmatpush1.bf16.msra.mxu0 0
        %1657 = vmatprep.subr.bf16.mxu0 0
        %1658 = vmatpush1.bf16.msra.mxu0 0
        %1659 = vmatprep.subr.bf16.mxu0 0
        %1660 = vmatpush1.bf16.msra.mxu0 0
        %1661 = vmatprep.subr.bf16.mxu0 0
        %1662 = vmatpush1.bf16.msra.mxu0 0
        %1663 = vmatprep.subr.bf16.mxu0 0
        %1664 = vmatpush1.bf16.msra.mxu0 0
        %1665 = vmatprep.subr.bf16.mxu0 0
        %1666 = vmatpush1.bf16.msra.mxu0 0
        %1667 = vmatprep.subr.bf16.mxu0 0
        %1668 = vmatpush1.bf16.msra.mxu0 0
        %1669 = vmatprep.subr.bf16.mxu0 0
        %1670 = vmatpush1.bf16.msra.mxu0 0
        %1671 = vmatprep.mubr.bf16.mxu0 0
        %1672 = vmatmul.mubr.bf16.gmra.mrb[0].mxu0 %v1544
        %v1673 = vpop.f32.mrb[0].mxu0
        %v1674 = vadd.f32 %v1014, %v1673
        %v1675 = vpop.f32.mrb[0].mxu0
        %v1676 = vadd.f32 %v1016, %v1675
        %v1677 = vpop.f32.mrb[0].mxu0
        %v1678 = vadd.f32 %v1018, %v1677
        %v1679 = vpop.f32.mrb[0].mxu0
        %v1680 = vadd.f32 %v1020, %v1679
        %1681 = vmatprep.mubr.bf16.mxu0 0
        %1682 = vmatmul.mubr.bf16.gmra.mrb[0].mxu0 %v869
        %v1683 = vpop.f32.mrb[0].mxu0
        %v1684 = vadd.f32 %v1024, %v1683
        %v1685 = vpop.f32.mrb[0].mxu0
        %v1686 = vadd.f32 %v1026, %v1685
        %v1687 = vpop.f32.mrb[0].mxu0
        %v1688 = vadd.f32 %v1028, %v1687
        %v1689 = vpop.f32.mrb[0].mxu0
        %v1690 = vadd.f32 %v1030, %v1689
        %1691 = vmatprep.mubr.bf16.mxu0 0
        %1692 = vmatmul.mubr.bf16.gmra.mrb[0].mxu0 %v872
        %v1693 = vpop.f32.mrb[0].mxu0
        %v1694 = vadd.f32 %v1034, %v1693
        %v1695 = vpop.f32.mrb[0].mxu0
        %v1696 = vadd.f32 %v1036, %v1695
        %v1697 = vpop.f32.mrb[0].mxu0
        %v1698 = vadd.f32 %v1038, %v1697
        %v1699 = vpop.f32.mrb[0].mxu0
        %v1700 = vadd.f32 %v1040, %v1699
        %1701 = vmatprep.mubr.bf16.mxu0 0
        %1702 = vmatmul.mubr.bf16.gmra.mrb[0].mxu0 %v875
        %v1703 = vpop.f32.mrb[0].mxu0
        %v1704 = vadd.f32 %v1044, %v1703
        %v1705 = vpop.f32.mrb[0].mxu0
        %v1706 = vadd.f32 %v1046, %v1705
        %v1707 = vpop.f32.mrb[0].mxu0
        %v1708 = vadd.f32 %v1048, %v1707
        %v1709 = vpop.f32.mrb[0].mxu0
        %v1710 = vadd.f32 %v1050, %v1709
        %1711 = vmatprep.mubr.bf16.mxu0 0
        %1712 = vmatmul.mubr.bf16.gmra.mrb[0].mxu0 %v878
        %v1713 = vpop.f32.mrb[0].mxu0
        %v1714 = vadd.f32 %v1054, %v1713
        %v1715 = vpop.f32.mrb[0].mxu0
        %v1716 = vadd.f32 %v1056, %v1715
        %v1717 = vpop.f32.mrb[0].mxu0
        %v1718 = vadd.f32 %v1058, %v1717
        %v1719 = vpop.f32.mrb[0].mxu0
        %v1720 = vadd.f32 %v1060, %v1719
        %1721 = vmatprep.mubr.bf16.mxu0 0
        %1722 = vmatmul.mubr.bf16.gmra.mrb[0].mxu0 %v881
        %v1723 = vpop.f32.mrb[0].mxu0
        %v1724 = vadd.f32 %v1064, %v1723
        %v1725 = vpop.f32.mrb[0].mxu0
        %v1726 = vadd.f32 %v1066, %v1725
        %v1727 = vpop.f32.mrb[0].mxu0
        %v1728 = vadd.f32 %v1068, %v1727
        %v1729 = vpop.f32.mrb[0].mxu0
        %v1730 = vadd.f32 %v1070, %v1729
        %1731 = vdwg.mxu0
        %1732 = vmatprep.subr.bf16.mxu0 %v1436
        %1733 = vmatpush1.bf16.msra.mxu0 %v1435
        %1734 = vmatprep.subr.bf16.mxu0 %v1444
        %1735 = vmatpush1.bf16.msra.mxu0 %v1443
        %1736 = vmatprep.subr.bf16.mxu0 %v1452
        %1737 = vmatpush1.bf16.msra.mxu0 %v1451
        %1738 = vmatprep.subr.bf16.mxu0 %v1460
        %1739 = vmatpush1.bf16.msra.mxu0 %v1459
        %1740 = vmatprep.subr.bf16.mxu0 %v1468
        %1741 = vmatpush1.bf16.msra.mxu0 %v1467
        %1742 = vmatprep.subr.bf16.mxu0 %v1476
        %1743 = vmatpush1.bf16.msra.mxu0 %v1475
        %1744 = vmatprep.subr.bf16.mxu0 %v1484
        %1745 = vmatpush1.bf16.msra.mxu0 %v1483
        %1746 = vmatprep.subr.bf16.mxu0 0
        %1747 = vmatpush1.bf16.msra.mxu0 0
        %1748 = vmatprep.subr.bf16.mxu0 0
        %1749 = vmatpush1.bf16.msra.mxu0 0
        %1750 = vmatprep.subr.bf16.mxu0 0
        %1751 = vmatpush1.bf16.msra.mxu0 0
        %1752 = vmatprep.subr.bf16.mxu0 0
        %1753 = vmatpush1.bf16.msra.mxu0 0
        %1754 = vmatprep.subr.bf16.mxu0 0
        %1755 = vmatpush1.bf16.msra.mxu0 0
        %1756 = vmatprep.subr.bf16.mxu0 0
        %1757 = vmatpush1.bf16.msra.mxu0 0
        %1758 = vmatprep.subr.bf16.mxu0 0
        %1759 = vmatpush1.bf16.msra.mxu0 0
        %1760 = vmatprep.subr.bf16.mxu0 0
        %1761 = vmatpush1.bf16.msra.mxu0 0
        %1762 = vmatprep.subr.bf16.mxu0 0
        %1763 = vmatpush1.bf16.msra.mxu0 0
        %1764 = vmatprep.mubr.bf16.mxu0 0
        %1765 = vmatmul.mubr.bf16.gmra.mrb[0].mxu0 %v1544
        %v1766 = vpop.f32.mrb[0].mxu0
        %v1767 = vadd.f32 %v1107, %v1766
        %v1768 = vpop.f32.mrb[0].mxu0
        %v1769 = vadd.f32 %v1109, %v1768
        %v1770 = vpop.f32.mrb[0].mxu0
        %v1771 = vadd.f32 %v1111, %v1770
        %v1772 = vpop.f32.mrb[0].mxu0
        %v1773 = vadd.f32 %v1113, %v1772
        %1774 = vmatprep.mubr.bf16.mxu0 0
        %1775 = vmatmul.mubr.bf16.gmra.mrb[0].mxu0 %v869
        %v1776 = vpop.f32.mrb[0].mxu0
        %v1777 = vadd.f32 %v1117, %v1776
        %v1778 = vpop.f32.mrb[0].mxu0
        %v1779 = vadd.f32 %v1119, %v1778
        %v1780 = vpop.f32.mrb[0].mxu0
        %v1781 = vadd.f32 %v1121, %v1780
        %v1782 = vpop.f32.mrb[0].mxu0
        %v1783 = vadd.f32 %v1123, %v1782
        %1784 = vmatprep.mubr.bf16.mxu0 0
        %1785 = vmatmul.mubr.bf16.gmra.mrb[0].mxu0 %v872
        %v1786 = vpop.f32.mrb[0].mxu0
        %v1787 = vadd.f32 %v1127, %v1786
        %v1788 = vpop.f32.mrb[0].mxu0
        %v1789 = vadd.f32 %v1129, %v1788
        %v1790 = vpop.f32.mrb[0].mxu0
        %v1791 = vadd.f32 %v1131, %v1790
        %v1792 = vpop.f32.mrb[0].mxu0
        %v1793 = vadd.f32 %v1133, %v1792
        %1794 = vmatprep.mubr.bf16.mxu0 0
        %1795 = vmatmul.mubr.bf16.gmra.mrb[0].mxu0 %v875
        %v1796 = vpop.f32.mrb[0].mxu0
        %v1797 = vadd.f32 %v1137, %v1796
        %v1798 = vpop.f32.mrb[0].mxu0
        %v1799 = vadd.f32 %v1139, %v1798
        %v1800 = vpop.f32.mrb[0].mxu0
        %v1801 = vadd.f32 %v1141, %v1800
        %v1802 = vpop.f32.mrb[0].mxu0
        %v1803 = vadd.f32 %v1143, %v1802
        %1804 = vmatprep.mubr.bf16.mxu0 0
        %1805 = vmatmul.mubr.bf16.gmra.mrb[0].mxu0 %v878
        %v1806 = vpop.f32.mrb[0].mxu0
        %v1807 = vadd.f32 %v1147, %v1806
        %v1808 = vpop.f32.mrb[0].mxu0
        %v1809 = vadd.f32 %v1149, %v1808
        %v1810 = vpop.f32.mrb[0].mxu0
        %v1811 = vadd.f32 %v1151, %v1810
        %v1812 = vpop.f32.mrb[0].mxu0
        %v1813 = vadd.f32 %v1153, %v1812
        %1814 = vmatprep.mubr.bf16.mxu0 0
        %1815 = vmatmul.mubr.bf16.gmra.mrb[0].mxu0 %v881
        %v1816 = vpop.f32.mrb[0].mxu0
        %v1817 = vadd.f32 %v1157, %v1816
        %v1818 = vpop.f32.mrb[0].mxu0
        %v1819 = vadd.f32 %v1159, %v1818
        %v1820 = vpop.f32.mrb[0].mxu0
        %v1821 = vadd.f32 %v1161, %v1820
        %v1822 = vpop.f32.mrb[0].mxu0
        %v1823 = vadd.f32 %v1163, %v1822
        %1824 = vdwg.mxu0
        %1825 = vmatprep.subr.bf16.mxu0 %v1438
        %1826 = vmatpush1.bf16.msra.mxu0 %v1437
        %1827 = vmatprep.subr.bf16.mxu0 %v1446
        %1828 = vmatpush1.bf16.msra.mxu0 %v1445
        %1829 = vmatprep.subr.bf16.mxu0 %v1454
        %1830 = vmatpush1.bf16.msra.mxu0 %v1453
        %1831 = vmatprep.subr.bf16.mxu0 %v1462
        %1832 = vmatpush1.bf16.msra.mxu0 %v1461
        %1833 = vmatprep.subr.bf16.mxu0 %v1470
        %1834 = vmatpush1.bf16.msra.mxu0 %v1469
        %1835 = vmatprep.subr.bf16.mxu0 %v1478
        %1836 = vmatpush1.bf16.msra.mxu0 %v1477
        %1837 = vmatprep.subr.bf16.mxu0 %v1486
        %1838 = vmatpush1.bf16.msra.mxu0 %v1485
        %1839 = vmatprep.subr.bf16.mxu0 0
        %1840 = vmatpush1.bf16.msra.mxu0 0
        %1841 = vmatprep.subr.bf16.mxu0 0
        %1842 = vmatpush1.bf16.msra.mxu0 0
        %1843 = vmatprep.subr.bf16.mxu0 0
        %1844 = vmatpush1.bf16.msra.mxu0 0
        %1845 = vmatprep.subr.bf16.mxu0 0
        %1846 = vmatpush1.bf16.msra.mxu0 0
        %1847 = vmatprep.subr.bf16.mxu0 0
        %1848 = vmatpush1.bf16.msra.mxu0 0
        %1849 = vmatprep.subr.bf16.mxu0 0
        %1850 = vmatpush1.bf16.msra.mxu0 0
        %1851 = vmatprep.subr.bf16.mxu0 0
        %1852 = vmatpush1.bf16.msra.mxu0 0
        %1853 = vmatprep.subr.bf16.mxu0 0
        %1854 = vmatpush1.bf16.msra.mxu0 0
        %1855 = vmatprep.subr.bf16.mxu0 0
        %1856 = vmatpush1.bf16.msra.mxu0 0
        %1857 = vmatprep.mubr.bf16.mxu0 0
        %1858 = vmatmul.mubr.bf16.gmra.mrb[0].mxu0 %v1544
        %v1859 = vpop.f32.mrb[0].mxu0
        %v1860 = vadd.f32 %v1200, %v1859
        %v1861 = vpop.f32.mrb[0].mxu0
        %v1862 = vadd.f32 %v1202, %v1861
        %v1863 = vpop.f32.mrb[0].mxu0
        %v1864 = vadd.f32 %v1204, %v1863
        %v1865 = vpop.f32.mrb[0].mxu0
        %v1866 = vadd.f32 %v1206, %v1865
        %1867 = vmatprep.mubr.bf16.mxu0 0
        %1868 = vmatmul.mubr.bf16.gmra.mrb[0].mxu0 %v869
        %v1869 = vpop.f32.mrb[0].mxu0
        %v1870 = vadd.f32 %v1210, %v1869
        %v1871 = vpop.f32.mrb[0].mxu0
        %v1872 = vadd.f32 %v1212, %v1871
        %v1873 = vpop.f32.mrb[0].mxu0
        %v1874 = vadd.f32 %v1214, %v1873
        %v1875 = vpop.f32.mrb[0].mxu0
        %v1876 = vadd.f32 %v1216, %v1875
        %1877 = vmatprep.mubr.bf16.mxu0 0
        %1878 = vmatmul.mubr.bf16.gmra.mrb[0].mxu0 %v872
        %v1879 = vpop.f32.mrb[0].mxu0
        %v1880 = vadd.f32 %v1220, %v1879
        %v1881 = vpop.f32.mrb[0].mxu0
        %v1882 = vadd.f32 %v1222, %v1881
        %v1883 = vpop.f32.mrb[0].mxu0
        %v1884 = vadd.f32 %v1224, %v1883
        %v1885 = vpop.f32.mrb[0].mxu0
        %v1886 = vadd.f32 %v1226, %v1885
        %1887 = vmatprep.mubr.bf16.mxu0 0
        %1888 = vmatmul.mubr.bf16.gmra.mrb[0].mxu0 %v875
        %v1889 = vpop.f32.mrb[0].mxu0
        %v1890 = vadd.f32 %v1230, %v1889
        %v1891 = vpop.f32.mrb[0].mxu0
        %v1892 = vadd.f32 %v1232, %v1891
        %v1893 = vpop.f32.mrb[0].mxu0
        %v1894 = vadd.f32 %v1234, %v1893
        %v1895 = vpop.f32.mrb[0].mxu0
        %v1896 = vadd.f32 %v1236, %v1895
        %1897 = vmatprep.mubr.bf16.mxu0 0
        %1898 = vmatmul.mubr.bf16.gmra.mrb[0].mxu0 %v878
        %v1899 = vpop.f32.mrb[0].mxu0
        %v1900 = vadd.f32 %v1240, %v1899
        %v1901 = vpop.f32.mrb[0].mxu0
        %v1902 = vadd.f32 %v1242, %v1901
        %v1903 = vpop.f32.mrb[0].mxu0
        %v1904 = vadd.f32 %v1244, %v1903
        %v1905 = vpop.f32.mrb[0].mxu0
        %v1906 = vadd.f32 %v1246, %v1905
        %1907 = vmatprep.mubr.bf16.mxu0 0
        %1908 = vmatmul.mubr.bf16.gmra.mrb[0].mxu0 %v881
        %v1909 = vpop.f32.mrb[0].mxu0
        %v1910 = vadd.f32 %v1250, %v1909
        %v1911 = vpop.f32.mrb[0].mxu0
        %v1912 = vadd.f32 %v1252, %v1911
        %v1913 = vpop.f32.mrb[0].mxu0
        %v1914 = vadd.f32 %v1254, %v1913
        %v1915 = vpop.f32.mrb[0].mxu0
        %v1916 = vadd.f32 %v1256, %v1915
        %1917 = vdwg.mxu0
        %v1918 = vmax.f32 %v1581, %v1674
        %v1919 = vmax.f32 %v1583, %v1676
        %v1920 = vmax.f32 %v1585, %v1678
        %v1921 = vmax.f32 %v1587, %v1680
        %v1922 = vmax.f32 %v1591, %v1684
        %v1923 = vmax.f32 %v1593, %v1686
        %v1924 = vmax.f32 %v1595, %v1688
        %v1925 = vmax.f32 %v1597, %v1690
        %v1926 = vmax.f32 %v1601, %v1694
        %v1927 = vmax.f32 %v1603, %v1696
        %v1928 = vmax.f32 %v1605, %v1698
        %v1929 = vmax.f32 %v1607, %v1700
        %v1930 = vmax.f32 %v1611, %v1704
        %v1931 = vmax.f32 %v1613, %v1706
        %v1932 = vmax.f32 %v1615, %v1708
        %v1933 = vmax.f32 %v1617, %v1710
        %v1934 = vmax.f32 %v1621, %v1714
        %v1935 = vmax.f32 %v1623, %v1716
        %v1936 = vmax.f32 %v1625, %v1718
        %v1937 = vmax.f32 %v1627, %v1720
        %v1938 = vmax.f32 %v1631, %v1724
        %v1939 = vmax.f32 %v1633, %v1726
        %v1940 = vmax.f32 %v1635, %v1728
        %v1941 = vmax.f32 %v1637, %v1730
        %v1942 = vmax.f32 %v1767, %v1860
        %v1943 = vmax.f32 %v1769, %v1862
        %v1944 = vmax.f32 %v1771, %v1864
        %v1945 = vmax.f32 %v1773, %v1866
        %v1946 = vmax.f32 %v1777, %v1870
        %v1947 = vmax.f32 %v1779, %v1872
        %v1948 = vmax.f32 %v1781, %v1874
        %v1949 = vmax.f32 %v1783, %v1876
        %v1950 = vmax.f32 %v1787, %v1880
        %v1951 = vmax.f32 %v1789, %v1882
        %v1952 = vmax.f32 %v1791, %v1884
        %v1953 = vmax.f32 %v1793, %v1886
        %v1954 = vmax.f32 %v1797, %v1890
        %v1955 = vmax.f32 %v1799, %v1892
        %v1956 = vmax.f32 %v1801, %v1894
        %v1957 = vmax.f32 %v1803, %v1896
        %v1958 = vmax.f32 %v1807, %v1900
        %v1959 = vmax.f32 %v1809, %v1902
        %v1960 = vmax.f32 %v1811, %v1904
        %v1961 = vmax.f32 %v1813, %v1906
        %v1962 = vmax.f32 %v1817, %v1910
        %v1963 = vmax.f32 %v1819, %v1912
        %v1964 = vmax.f32 %v1821, %v1914
        %v1965 = vmax.f32 %v1823, %v1916
        %v1966 = vmax.f32 %v1918, %v1942
        %v1967 = vmax.f32 %v1919, %v1943
        %v1968 = vmax.f32 %v1920, %v1944
        %v1969 = vmax.f32 %v1921, %v1945
        %v1970 = vmax.f32 %v1922, %v1946
        %v1971 = vmax.f32 %v1923, %v1947
        %v1972 = vmax.f32 %v1924, %v1948
        %v1973 = vmax.f32 %v1925, %v1949
        %v1974 = vmax.f32 %v1926, %v1950
        %v1975 = vmax.f32 %v1927, %v1951
        %v1976 = vmax.f32 %v1928, %v1952
        %v1977 = vmax.f32 %v1929, %v1953
        %v1978 = vmax.f32 %v1930, %v1954
        %v1979 = vmax.f32 %v1931, %v1955
        %v1980 = vmax.f32 %v1932, %v1956
        %v1981 = vmax.f32 %v1933, %v1957
        %v1982 = vmax.f32 %v1934, %v1958
        %v1983 = vmax.f32 %v1935, %v1959
        %v1984 = vmax.f32 %v1936, %v1960
        %v1985 = vmax.f32 %v1937, %v1961
        %v1986 = vmax.f32 %v1938, %v1962
        %v1987 = vmax.f32 %v1939, %v1963
        %v1988 = vmax.f32 %v1940, %v1964
        %v1989 = vmax.f32 %v1941, %v1965
        %v1990 = vld [vmem:[%s2] sm:$0x3]
        %v1992 = vlaneseq
        %v1993 = vshrl.u32 %v1992, 7
        %v1994 = vsub.s32 0, %v1993
        %v1995 = vrot.slane %v1990, %v1994
        %v1996 = vlaneseq
        %v1997 = vshrl.u32 %v1996, 7
        %v1998 = vsub.s32 1, %v1997
        %v1999 = vrot.slane %v1990, %v1998
        %v2002 = vadd.f32 %v1966, %v1995
        %v2003 = vadd.f32 %v1967, %v1999
        %v2004 = vadd.f32 %v1968, %v1995
        %v2005 = vadd.f32 %v1969, %v1999
        %v2006 = vadd.f32 %v1970, %v1995
        %v2007 = vadd.f32 %v1971, %v1999
        %v2008 = vadd.f32 %v1972, %v1995
        %v2009 = vadd.f32 %v1973, %v1999
        %v2010 = vadd.f32 %v1974, %v1995
        %v2011 = vadd.f32 %v1975, %v1999
        %v2012 = vadd.f32 %v1976, %v1995
        %v2013 = vadd.f32 %v1977, %v1999
        %v2014 = vadd.f32 %v1978, %v1995
        %v2015 = vadd.f32 %v1979, %v1999
        %v2016 = vadd.f32 %v1980, %v1995
        %v2017 = vadd.f32 %v1981, %v1999
        %v2018 = vadd.f32 %v1982, %v1995
        %v2019 = vadd.f32 %v1983, %v1999
        %v2020 = vadd.f32 %v1984, %v1995
        %v2021 = vadd.f32 %v1985, %v1999
        %v2022 = vadd.f32 %v1986, %v1995
        %v2023 = vadd.f32 %v1987, %v1999
        %v2024 = vadd.f32 %v1988, %v1995
        %v2025 = vadd.f32 %v1989, %v1999
        %v2026 = vmax.f32 %v2002, 0.0
        %v2027 = vmax.f32 %v2003, 0.0
        %v2028 = vmax.f32 %v2004, 0.0
        %v2029 = vmax.f32 %v2005, 0.0
        %v2030 = vmax.f32 %v2006, 0.0
        %v2031 = vmax.f32 %v2007, 0.0
        %v2032 = vmax.f32 %v2008, 0.0
        %v2033 = vmax.f32 %v2009, 0.0
        %v2034 = vmax.f32 %v2010, 0.0
        %v2035 = vmax.f32 %v2011, 0.0
        %v2036 = vmax.f32 %v2012, 0.0
        %v2037 = vmax.f32 %v2013, 0.0
        %v2038 = vmax.f32 %v2014, 0.0
        %v2039 = vmax.f32 %v2015, 0.0
        %v2040 = vmax.f32 %v2016, 0.0
        %v2041 = vmax.f32 %v2017, 0.0
        %v2042 = vmax.f32 %v2018, 0.0
        %v2043 = vmax.f32 %v2019, 0.0
        %v2044 = vmax.f32 %v2020, 0.0
        %v2045 = vmax.f32 %v2021, 0.0
        %v2046 = vmax.f32 %v2022, 0.0
        %v2047 = vmax.f32 %v2023, 0.0
        %v2048 = vmax.f32 %v2024, 0.0
        %v2049 = vmax.f32 %v2025, 0.0
        %v2050 = vpack.c.bf16 %v2028, %v2026
        %v2051 = vpack.c.bf16 %v2029, %v2027
        %v2052 = vpack.c.bf16 %v2032, %v2030
        %v2053 = vpack.c.bf16 %v2033, %v2031
        %v2054 = vpack.c.bf16 %v2036, %v2034
        %v2055 = vpack.c.bf16 %v2037, %v2035
        %v2056 = vpack.c.bf16 %v2040, %v2038
        %v2057 = vpack.c.bf16 %v2041, %v2039
        %v2058 = vpack.c.bf16 %v2044, %v2042
        %v2059 = vpack.c.bf16 %v2045, %v2043
        %v2060 = vpack.c.bf16 %v2048, %v2046
        %v2061 = vpack.c.bf16 %v2049, %v2047
        %v2062 = vld [vmem:[%s3] sm:$0xff]
        %v2063 = vld [vmem:[%s3 + $0x8] sm:$0xff]
        %v2064 = vld [vmem:[%s3 + $0x10] sm:$0xff]
        %v2065 = vld [vmem:[%s3 + $0x18] sm:$0xff]
        %v2066 = vld [vmem:[%s3 + $0x20] sm:$0xff]
        %v2067 = vld [vmem:[%s3 + $0x28] sm:$0xff]
        %v2068 = vld [vmem:[%s3 + $0x30] sm:$0xff]
        %v2069 = vld [vmem:[%s3 + $0x38] sm:$0xff]
        %v2070 = vld [vmem:[%s3 + $0x40] sm:$0xff]
        %v2071 = vld [vmem:[%s3 + $0x48] sm:$0xff]
        %v2072 = vld [vmem:[%s3 + $0x50] sm:$0xff]
        %v2073 = vld [vmem:[%s3 + $0x58] sm:$0xff]
        %v2074 = vld [vmem:[%s3 + $0x60] sm:$0xff]
        %v2075 = vld [vmem:[%s3 + $0x68] sm:$0xff]
        %v2076 = vld [vmem:[%s3 + $0x70] sm:$0xff]
        %v2077 = vld [vmem:[%s3 + $0x78] sm:$0xff]
        %v2078 = vld [vmem:[%s3 + $0x80] sm:$0xff]
        %v2079 = vld [vmem:[%s3 + $0x88] sm:$0xff]
        %v2080 = vld [vmem:[%s3 + $0x90] sm:$0xff]
        %v2081 = vld [vmem:[%s3 + $0x98] sm:$0xff]
        %v2082 = vld [vmem:[%s3 + $0xa0] sm:$0xff]
        %v2083 = vld [vmem:[%s3 + $0xa8] sm:$0xff]
        %v2084 = vld [vmem:[%s3 + $0xb0] sm:$0xff]
        %v2085 = vld [vmem:[%s3 + $0xb8] sm:$0xff]
        %v2086 = vld [vmem:[%s3 + $0xc0] sm:$0xff]
        %v2087 = vld [vmem:[%s3 + $0xc8] sm:$0xff]
        %v2088 = vld [vmem:[%s3 + $0xd0] sm:$0xff]
        %v2089 = vld [vmem:[%s3 + $0xd8] sm:$0xff]
        %v2090 = vld [vmem:[%s3 + $0xe0] sm:$0xff]
        %v2091 = vld [vmem:[%s3 + $0xe8] sm:$0xff]
        %v2092 = vld [vmem:[%s3 + $0xf0] sm:$0xff]
        %v2093 = vld [vmem:[%s3 + $0xf8] sm:$0xff]
        %v2094 = vld [vmem:[%s3 + $0x100] sm:$0xff]
        %v2095 = vld [vmem:[%s3 + $0x108] sm:$0xff]
        %v2096 = vld [vmem:[%s3 + $0x110] sm:$0xff]
        %v2097 = vld [vmem:[%s3 + $0x118] sm:$0xff]
        %v2098 = vld [vmem:[%s3 + $0x120] sm:$0xff]
        %v2099 = vld [vmem:[%s3 + $0x128] sm:$0xff]
        %v2100 = vld [vmem:[%s3 + $0x130] sm:$0xff]
        %v2101 = vld [vmem:[%s3 + $0x138] sm:$0xff]
        %v2102 = vld [vmem:[%s3 + $0x140] sm:$0xff]
        %v2103 = vld [vmem:[%s3 + $0x148] sm:$0xff]
        %v2104 = vld [vmem:[%s3 + $0x150] sm:$0xff]
        %v2105 = vld [vmem:[%s3 + $0x158] sm:$0xff]
        %v2106 = vld [vmem:[%s3 + $0x160] sm:$0xff]
        %v2107 = vld [vmem:[%s3 + $0x168] sm:$0xff]
        %v2108 = vld [vmem:[%s3 + $0x170] sm:$0xff]
        %v2109 = vld [vmem:[%s3 + $0x178] sm:$0xff]
        %v2110 = vld [vmem:[%s3 + $0x180] sm:$0xff]
        %v2111 = vld [vmem:[%s3 + $0x188] sm:$0xff]
        %v2112 = vld [vmem:[%s3 + $0x190] sm:$0xff]
        %v2113 = vld [vmem:[%s3 + $0x198] sm:$0xff]
        %v2114 = vld [vmem:[%s3 + $0x1a0] sm:$0xff]
        %v2115 = vld [vmem:[%s3 + $0x1a8] sm:$0xff]
        %v2116 = vld [vmem:[%s3 + $0x1b0] sm:$0xff]
        %v2117 = vld [vmem:[%s3 + $0x1b8] sm:$0xff]
        %v2118 = vld [vmem:[%s3 + $0x1c0] sm:$0xff]
        %v2119 = vld [vmem:[%s3 + $0x1c8] sm:$0xff]
        %v2120 = vld [vmem:[%s3 + $0x1d0] sm:$0xff]
        %v2121 = vld [vmem:[%s3 + $0x1d8] sm:$0xff]
        %v2122 = vld [vmem:[%s3 + $0x1e0] sm:$0xff]
        %v2123 = vld [vmem:[%s3 + $0x1e8] sm:$0xff]
        %v2124 = vld [vmem:[%s3 + $0x1f0] sm:$0xff]
        %v2125 = vld [vmem:[%s3 + $0x1f8] sm:$0xff]
        %s2126 = scalar_lea.vmem %s3, 512
        %v2127 = vld [vmem:[%s2126] sm:$0xff]
        %v2128 = vld [vmem:[%s2126 + $0x8] sm:$0xff]
        %v2129 = vld [vmem:[%s2126 + $0x10] sm:$0xff]
        %v2130 = vld [vmem:[%s2126 + $0x18] sm:$0xff]
        %v2131 = vld [vmem:[%s2126 + $0x20] sm:$0xff]
        %v2132 = vld [vmem:[%s2126 + $0x28] sm:$0xff]
        %v2133 = vld [vmem:[%s2126 + $0x30] sm:$0xff]
        %v2134 = vld [vmem:[%s2126 + $0x38] sm:$0xff]
        %v2135 = vld [vmem:[%s2126 + $0x40] sm:$0xff]
        %v2136 = vld [vmem:[%s2126 + $0x48] sm:$0xff]
        %v2137 = vld [vmem:[%s2126 + $0x50] sm:$0xff]
        %v2138 = vld [vmem:[%s2126 + $0x58] sm:$0xff]
        %v2139 = vld [vmem:[%s2126 + $0x60] sm:$0xff]
        %v2140 = vld [vmem:[%s2126 + $0x68] sm:$0xff]
        %v2141 = vld [vmem:[%s2126 + $0x70] sm:$0xff]
        %v2142 = vld [vmem:[%s2126 + $0x78] sm:$0xff]
        %v2143 = vld [vmem:[%s2126 + $0x80] sm:$0xff]
        %v2144 = vld [vmem:[%s2126 + $0x88] sm:$0xff]
        %v2145 = vld [vmem:[%s2126 + $0x90] sm:$0xff]
        %v2146 = vld [vmem:[%s2126 + $0x98] sm:$0xff]
        %v2147 = vld [vmem:[%s2126 + $0xa0] sm:$0xff]
        %v2148 = vld [vmem:[%s2126 + $0xa8] sm:$0xff]
        %v2149 = vld [vmem:[%s2126 + $0xb0] sm:$0xff]
        %v2150 = vld [vmem:[%s2126 + $0xb8] sm:$0xff]
        %v2151 = vld [vmem:[%s2126 + $0xc0] sm:$0xff]
        %v2152 = vld [vmem:[%s2126 + $0xc8] sm:$0xff]
        %v2153 = vld [vmem:[%s2126 + $0xd0] sm:$0xff]
        %v2154 = vld [vmem:[%s2126 + $0xd8] sm:$0xff]
        %v2155 = vld [vmem:[%s2126 + $0xe0] sm:$0xff]
        %v2156 = vld [vmem:[%s2126 + $0xe8] sm:$0xff]
        %v2157 = vld [vmem:[%s2126 + $0xf0] sm:$0xff]
        %v2158 = vld [vmem:[%s2126 + $0xf8] sm:$0xff]
        %v2159 = vld [vmem:[%s2126 + $0x100] sm:$0xff]
        %v2160 = vld [vmem:[%s2126 + $0x108] sm:$0xff]
        %v2161 = vld [vmem:[%s2126 + $0x110] sm:$0xff]
        %v2162 = vld [vmem:[%s2126 + $0x118] sm:$0xff]
        %v2163 = vld [vmem:[%s2126 + $0x120] sm:$0xff]
        %v2164 = vld [vmem:[%s2126 + $0x128] sm:$0xff]
        %v2165 = vld [vmem:[%s2126 + $0x130] sm:$0xff]
        %v2166 = vld [vmem:[%s2126 + $0x138] sm:$0xff]
        %v2167 = vld [vmem:[%s2126 + $0x140] sm:$0xff]
        %v2168 = vld [vmem:[%s2126 + $0x148] sm:$0xff]
        %v2169 = vld [vmem:[%s2126 + $0x150] sm:$0xff]
        %v2170 = vld [vmem:[%s2126 + $0x158] sm:$0xff]
        %v2171 = vld [vmem:[%s2126 + $0x160] sm:$0xff]
        %v2172 = vld [vmem:[%s2126 + $0x168] sm:$0xff]
        %v2173 = vld [vmem:[%s2126 + $0x170] sm:$0xff]
        %v2174 = vld [vmem:[%s2126 + $0x178] sm:$0xff]
        %v2175 = vld [vmem:[%s2126 + $0x180] sm:$0xff]
        %v2176 = vld [vmem:[%s2126 + $0x188] sm:$0xff]
        %v2177 = vld [vmem:[%s2126 + $0x190] sm:$0xff]
        %v2178 = vld [vmem:[%s2126 + $0x198] sm:$0xff]
        %v2179 = vld [vmem:[%s2126 + $0x1a0] sm:$0xff]
        %v2180 = vld [vmem:[%s2126 + $0x1a8] sm:$0xff]
        %v2181 = vld [vmem:[%s2126 + $0x1b0] sm:$0xff]
        %v2182 = vld [vmem:[%s2126 + $0x1b8] sm:$0xff]
        %v2183 = vld [vmem:[%s2126 + $0x1c0] sm:$0xff]
        %v2184 = vld [vmem:[%s2126 + $0x1c8] sm:$0xff]
        %v2185 = vld [vmem:[%s2126 + $0x1d0] sm:$0xff]
        %v2186 = vld [vmem:[%s2126 + $0x1d8] sm:$0xff]
        %v2187 = vld [vmem:[%s2126 + $0x1e0] sm:$0xff]
        %v2188 = vld [vmem:[%s2126 + $0x1e8] sm:$0xff]
        %v2189 = vld [vmem:[%s2126 + $0x1f0] sm:$0xff]
        %v2190 = vld [vmem:[%s2126 + $0x1f8] sm:$0xff]
        %v2255 = vunpack.c.l.b16 %v2127
        %v2256 = vunpack.c.h.b16 %v2127
        %v2257 = vunpack.c.l.b16 %v2128
        %v2258 = vunpack.c.h.b16 %v2128
        %v2259 = vunpack.c.l.b16 %v2129
        %v2260 = vunpack.c.h.b16 %v2129
        %v2261 = vunpack.c.l.b16 %v2130
        %v2262 = vunpack.c.h.b16 %v2130
        %v2263 = vunpack.c.l.b16 %v2131
        %v2264 = vunpack.c.h.b16 %v2131
        %v2265 = vunpack.c.l.b16 %v2132
        %v2266 = vunpack.c.h.b16 %v2132
        %v2267 = vunpack.c.l.b16 %v2133
        %v2268 = vunpack.c.h.b16 %v2133
        %v2269 = vunpack.c.l.b16 %v2134
        %v2270 = vunpack.c.h.b16 %v2134
        %v2271 = vunpack.c.l.b16 %v2135
        %v2272 = vunpack.c.h.b16 %v2135
        %v2273 = vunpack.c.l.b16 %v2136
        %v2274 = vunpack.c.h.b16 %v2136
        %v2275 = vunpack.c.l.b16 %v2137
        %v2276 = vunpack.c.h.b16 %v2137
        %v2277 = vunpack.c.l.b16 %v2138
        %v2278 = vunpack.c.h.b16 %v2138
        %v2279 = vunpack.c.l.b16 %v2139
        %v2280 = vunpack.c.h.b16 %v2139
        %v2281 = vunpack.c.l.b16 %v2140
        %v2282 = vunpack.c.h.b16 %v2140
        %v2283 = vunpack.c.l.b16 %v2141
        %v2284 = vunpack.c.h.b16 %v2141
        %v2285 = vunpack.c.l.b16 %v2142
        %v2286 = vunpack.c.h.b16 %v2142
        %v2287 = vunpack.c.l.b16 %v2143
        %v2288 = vunpack.c.h.b16 %v2143
        %v2289 = vunpack.c.l.b16 %v2144
        %v2290 = vunpack.c.h.b16 %v2144
        %v2291 = vunpack.c.l.b16 %v2145
        %v2292 = vunpack.c.h.b16 %v2145
        %v2293 = vunpack.c.l.b16 %v2146
        %v2294 = vunpack.c.h.b16 %v2146
        %v2295 = vunpack.c.l.b16 %v2147
        %v2296 = vunpack.c.h.b16 %v2147
        %v2297 = vunpack.c.l.b16 %v2148
        %v2298 = vunpack.c.h.b16 %v2148
        %v2299 = vunpack.c.l.b16 %v2149
        %v2300 = vunpack.c.h.b16 %v2149
        %v2301 = vunpack.c.l.b16 %v2150
        %v2302 = vunpack.c.h.b16 %v2150
        %v2303 = vunpack.c.l.b16 %v2151
        %v2304 = vunpack.c.h.b16 %v2151
        %v2305 = vunpack.c.l.b16 %v2152
        %v2306 = vunpack.c.h.b16 %v2152
        %v2307 = vunpack.c.l.b16 %v2153
        %v2308 = vunpack.c.h.b16 %v2153
        %v2309 = vunpack.c.l.b16 %v2154
        %v2310 = vunpack.c.h.b16 %v2154
        %v2311 = vunpack.c.l.b16 %v2155
        %v2312 = vunpack.c.h.b16 %v2155
        %v2313 = vunpack.c.l.b16 %v2156
        %v2314 = vunpack.c.h.b16 %v2156
        %v2315 = vunpack.c.l.b16 %v2157
        %v2316 = vunpack.c.h.b16 %v2157
        %v2317 = vunpack.c.l.b16 %v2158
        %v2318 = vunpack.c.h.b16 %v2158
        %v2319 = vunpack.c.l.b16 %v2159
        %v2320 = vunpack.c.h.b16 %v2159
        %v2321 = vunpack.c.l.b16 %v2160
        %v2322 = vunpack.c.h.b16 %v2160
        %v2323 = vunpack.c.l.b16 %v2161
        %v2324 = vunpack.c.h.b16 %v2161
        %v2325 = vunpack.c.l.b16 %v2162
        %v2326 = vunpack.c.h.b16 %v2162
        %v2327 = vunpack.c.l.b16 %v2163
        %v2328 = vunpack.c.h.b16 %v2163
        %v2329 = vunpack.c.l.b16 %v2164
        %v2330 = vunpack.c.h.b16 %v2164
        %v2331 = vunpack.c.l.b16 %v2165
        %v2332 = vunpack.c.h.b16 %v2165
        %v2333 = vunpack.c.l.b16 %v2166
        %v2334 = vunpack.c.h.b16 %v2166
        %v2335 = vunpack.c.l.b16 %v2167
        %v2336 = vunpack.c.h.b16 %v2167
        %v2337 = vunpack.c.l.b16 %v2168
        %v2338 = vunpack.c.h.b16 %v2168
        %v2339 = vunpack.c.l.b16 %v2169
        %v2340 = vunpack.c.h.b16 %v2169
        %v2341 = vunpack.c.l.b16 %v2170
        %v2342 = vunpack.c.h.b16 %v2170
        %v2343 = vunpack.c.l.b16 %v2171
        %v2344 = vunpack.c.h.b16 %v2171
        %v2345 = vunpack.c.l.b16 %v2172
        %v2346 = vunpack.c.h.b16 %v2172
        %v2347 = vunpack.c.l.b16 %v2173
        %v2348 = vunpack.c.h.b16 %v2173
        %v2349 = vunpack.c.l.b16 %v2174
        %v2350 = vunpack.c.h.b16 %v2174
        %v2351 = vunpack.c.l.b16 %v2175
        %v2352 = vunpack.c.h.b16 %v2175
        %v2353 = vunpack.c.l.b16 %v2176
        %v2354 = vunpack.c.h.b16 %v2176
        %v2355 = vunpack.c.l.b16 %v2177
        %v2356 = vunpack.c.h.b16 %v2177
        %v2357 = vunpack.c.l.b16 %v2178
        %v2358 = vunpack.c.h.b16 %v2178
        %v2359 = vunpack.c.l.b16 %v2179
        %v2360 = vunpack.c.h.b16 %v2179
        %v2361 = vunpack.c.l.b16 %v2180
        %v2362 = vunpack.c.h.b16 %v2180
        %v2363 = vunpack.c.l.b16 %v2181
        %v2364 = vunpack.c.h.b16 %v2181
        %v2365 = vunpack.c.l.b16 %v2182
        %v2366 = vunpack.c.h.b16 %v2182
        %v2367 = vunpack.c.l.b16 %v2183
        %v2368 = vunpack.c.h.b16 %v2183
        %v2369 = vunpack.c.l.b16 %v2184
        %v2370 = vunpack.c.h.b16 %v2184
        %v2371 = vunpack.c.l.b16 %v2185
        %v2372 = vunpack.c.h.b16 %v2185
        %v2373 = vunpack.c.l.b16 %v2186
        %v2374 = vunpack.c.h.b16 %v2186
        %v2375 = vunpack.c.l.b16 %v2187
        %v2376 = vunpack.c.h.b16 %v2187
        %v2377 = vunpack.c.l.b16 %v2188
        %v2378 = vunpack.c.h.b16 %v2188
        %v2379 = vunpack.c.l.b16 %v2189
        %v2380 = vunpack.c.h.b16 %v2189
        %v2381 = vunpack.c.l.b16 %v2190
        %v2382 = vunpack.c.h.b16 %v2190
        %v2383 = vpack.c.b16 %v2259, %v2255
        %v2384 = vpack.c.b16 %v2260, %v2256
        %v2385 = vpack.c.b16 %v2261, %v2257
        %v2386 = vpack.c.b16 %v2262, %v2258
        %v2387 = vpack.c.b16 %v2267, %v2263
        %v2388 = vpack.c.b16 %v2268, %v2264
        %v2389 = vpack.c.b16 %v2269, %v2265
        %v2390 = vpack.c.b16 %v2270, %v2266
        %v2391 = vpack.c.b16 %v2275, %v2271
        %v2392 = vpack.c.b16 %v2276, %v2272
        %v2393 = vpack.c.b16 %v2277, %v2273
        %v2394 = vpack.c.b16 %v2278, %v2274
        %v2395 = vpack.c.b16 %v2283, %v2279
        %v2396 = vpack.c.b16 %v2284, %v2280
        %v2397 = vpack.c.b16 %v2285, %v2281
        %v2398 = vpack.c.b16 %v2286, %v2282
        %v2399 = vpack.c.b16 %v2291, %v2287
        %v2400 = vpack.c.b16 %v2292, %v2288
        %v2401 = vpack.c.b16 %v2293, %v2289
        %v2402 = vpack.c.b16 %v2294, %v2290
        %v2403 = vpack.c.b16 %v2299, %v2295
        %v2404 = vpack.c.b16 %v2300, %v2296
        %v2405 = vpack.c.b16 %v2301, %v2297
        %v2406 = vpack.c.b16 %v2302, %v2298
        %v2407 = vpack.c.b16 %v2307, %v2303
        %v2408 = vpack.c.b16 %v2308, %v2304
        %v2409 = vpack.c.b16 %v2309, %v2305
        %v2410 = vpack.c.b16 %v2310, %v2306
        %v2411 = vpack.c.b16 %v2315, %v2311
        %v2412 = vpack.c.b16 %v2316, %v2312
        %v2413 = vpack.c.b16 %v2317, %v2313
        %v2414 = vpack.c.b16 %v2318, %v2314
        %v2415 = vpack.c.b16 %v2323, %v2319
        %v2416 = vpack.c.b16 %v2324, %v2320
        %v2417 = vpack.c.b16 %v2325, %v2321
        %v2418 = vpack.c.b16 %v2326, %v2322
        %v2419 = vpack.c.b16 %v2331, %v2327
        %v2420 = vpack.c.b16 %v2332, %v2328
        %v2421 = vpack.c.b16 %v2333, %v2329
        %v2422 = vpack.c.b16 %v2334, %v2330
        %v2423 = vpack.c.b16 %v2339, %v2335
        %v2424 = vpack.c.b16 %v2340, %v2336
        %v2425 = vpack.c.b16 %v2341, %v2337
        %v2426 = vpack.c.b16 %v2342, %v2338
        %v2427 = vpack.c.b16 %v2347, %v2343
        %v2428 = vpack.c.b16 %v2348, %v2344
        %v2429 = vpack.c.b16 %v2349, %v2345
        %v2430 = vpack.c.b16 %v2350, %v2346
        %v2431 = vpack.c.b16 %v2355, %v2351
        %v2432 = vpack.c.b16 %v2356, %v2352
        %v2433 = vpack.c.b16 %v2357, %v2353
        %v2434 = vpack.c.b16 %v2358, %v2354
        %v2435 = vpack.c.b16 %v2363, %v2359
        %v2436 = vpack.c.b16 %v2364, %v2360
        %v2437 = vpack.c.b16 %v2365, %v2361
        %v2438 = vpack.c.b16 %v2366, %v2362
        %v2439 = vpack.c.b16 %v2371, %v2367
        %v2440 = vpack.c.b16 %v2372, %v2368
        %v2441 = vpack.c.b16 %v2373, %v2369
        %v2442 = vpack.c.b16 %v2374, %v2370
        %v2443 = vpack.c.b16 %v2379, %v2375
        %v2444 = vpack.c.b16 %v2380, %v2376
        %v2445 = vpack.c.b16 %v2381, %v2377
        %v2446 = vpack.c.b16 %v2382, %v2378
        %2511 = vmatprep.subr.bf16.mxu0 %v2384
        %2512 = vmatpush1.bf16.msra.mxu0 %v2383
        %2513 = vmatprep.subr.bf16.mxu0 %v2388
        %2514 = vmatpush1.bf16.msra.mxu0 %v2387
        %2515 = vmatprep.subr.bf16.mxu0 %v2392
        %2516 = vmatpush1.bf16.msra.mxu0 %v2391
        %2517 = vmatprep.subr.bf16.mxu0 %v2396
        %2518 = vmatpush1.bf16.msra.mxu0 %v2395
        %2519 = vmatprep.subr.bf16.mxu0 %v2400
        %2520 = vmatpush1.bf16.msra.mxu0 %v2399
        %2521 = vmatprep.subr.bf16.mxu0 %v2404
        %2522 = vmatpush1.bf16.msra.mxu0 %v2403
        %2523 = vmatprep.subr.bf16.mxu0 %v2408
        %2524 = vmatpush1.bf16.msra.mxu0 %v2407
        %2525 = vmatprep.subr.bf16.mxu0 %v2412
        %2526 = vmatpush1.bf16.msra.mxu0 %v2411
        %2527 = vmatprep.subr.bf16.mxu0 %v2416
        %2528 = vmatpush1.bf16.msra.mxu0 %v2415
        %2529 = vmatprep.subr.bf16.mxu0 %v2420
        %2530 = vmatpush1.bf16.msra.mxu0 %v2419
        %2531 = vmatprep.subr.bf16.mxu0 %v2424
        %2532 = vmatpush1.bf16.msra.mxu0 %v2423
        %2533 = vmatprep.subr.bf16.mxu0 %v2428
        %2534 = vmatpush1.bf16.msra.mxu0 %v2427
        %2535 = vmatprep.subr.bf16.mxu0 %v2432
        %2536 = vmatpush1.bf16.msra.mxu0 %v2431
        %2537 = vmatprep.subr.bf16.mxu0 %v2436
        %2538 = vmatpush1.bf16.msra.mxu0 %v2435
        %2539 = vmatprep.subr.bf16.mxu0 %v2440
        %2540 = vmatpush1.bf16.msra.mxu0 %v2439
        %2541 = vmatprep.subr.bf16.mxu0 %v2444
        %2542 = vmatpush1.bf16.msra.mxu0 %v2443
        %2543 = vmatprep.mubr.bf16.mxu0 %v2053
        %2544 = vmatmul.mubr.bf16.gmra.mrb[0].mxu0 %v2052
        %v2545 = vpop.f32.mrb[0].mxu0
        %v2546 = vadd.f32 0.0, %v2545
        %v2547 = vpop.f32.mrb[0].mxu0
        %v2548 = vadd.f32 0.0, %v2547
        %v2549 = vpop.f32.mrb[0].mxu0
        %v2550 = vadd.f32 0.0, %v2549
        %v2551 = vpop.f32.mrb[0].mxu0
        %v2552 = vadd.f32 0.0, %v2551
        %2553 = vmatprep.mubr.bf16.mxu0 %v2055
        %2554 = vmatmul.mubr.bf16.gmra.mrb[0].mxu0 %v2054
        %v2555 = vpop.f32.mrb[0].mxu0
        %v2556 = vadd.f32 0.0, %v2555
        %v2557 = vpop.f32.mrb[0].mxu0
        %v2558 = vadd.f32 0.0, %v2557
        %v2559 = vpop.f32.mrb[0].mxu0
        %v2560 = vadd.f32 0.0, %v2559
        %v2561 = vpop.f32.mrb[0].mxu0
        %v2562 = vadd.f32 0.0, %v2561
        %2563 = vmatprep.mubr.bf16.mxu0 %v2057
        %2564 = vmatmul.mubr.bf16.gmra.mrb[0].mxu0 %v2056
        %v2565 = vpop.f32.mrb[0].mxu0
        %v2566 = vadd.f32 0.0, %v2565
        %v2567 = vpop.f32.mrb[0].mxu0
        %v2568 = vadd.f32 0.0, %v2567
        %v2569 = vpop.f32.mrb[0].mxu0
        %v2570 = vadd.f32 0.0, %v2569
        %v2571 = vpop.f32.mrb[0].mxu0
        %v2572 = vadd.f32 0.0, %v2571
        %2573 = vmatprep.mubr.bf16.mxu0 %v2059
        %2574 = vmatmul.mubr.bf16.gmra.mrb[0].mxu0 %v2058
        %v2575 = vpop.f32.mrb[0].mxu0
        %v2576 = vadd.f32 0.0, %v2575
        %v2577 = vpop.f32.mrb[0].mxu0
        %v2578 = vadd.f32 0.0, %v2577
        %v2579 = vpop.f32.mrb[0].mxu0
        %v2580 = vadd.f32 0.0, %v2579
        %v2581 = vpop.f32.mrb[0].mxu0
        %v2582 = vadd.f32 0.0, %v2581
        %2583 = vdwg.mxu0
        %2584 = vmatprep.subr.bf16.mxu0 %v2386
        %2585 = vmatpush1.bf16.msra.mxu0 %v2385
        %2586 = vmatprep.subr.bf16.mxu0 %v2390
        %2587 = vmatpush1.bf16.msra.mxu0 %v2389
        %2588 = vmatprep.subr.bf16.mxu0 %v2394
        %2589 = vmatpush1.bf16.msra.mxu0 %v2393
        %2590 = vmatprep.subr.bf16.mxu0 %v2398
        %2591 = vmatpush1.bf16.msra.mxu0 %v2397
        %2592 = vmatprep.subr.bf16.mxu0 %v2402
        %2593 = vmatpush1.bf16.msra.mxu0 %v2401
        %2594 = vmatprep.subr.bf16.mxu0 %v2406
        %2595 = vmatpush1.bf16.msra.mxu0 %v2405
        %2596 = vmatprep.subr.bf16.mxu0 %v2410
        %2597 = vmatpush1.bf16.msra.mxu0 %v2409
        %2598 = vmatprep.subr.bf16.mxu0 %v2414
        %2599 = vmatpush1.bf16.msra.mxu0 %v2413
        %2600 = vmatprep.subr.bf16.mxu0 %v2418
        %2601 = vmatpush1.bf16.msra.mxu0 %v2417
        %2602 = vmatprep.subr.bf16.mxu0 %v2422
        %2603 = vmatpush1.bf16.msra.mxu0 %v2421
        %2604 = vmatprep.subr.bf16.mxu0 %v2426
        %2605 = vmatpush1.bf16.msra.mxu0 %v2425
        %2606 = vmatprep.subr.bf16.mxu0 %v2430
        %2607 = vmatpush1.bf16.msra.mxu0 %v2429
        %2608 = vmatprep.subr.bf16.mxu0 %v2434
        %2609 = vmatpush1.bf16.msra.mxu0 %v2433
        %2610 = vmatprep.subr.bf16.mxu0 %v2438
        %2611 = vmatpush1.bf16.msra.mxu0 %v2437
        %2612 = vmatprep.subr.bf16.mxu0 %v2442
        %2613 = vmatpush1.bf16.msra.mxu0 %v2441
        %2614 = vmatprep.subr.bf16.mxu0 %v2446
        %2615 = vmatpush1.bf16.msra.mxu0 %v2445
        %2616 = vmatprep.mubr.bf16.mxu0 %v2053
        %2617 = vmatmul.mubr.bf16.gmra.mrb[0].mxu0 %v2052
        %v2618 = vpop.f32.mrb[0].mxu0
        %v2619 = vadd.f32 0.0, %v2618
        %v2620 = vpop.f32.mrb[0].mxu0
        %v2621 = vadd.f32 0.0, %v2620
        %v2622 = vpop.f32.mrb[0].mxu0
        %v2623 = vadd.f32 0.0, %v2622
        %v2624 = vpop.f32.mrb[0].mxu0
        %v2625 = vadd.f32 0.0, %v2624
        %2626 = vmatprep.mubr.bf16.mxu0 %v2055
        %2627 = vmatmul.mubr.bf16.gmra.mrb[0].mxu0 %v2054
        %v2628 = vpop.f32.mrb[0].mxu0
        %v2629 = vadd.f32 0.0, %v2628
        %v2630 = vpop.f32.mrb[0].mxu0
        %v2631 = vadd.f32 0.0, %v2630
        %v2632 = vpop.f32.mrb[0].mxu0
        %v2633 = vadd.f32 0.0, %v2632
        %v2634 = vpop.f32.mrb[0].mxu0
        %v2635 = vadd.f32 0.0, %v2634
        %2636 = vmatprep.mubr.bf16.mxu0 %v2057
        %2637 = vmatmul.mubr.bf16.gmra.mrb[0].mxu0 %v2056
        %v2638 = vpop.f32.mrb[0].mxu0
        %v2639 = vadd.f32 0.0, %v2638
        %v2640 = vpop.f32.mrb[0].mxu0
        %v2641 = vadd.f32 0.0, %v2640
        %v2642 = vpop.f32.mrb[0].mxu0
        %v2643 = vadd.f32 0.0, %v2642
        %v2644 = vpop.f32.mrb[0].mxu0
        %v2645 = vadd.f32 0.0, %v2644
        %2646 = vmatprep.mubr.bf16.mxu0 %v2059
        %2647 = vmatmul.mubr.bf16.gmra.mrb[0].mxu0 %v2058
        %v2648 = vpop.f32.mrb[0].mxu0
        %v2649 = vadd.f32 0.0, %v2648
        %v2650 = vpop.f32.mrb[0].mxu0
        %v2651 = vadd.f32 0.0, %v2650
        %v2652 = vpop.f32.mrb[0].mxu0
        %v2653 = vadd.f32 0.0, %v2652
        %v2654 = vpop.f32.mrb[0].mxu0
        %v2655 = vadd.f32 0.0, %v2654
        %2656 = vdwg.mxu0
        %v2721 = vunpack.c.l.b16 %v2062
        %v2722 = vunpack.c.h.b16 %v2062
        %v2723 = vunpack.c.l.b16 %v2063
        %v2724 = vunpack.c.h.b16 %v2063
        %v2725 = vunpack.c.l.b16 %v2064
        %v2726 = vunpack.c.h.b16 %v2064
        %v2727 = vunpack.c.l.b16 %v2065
        %v2728 = vunpack.c.h.b16 %v2065
        %v2729 = vunpack.c.l.b16 %v2066
        %v2730 = vunpack.c.h.b16 %v2066
        %v2731 = vunpack.c.l.b16 %v2067
        %v2732 = vunpack.c.h.b16 %v2067
        %v2733 = vunpack.c.l.b16 %v2068
        %v2734 = vunpack.c.h.b16 %v2068
        %v2735 = vunpack.c.l.b16 %v2069
        %v2736 = vunpack.c.h.b16 %v2069
        %v2737 = vunpack.c.l.b16 %v2070
        %v2738 = vunpack.c.h.b16 %v2070
        %v2739 = vunpack.c.l.b16 %v2071
        %v2740 = vunpack.c.h.b16 %v2071
        %v2741 = vunpack.c.l.b16 %v2072
        %v2742 = vunpack.c.h.b16 %v2072
        %v2743 = vunpack.c.l.b16 %v2073
        %v2744 = vunpack.c.h.b16 %v2073
        %v2745 = vunpack.c.l.b16 %v2074
        %v2746 = vunpack.c.h.b16 %v2074
        %v2747 = vunpack.c.l.b16 %v2075
        %v2748 = vunpack.c.h.b16 %v2075
        %v2749 = vunpack.c.l.b16 %v2076
        %v2750 = vunpack.c.h.b16 %v2076
        %v2751 = vunpack.c.l.b16 %v2077
        %v2752 = vunpack.c.h.b16 %v2077
        %v2753 = vunpack.c.l.b16 %v2078
        %v2754 = vunpack.c.h.b16 %v2078
        %v2755 = vunpack.c.l.b16 %v2079
        %v2756 = vunpack.c.h.b16 %v2079
        %v2757 = vunpack.c.l.b16 %v2080
        %v2758 = vunpack.c.h.b16 %v2080
        %v2759 = vunpack.c.l.b16 %v2081
        %v2760 = vunpack.c.h.b16 %v2081
        %v2761 = vunpack.c.l.b16 %v2082
        %v2762 = vunpack.c.h.b16 %v2082
        %v2763 = vunpack.c.l.b16 %v2083
        %v2764 = vunpack.c.h.b16 %v2083
        %v2765 = vunpack.c.l.b16 %v2084
        %v2766 = vunpack.c.h.b16 %v2084
        %v2767 = vunpack.c.l.b16 %v2085
        %v2768 = vunpack.c.h.b16 %v2085
        %v2769 = vunpack.c.l.b16 %v2086
        %v2770 = vunpack.c.h.b16 %v2086
        %v2771 = vunpack.c.l.b16 %v2087
        %v2772 = vunpack.c.h.b16 %v2087
        %v2773 = vunpack.c.l.b16 %v2088
        %v2774 = vunpack.c.h.b16 %v2088
        %v2775 = vunpack.c.l.b16 %v2089
        %v2776 = vunpack.c.h.b16 %v2089
        %v2777 = vunpack.c.l.b16 %v2090
        %v2778 = vunpack.c.h.b16 %v2090
        %v2779 = vunpack.c.l.b16 %v2091
        %v2780 = vunpack.c.h.b16 %v2091
        %v2781 = vunpack.c.l.b16 %v2092
        %v2782 = vunpack.c.h.b16 %v2092
        %v2783 = vunpack.c.l.b16 %v2093
        %v2784 = vunpack.c.h.b16 %v2093
        %v2785 = vunpack.c.l.b16 %v2094
        %v2786 = vunpack.c.h.b16 %v2094
        %v2787 = vunpack.c.l.b16 %v2095
        %v2788 = vunpack.c.h.b16 %v2095
        %v2789 = vunpack.c.l.b16 %v2096
        %v2790 = vunpack.c.h.b16 %v2096
        %v2791 = vunpack.c.l.b16 %v2097
        %v2792 = vunpack.c.h.b16 %v2097
        %v2793 = vunpack.c.l.b16 %v2098
        %v2794 = vunpack.c.h.b16 %v2098
        %v2795 = vunpack.c.l.b16 %v2099
        %v2796 = vunpack.c.h.b16 %v2099
        %v2797 = vunpack.c.l.b16 %v2100
        %v2798 = vunpack.c.h.b16 %v2100
        %v2799 = vunpack.c.l.b16 %v2101
        %v2800 = vunpack.c.h.b16 %v2101
        %v2801 = vunpack.c.l.b16 %v2102
        %v2802 = vunpack.c.h.b16 %v2102
        %v2803 = vunpack.c.l.b16 %v2103
        %v2804 = vunpack.c.h.b16 %v2103
        %v2805 = vunpack.c.l.b16 %v2104
        %v2806 = vunpack.c.h.b16 %v2104
        %v2807 = vunpack.c.l.b16 %v2105
        %v2808 = vunpack.c.h.b16 %v2105
        %v2809 = vunpack.c.l.b16 %v2106
        %v2810 = vunpack.c.h.b16 %v2106
        %v2811 = vunpack.c.l.b16 %v2107
        %v2812 = vunpack.c.h.b16 %v2107
        %v2813 = vunpack.c.l.b16 %v2108
        %v2814 = vunpack.c.h.b16 %v2108
        %v2815 = vunpack.c.l.b16 %v2109
        %v2816 = vunpack.c.h.b16 %v2109
        %v2817 = vunpack.c.l.b16 %v2110
        %v2818 = vunpack.c.h.b16 %v2110
        %v2819 = vunpack.c.l.b16 %v2111
        %v2820 = vunpack.c.h.b16 %v2111
        %v2821 = vunpack.c.l.b16 %v2112
        %v2822 = vunpack.c.h.b16 %v2112
        %v2823 = vunpack.c.l.b16 %v2113
        %v2824 = vunpack.c.h.b16 %v2113
        %v2825 = vunpack.c.l.b16 %v2114
        %v2826 = vunpack.c.h.b16 %v2114
        %v2827 = vunpack.c.l.b16 %v2115
        %v2828 = vunpack.c.h.b16 %v2115
        %v2829 = vunpack.c.l.b16 %v2116
        %v2830 = vunpack.c.h.b16 %v2116
        %v2831 = vunpack.c.l.b16 %v2117
        %v2832 = vunpack.c.h.b16 %v2117
        %v2833 = vunpack.c.l.b16 %v2118
        %v2834 = vunpack.c.h.b16 %v2118
        %v2835 = vunpack.c.l.b16 %v2119
        %v2836 = vunpack.c.h.b16 %v2119
        %v2837 = vunpack.c.l.b16 %v2120
        %v2838 = vunpack.c.h.b16 %v2120
        %v2839 = vunpack.c.l.b16 %v2121
        %v2840 = vunpack.c.h.b16 %v2121
        %v2841 = vunpack.c.l.b16 %v2122
        %v2842 = vunpack.c.h.b16 %v2122
        %v2843 = vunpack.c.l.b16 %v2123
        %v2844 = vunpack.c.h.b16 %v2123
        %v2845 = vunpack.c.l.b16 %v2124
        %v2846 = vunpack.c.h.b16 %v2124
        %v2847 = vunpack.c.l.b16 %v2125
        %v2848 = vunpack.c.h.b16 %v2125
        %v2849 = vpack.c.b16 %v2725, %v2721
        %v2850 = vpack.c.b16 %v2726, %v2722
        %v2851 = vpack.c.b16 %v2727, %v2723
        %v2852 = vpack.c.b16 %v2728, %v2724
        %v2853 = vpack.c.b16 %v2733, %v2729
        %v2854 = vpack.c.b16 %v2734, %v2730
        %v2855 = vpack.c.b16 %v2735, %v2731
        %v2856 = vpack.c.b16 %v2736, %v2732
        %v2857 = vpack.c.b16 %v2741, %v2737
        %v2858 = vpack.c.b16 %v2742, %v2738
        %v2859 = vpack.c.b16 %v2743, %v2739
        %v2860 = vpack.c.b16 %v2744, %v2740
        %v2861 = vpack.c.b16 %v2749, %v2745
        %v2862 = vpack.c.b16 %v2750, %v2746
        %v2863 = vpack.c.b16 %v2751, %v2747
        %v2864 = vpack.c.b16 %v2752, %v2748
        %v2865 = vpack.c.b16 %v2757, %v2753
        %v2866 = vpack.c.b16 %v2758, %v2754
        %v2867 = vpack.c.b16 %v2759, %v2755
        %v2868 = vpack.c.b16 %v2760, %v2756
        %v2869 = vpack.c.b16 %v2765, %v2761
        %v2870 = vpack.c.b16 %v2766, %v2762
        %v2871 = vpack.c.b16 %v2767, %v2763
        %v2872 = vpack.c.b16 %v2768, %v2764
        %v2873 = vpack.c.b16 %v2773, %v2769
        %v2874 = vpack.c.b16 %v2774, %v2770
        %v2875 = vpack.c.b16 %v2775, %v2771
        %v2876 = vpack.c.b16 %v2776, %v2772
        %v2877 = vpack.c.b16 %v2781, %v2777
        %v2878 = vpack.c.b16 %v2782, %v2778
        %v2879 = vpack.c.b16 %v2783, %v2779
        %v2880 = vpack.c.b16 %v2784, %v2780
        %v2881 = vpack.c.b16 %v2789, %v2785
        %v2882 = vpack.c.b16 %v2790, %v2786
        %v2883 = vpack.c.b16 %v2791, %v2787
        %v2884 = vpack.c.b16 %v2792, %v2788
        %v2885 = vpack.c.b16 %v2797, %v2793
        %v2886 = vpack.c.b16 %v2798, %v2794
        %v2887 = vpack.c.b16 %v2799, %v2795
        %v2888 = vpack.c.b16 %v2800, %v2796
        %v2889 = vpack.c.b16 %v2805, %v2801
        %v2890 = vpack.c.b16 %v2806, %v2802
        %v2891 = vpack.c.b16 %v2807, %v2803
        %v2892 = vpack.c.b16 %v2808, %v2804
        %v2893 = vpack.c.b16 %v2813, %v2809
        %v2894 = vpack.c.b16 %v2814, %v2810
        %v2895 = vpack.c.b16 %v2815, %v2811
        %v2896 = vpack.c.b16 %v2816, %v2812
        %v2897 = vpack.c.b16 %v2821, %v2817
        %v2898 = vpack.c.b16 %v2822, %v2818
        %v2899 = vpack.c.b16 %v2823, %v2819
        %v2900 = vpack.c.b16 %v2824, %v2820
        %v2901 = vpack.c.b16 %v2829, %v2825
        %v2902 = vpack.c.b16 %v2830, %v2826
        %v2903 = vpack.c.b16 %v2831, %v2827
        %v2904 = vpack.c.b16 %v2832, %v2828
        %v2905 = vpack.c.b16 %v2837, %v2833
        %v2906 = vpack.c.b16 %v2838, %v2834
        %v2907 = vpack.c.b16 %v2839, %v2835
        %v2908 = vpack.c.b16 %v2840, %v2836
        %v2909 = vpack.c.b16 %v2845, %v2841
        %v2910 = vpack.c.b16 %v2846, %v2842
        %v2911 = vpack.c.b16 %v2847, %v2843
        %v2912 = vpack.c.b16 %v2848, %v2844
        %2977 = vmatprep.subr.bf16.mxu0 %v2850
        %2978 = vmatpush1.bf16.msra.mxu0 %v2849
        %2979 = vmatprep.subr.bf16.mxu0 %v2854
        %2980 = vmatpush1.bf16.msra.mxu0 %v2853
        %2981 = vmatprep.subr.bf16.mxu0 %v2858
        %2982 = vmatpush1.bf16.msra.mxu0 %v2857
        %2983 = vmatprep.subr.bf16.mxu0 %v2862
        %2984 = vmatpush1.bf16.msra.mxu0 %v2861
        %2985 = vmatprep.subr.bf16.mxu0 %v2866
        %2986 = vmatpush1.bf16.msra.mxu0 %v2865
        %2987 = vmatprep.subr.bf16.mxu0 %v2870
        %2988 = vmatpush1.bf16.msra.mxu0 %v2869
        %2989 = vmatprep.subr.bf16.mxu0 %v2874
        %2990 = vmatpush1.bf16.msra.mxu0 %v2873
        %2991 = vmatprep.subr.bf16.mxu0 %v2878
        %2992 = vmatpush1.bf16.msra.mxu0 %v2877
        %2993 = vmatprep.subr.bf16.mxu0 %v2882
        %2994 = vmatpush1.bf16.msra.mxu0 %v2881
        %2995 = vmatprep.subr.bf16.mxu0 %v2886
        %2996 = vmatpush1.bf16.msra.mxu0 %v2885
        %2997 = vmatprep.subr.bf16.mxu0 %v2890
        %2998 = vmatpush1.bf16.msra.mxu0 %v2889
        %2999 = vmatprep.subr.bf16.mxu0 %v2894
        %3000 = vmatpush1.bf16.msra.mxu0 %v2893
        %3001 = vmatprep.subr.bf16.mxu0 %v2898
        %3002 = vmatpush1.bf16.msra.mxu0 %v2897
        %3003 = vmatprep.subr.bf16.mxu0 %v2902
        %3004 = vmatpush1.bf16.msra.mxu0 %v2901
        %3005 = vmatprep.subr.bf16.mxu0 %v2906
        %3006 = vmatpush1.bf16.msra.mxu0 %v2905
        %3007 = vmatprep.subr.bf16.mxu0 %v2910
        %3008 = vmatpush1.bf16.msra.mxu0 %v2909
        %3009 = vmatprep.mubr.bf16.mxu0 %v2051
        %3010 = vmatmul.mubr.bf16.gmra.mrb[0].mxu0 %v2050
        %v3011 = vpop.f32.mrb[0].mxu0
        %v3012 = vadd.f32 %v2546, %v3011
        %v3013 = vpop.f32.mrb[0].mxu0
        %v3014 = vadd.f32 %v2548, %v3013
        %v3015 = vpop.f32.mrb[0].mxu0
        %v3016 = vadd.f32 %v2550, %v3015
        %v3017 = vpop.f32.mrb[0].mxu0
        %v3018 = vadd.f32 %v2552, %v3017
        %3019 = vmatprep.mubr.bf16.mxu0 %v2053
        %3020 = vmatmul.mubr.bf16.gmra.mrb[0].mxu0 %v2052
        %v3021 = vpop.f32.mrb[0].mxu0
        %v3022 = vadd.f32 %v2556, %v3021
        %v3023 = vpop.f32.mrb[0].mxu0
        %v3024 = vadd.f32 %v2558, %v3023
        %v3025 = vpop.f32.mrb[0].mxu0
        %v3026 = vadd.f32 %v2560, %v3025
        %v3027 = vpop.f32.mrb[0].mxu0
        %v3028 = vadd.f32 %v2562, %v3027
        %3029 = vmatprep.mubr.bf16.mxu0 %v2055
        %3030 = vmatmul.mubr.bf16.gmra.mrb[0].mxu0 %v2054
        %v3031 = vpop.f32.mrb[0].mxu0
        %v3032 = vadd.f32 %v2566, %v3031
        %v3033 = vpop.f32.mrb[0].mxu0
        %v3034 = vadd.f32 %v2568, %v3033
        %v3035 = vpop.f32.mrb[0].mxu0
        %v3036 = vadd.f32 %v2570, %v3035
        %v3037 = vpop.f32.mrb[0].mxu0
        %v3038 = vadd.f32 %v2572, %v3037
        %3039 = vmatprep.mubr.bf16.mxu0 %v2057
        %3040 = vmatmul.mubr.bf16.gmra.mrb[0].mxu0 %v2056
        %v3041 = vpop.f32.mrb[0].mxu0
        %v3042 = vadd.f32 %v2576, %v3041
        %v3043 = vpop.f32.mrb[0].mxu0
        %v3044 = vadd.f32 %v2578, %v3043
        %v3045 = vpop.f32.mrb[0].mxu0
        %v3046 = vadd.f32 %v2580, %v3045
        %v3047 = vpop.f32.mrb[0].mxu0
        %v3048 = vadd.f32 %v2582, %v3047
        %3049 = vdwg.mxu0
        %3050 = vmatprep.subr.bf16.mxu0 %v2852
        %3051 = vmatpush1.bf16.msra.mxu0 %v2851
        %3052 = vmatprep.subr.bf16.mxu0 %v2856
        %3053 = vmatpush1.bf16.msra.mxu0 %v2855
        %3054 = vmatprep.subr.bf16.mxu0 %v2860
        %3055 = vmatpush1.bf16.msra.mxu0 %v2859
        %3056 = vmatprep.subr.bf16.mxu0 %v2864
        %3057 = vmatpush1.bf16.msra.mxu0 %v2863
        %3058 = vmatprep.subr.bf16.mxu0 %v2868
        %3059 = vmatpush1.bf16.msra.mxu0 %v2867
        %3060 = vmatprep.subr.bf16.mxu0 %v2872
        %3061 = vmatpush1.bf16.msra.mxu0 %v2871
        %3062 = vmatprep.subr.bf16.mxu0 %v2876
        %3063 = vmatpush1.bf16.msra.mxu0 %v2875
        %3064 = vmatprep.subr.bf16.mxu0 %v2880
        %3065 = vmatpush1.bf16.msra.mxu0 %v2879
        %3066 = vmatprep.subr.bf16.mxu0 %v2884
        %3067 = vmatpush1.bf16.msra.mxu0 %v2883
        %3068 = vmatprep.subr.bf16.mxu0 %v2888
        %3069 = vmatpush1.bf16.msra.mxu0 %v2887
        %3070 = vmatprep.subr.bf16.mxu0 %v2892
        %3071 = vmatpush1.bf16.msra.mxu0 %v2891
        %3072 = vmatprep.subr.bf16.mxu0 %v2896
        %3073 = vmatpush1.bf16.msra.mxu0 %v2895
        %3074 = vmatprep.subr.bf16.mxu0 %v2900
        %3075 = vmatpush1.bf16.msra.mxu0 %v2899
        %3076 = vmatprep.subr.bf16.mxu0 %v2904
        %3077 = vmatpush1.bf16.msra.mxu0 %v2903
        %3078 = vmatprep.subr.bf16.mxu0 %v2908
        %3079 = vmatpush1.bf16.msra.mxu0 %v2907
        %3080 = vmatprep.subr.bf16.mxu0 %v2912
        %3081 = vmatpush1.bf16.msra.mxu0 %v2911
        %3082 = vmatprep.mubr.bf16.mxu0 %v2051
        %3083 = vmatmul.mubr.bf16.gmra.mrb[0].mxu0 %v2050
        %v3084 = vpop.f32.mrb[0].mxu0
        %v3085 = vadd.f32 %v2619, %v3084
        %v3086 = vpop.f32.mrb[0].mxu0
        %v3087 = vadd.f32 %v2621, %v3086
        %v3088 = vpop.f32.mrb[0].mxu0
        %v3089 = vadd.f32 %v2623, %v3088
        %v3090 = vpop.f32.mrb[0].mxu0
        %v3091 = vadd.f32 %v2625, %v3090
        %3092 = vmatprep.mubr.bf16.mxu0 %v2053
        %3093 = vmatmul.mubr.bf16.gmra.mrb[0].mxu0 %v2052
        %v3094 = vpop.f32.mrb[0].mxu0
        %v3095 = vadd.f32 %v2629, %v3094
        %v3096 = vpop.f32.mrb[0].mxu0
        %v3097 = vadd.f32 %v2631, %v3096
        %v3098 = vpop.f32.mrb[0].mxu0
        %v3099 = vadd.f32 %v2633, %v3098
        %v3100 = vpop.f32.mrb[0].mxu0
        %v3101 = vadd.f32 %v2635, %v3100
        %3102 = vmatprep.mubr.bf16.mxu0 %v2055
        %3103 = vmatmul.mubr.bf16.gmra.mrb[0].mxu0 %v2054
        %v3104 = vpop.f32.mrb[0].mxu0
        %v3105 = vadd.f32 %v2639, %v3104
        %v3106 = vpop.f32.mrb[0].mxu0
        %v3107 = vadd.f32 %v2641, %v3106
        %v3108 = vpop.f32.mrb[0].mxu0
        %v3109 = vadd.f32 %v2643, %v3108
        %v3110 = vpop.f32.mrb[0].mxu0
        %v3111 = vadd.f32 %v2645, %v3110
        %3112 = vmatprep.mubr.bf16.mxu0 %v2057
        %3113 = vmatmul.mubr.bf16.gmra.mrb[0].mxu0 %v2056
        %v3114 = vpop.f32.mrb[0].mxu0
        %v3115 = vadd.f32 %v2649, %v3114
        %v3116 = vpop.f32.mrb[0].mxu0
        %v3117 = vadd.f32 %v2651, %v3116
        %v3118 = vpop.f32.mrb[0].mxu0
        %v3119 = vadd.f32 %v2653, %v3118
        %v3120 = vpop.f32.mrb[0].mxu0
        %v3121 = vadd.f32 %v2655, %v3120
        %3122 = vdwg.mxu0
        %s3123 = scalar_lea.vmem %s3, 1024
        %v3124 = vld [vmem:[%s3123] sm:$0xff]
        %v3125 = vld [vmem:[%s3123 + $0x8] sm:$0xff]
        %v3126 = vld [vmem:[%s3123 + $0x10] sm:$0xff]
        %v3127 = vld [vmem:[%s3123 + $0x18] sm:$0xff]
        %v3128 = vld [vmem:[%s3123 + $0x20] sm:$0xff]
        %v3129 = vld [vmem:[%s3123 + $0x28] sm:$0xff]
        %v3130 = vld [vmem:[%s3123 + $0x30] sm:$0xff]
        %v3131 = vld [vmem:[%s3123 + $0x38] sm:$0xff]
        %v3132 = vld [vmem:[%s3123 + $0x40] sm:$0xff]
        %v3133 = vld [vmem:[%s3123 + $0x48] sm:$0xff]
        %v3134 = vld [vmem:[%s3123 + $0x50] sm:$0xff]
        %v3135 = vld [vmem:[%s3123 + $0x58] sm:$0xff]
        %v3136 = vld [vmem:[%s3123 + $0x60] sm:$0xff]
        %v3137 = vld [vmem:[%s3123 + $0x68] sm:$0xff]
        %v3138 = vld [vmem:[%s3123 + $0x70] sm:$0xff]
        %v3139 = vld [vmem:[%s3123 + $0x78] sm:$0xff]
        %v3140 = vld [vmem:[%s3123 + $0x80] sm:$0xff]
        %v3141 = vld [vmem:[%s3123 + $0x88] sm:$0xff]
        %v3142 = vld [vmem:[%s3123 + $0x90] sm:$0xff]
        %v3143 = vld [vmem:[%s3123 + $0x98] sm:$0xff]
        %v3144 = vld [vmem:[%s3123 + $0xa0] sm:$0xff]
        %v3145 = vld [vmem:[%s3123 + $0xa8] sm:$0xff]
        %v3146 = vld [vmem:[%s3123 + $0xb0] sm:$0xff]
        %v3147 = vld [vmem:[%s3123 + $0xb8] sm:$0xff]
        %v3148 = vld [vmem:[%s3123 + $0xc0] sm:$0xff]
        %v3149 = vld [vmem:[%s3123 + $0xc8] sm:$0xff]
        %v3150 = vld [vmem:[%s3123 + $0xd0] sm:$0xff]
        %v3151 = vld [vmem:[%s3123 + $0xd8] sm:$0xff]
        %v3152 = vld [vmem:[%s3123 + $0xe0] sm:$0xff]
        %v3153 = vld [vmem:[%s3123 + $0xe8] sm:$0xff]
        %v3154 = vld [vmem:[%s3123 + $0xf0] sm:$0xff]
        %v3155 = vld [vmem:[%s3123 + $0xf8] sm:$0xff]
        %v3156 = vld [vmem:[%s3123 + $0x100] sm:$0xff]
        %v3157 = vld [vmem:[%s3123 + $0x108] sm:$0xff]
        %v3158 = vld [vmem:[%s3123 + $0x110] sm:$0xff]
        %v3159 = vld [vmem:[%s3123 + $0x118] sm:$0xff]
        %v3160 = vld [vmem:[%s3123 + $0x120] sm:$0xff]
        %v3161 = vld [vmem:[%s3123 + $0x128] sm:$0xff]
        %v3162 = vld [vmem:[%s3123 + $0x130] sm:$0xff]
        %v3163 = vld [vmem:[%s3123 + $0x138] sm:$0xff]
        %v3164 = vld [vmem:[%s3123 + $0x140] sm:$0xff]
        %v3165 = vld [vmem:[%s3123 + $0x148] sm:$0xff]
        %v3166 = vld [vmem:[%s3123 + $0x150] sm:$0xff]
        %v3167 = vld [vmem:[%s3123 + $0x158] sm:$0xff]
        %v3168 = vld [vmem:[%s3123 + $0x160] sm:$0xff]
        %v3169 = vld [vmem:[%s3123 + $0x168] sm:$0xff]
        %v3170 = vld [vmem:[%s3123 + $0x170] sm:$0xff]
        %v3171 = vld [vmem:[%s3123 + $0x178] sm:$0xff]
        %v3172 = vld [vmem:[%s3123 + $0x180] sm:$0xff]
        %v3173 = vld [vmem:[%s3123 + $0x188] sm:$0xff]
        %v3174 = vld [vmem:[%s3123 + $0x190] sm:$0xff]
        %v3175 = vld [vmem:[%s3123 + $0x198] sm:$0xff]
        %v3176 = vld [vmem:[%s3123 + $0x1a0] sm:$0xff]
        %v3177 = vld [vmem:[%s3123 + $0x1a8] sm:$0xff]
        %v3178 = vld [vmem:[%s3123 + $0x1b0] sm:$0xff]
        %v3179 = vld [vmem:[%s3123 + $0x1b8] sm:$0xff]
        %v3180 = vld [vmem:[%s3123 + $0x1c0] sm:$0xff]
        %v3181 = vld [vmem:[%s3123 + $0x1c8] sm:$0xff]
        %v3182 = vld [vmem:[%s3123 + $0x1d0] sm:$0xff]
        %v3183 = vld [vmem:[%s3123 + $0x1d8] sm:$0xff]
        %v3184 = vld [vmem:[%s3123 + $0x1e0] sm:$0xff]
        %v3185 = vld [vmem:[%s3123 + $0x1e8] sm:$0xff]
        %v3186 = vld [vmem:[%s3123 + $0x1f0] sm:$0xff]
        %v3187 = vld [vmem:[%s3123 + $0x1f8] sm:$0xff]
        %v3252 = vunpack.c.l.b16 %v3124
        %v3253 = vunpack.c.h.b16 %v3124
        %v3254 = vunpack.c.l.b16 %v3125
        %v3255 = vunpack.c.h.b16 %v3125
        %v3256 = vunpack.c.l.b16 %v3126
        %v3257 = vunpack.c.h.b16 %v3126
        %v3258 = vunpack.c.l.b16 %v3127
        %v3259 = vunpack.c.h.b16 %v3127
        %v3260 = vunpack.c.l.b16 %v3128
        %v3261 = vunpack.c.h.b16 %v3128
        %v3262 = vunpack.c.l.b16 %v3129
        %v3263 = vunpack.c.h.b16 %v3129
        %v3264 = vunpack.c.l.b16 %v3130
        %v3265 = vunpack.c.h.b16 %v3130
        %v3266 = vunpack.c.l.b16 %v3131
        %v3267 = vunpack.c.h.b16 %v3131
        %v3268 = vunpack.c.l.b16 %v3132
        %v3269 = vunpack.c.h.b16 %v3132
        %v3270 = vunpack.c.l.b16 %v3133
        %v3271 = vunpack.c.h.b16 %v3133
        %v3272 = vunpack.c.l.b16 %v3134
        %v3273 = vunpack.c.h.b16 %v3134
        %v3274 = vunpack.c.l.b16 %v3135
        %v3275 = vunpack.c.h.b16 %v3135
        %v3276 = vunpack.c.l.b16 %v3136
        %v3277 = vunpack.c.h.b16 %v3136
        %v3278 = vunpack.c.l.b16 %v3137
        %v3279 = vunpack.c.h.b16 %v3137
        %v3280 = vunpack.c.l.b16 %v3138
        %v3281 = vunpack.c.h.b16 %v3138
        %v3282 = vunpack.c.l.b16 %v3139
        %v3283 = vunpack.c.h.b16 %v3139
        %v3284 = vunpack.c.l.b16 %v3140
        %v3285 = vunpack.c.h.b16 %v3140
        %v3286 = vunpack.c.l.b16 %v3141
        %v3287 = vunpack.c.h.b16 %v3141
        %v3288 = vunpack.c.l.b16 %v3142
        %v3289 = vunpack.c.h.b16 %v3142
        %v3290 = vunpack.c.l.b16 %v3143
        %v3291 = vunpack.c.h.b16 %v3143
        %v3292 = vunpack.c.l.b16 %v3144
        %v3293 = vunpack.c.h.b16 %v3144
        %v3294 = vunpack.c.l.b16 %v3145
        %v3295 = vunpack.c.h.b16 %v3145
        %v3296 = vunpack.c.l.b16 %v3146
        %v3297 = vunpack.c.h.b16 %v3146
        %v3298 = vunpack.c.l.b16 %v3147
        %v3299 = vunpack.c.h.b16 %v3147
        %v3300 = vunpack.c.l.b16 %v3148
        %v3301 = vunpack.c.h.b16 %v3148
        %v3302 = vunpack.c.l.b16 %v3149
        %v3303 = vunpack.c.h.b16 %v3149
        %v3304 = vunpack.c.l.b16 %v3150
        %v3305 = vunpack.c.h.b16 %v3150
        %v3306 = vunpack.c.l.b16 %v3151
        %v3307 = vunpack.c.h.b16 %v3151
        %v3308 = vunpack.c.l.b16 %v3152
        %v3309 = vunpack.c.h.b16 %v3152
        %v3310 = vunpack.c.l.b16 %v3153
        %v3311 = vunpack.c.h.b16 %v3153
        %v3312 = vunpack.c.l.b16 %v3154
        %v3313 = vunpack.c.h.b16 %v3154
        %v3314 = vunpack.c.l.b16 %v3155
        %v3315 = vunpack.c.h.b16 %v3155
        %v3316 = vunpack.c.l.b16 %v3156
        %v3317 = vunpack.c.h.b16 %v3156
        %v3318 = vunpack.c.l.b16 %v3157
        %v3319 = vunpack.c.h.b16 %v3157
        %v3320 = vunpack.c.l.b16 %v3158
        %v3321 = vunpack.c.h.b16 %v3158
        %v3322 = vunpack.c.l.b16 %v3159
        %v3323 = vunpack.c.h.b16 %v3159
        %v3324 = vunpack.c.l.b16 %v3160
        %v3325 = vunpack.c.h.b16 %v3160
        %v3326 = vunpack.c.l.b16 %v3161
        %v3327 = vunpack.c.h.b16 %v3161
        %v3328 = vunpack.c.l.b16 %v3162
        %v3329 = vunpack.c.h.b16 %v3162
        %v3330 = vunpack.c.l.b16 %v3163
        %v3331 = vunpack.c.h.b16 %v3163
        %v3332 = vunpack.c.l.b16 %v3164
        %v3333 = vunpack.c.h.b16 %v3164
        %v3334 = vunpack.c.l.b16 %v3165
        %v3335 = vunpack.c.h.b16 %v3165
        %v3336 = vunpack.c.l.b16 %v3166
        %v3337 = vunpack.c.h.b16 %v3166
        %v3338 = vunpack.c.l.b16 %v3167
        %v3339 = vunpack.c.h.b16 %v3167
        %v3340 = vunpack.c.l.b16 %v3168
        %v3341 = vunpack.c.h.b16 %v3168
        %v3342 = vunpack.c.l.b16 %v3169
        %v3343 = vunpack.c.h.b16 %v3169
        %v3344 = vunpack.c.l.b16 %v3170
        %v3345 = vunpack.c.h.b16 %v3170
        %v3346 = vunpack.c.l.b16 %v3171
        %v3347 = vunpack.c.h.b16 %v3171
        %v3348 = vunpack.c.l.b16 %v3172
        %v3349 = vunpack.c.h.b16 %v3172
        %v3350 = vunpack.c.l.b16 %v3173
        %v3351 = vunpack.c.h.b16 %v3173
        %v3352 = vunpack.c.l.b16 %v3174
        %v3353 = vunpack.c.h.b16 %v3174
        %v3354 = vunpack.c.l.b16 %v3175
        %v3355 = vunpack.c.h.b16 %v3175
        %v3356 = vunpack.c.l.b16 %v3176
        %v3357 = vunpack.c.h.b16 %v3176
        %v3358 = vunpack.c.l.b16 %v3177
        %v3359 = vunpack.c.h.b16 %v3177
        %v3360 = vunpack.c.l.b16 %v3178
        %v3361 = vunpack.c.h.b16 %v3178
        %v3362 = vunpack.c.l.b16 %v3179
        %v3363 = vunpack.c.h.b16 %v3179
        %v3364 = vunpack.c.l.b16 %v3180
        %v3365 = vunpack.c.h.b16 %v3180
        %v3366 = vunpack.c.l.b16 %v3181
        %v3367 = vunpack.c.h.b16 %v3181
        %v3368 = vunpack.c.l.b16 %v3182
        %v3369 = vunpack.c.h.b16 %v3182
        %v3370 = vunpack.c.l.b16 %v3183
        %v3371 = vunpack.c.h.b16 %v3183
        %v3372 = vunpack.c.l.b16 %v3184
        %v3373 = vunpack.c.h.b16 %v3184
        %v3374 = vunpack.c.l.b16 %v3185
        %v3375 = vunpack.c.h.b16 %v3185
        %v3376 = vunpack.c.l.b16 %v3186
        %v3377 = vunpack.c.h.b16 %v3186
        %v3378 = vunpack.c.l.b16 %v3187
        %v3379 = vunpack.c.h.b16 %v3187
        %v3380 = vpack.c.b16 %v3256, %v3252
        %v3381 = vpack.c.b16 %v3257, %v3253
        %v3382 = vpack.c.b16 %v3258, %v3254
        %v3383 = vpack.c.b16 %v3259, %v3255
        %v3384 = vpack.c.b16 %v3264, %v3260
        %v3385 = vpack.c.b16 %v3265, %v3261
        %v3386 = vpack.c.b16 %v3266, %v3262
        %v3387 = vpack.c.b16 %v3267, %v3263
        %v3388 = vpack.c.b16 %v3272, %v3268
        %v3389 = vpack.c.b16 %v3273, %v3269
        %v3390 = vpack.c.b16 %v3274, %v3270
        %v3391 = vpack.c.b16 %v3275, %v3271
        %v3392 = vpack.c.b16 %v3280, %v3276
        %v3393 = vpack.c.b16 %v3281, %v3277
        %v3394 = vpack.c.b16 %v3282, %v3278
        %v3395 = vpack.c.b16 %v3283, %v3279
        %v3396 = vpack.c.b16 %v3288, %v3284
        %v3397 = vpack.c.b16 %v3289, %v3285
        %v3398 = vpack.c.b16 %v3290, %v3286
        %v3399 = vpack.c.b16 %v3291, %v3287
        %v3400 = vpack.c.b16 %v3296, %v3292
        %v3401 = vpack.c.b16 %v3297, %v3293
        %v3402 = vpack.c.b16 %v3298, %v3294
        %v3403 = vpack.c.b16 %v3299, %v3295
        %v3404 = vpack.c.b16 %v3304, %v3300
        %v3405 = vpack.c.b16 %v3305, %v3301
        %v3406 = vpack.c.b16 %v3306, %v3302
        %v3407 = vpack.c.b16 %v3307, %v3303
        %v3408 = vpack.c.b16 %v3312, %v3308
        %v3409 = vpack.c.b16 %v3313, %v3309
        %v3410 = vpack.c.b16 %v3314, %v3310
        %v3411 = vpack.c.b16 %v3315, %v3311
        %v3412 = vpack.c.b16 %v3320, %v3316
        %v3413 = vpack.c.b16 %v3321, %v3317
        %v3414 = vpack.c.b16 %v3322, %v3318
        %v3415 = vpack.c.b16 %v3323, %v3319
        %v3416 = vpack.c.b16 %v3328, %v3324
        %v3417 = vpack.c.b16 %v3329, %v3325
        %v3418 = vpack.c.b16 %v3330, %v3326
        %v3419 = vpack.c.b16 %v3331, %v3327
        %v3420 = vpack.c.b16 %v3336, %v3332
        %v3421 = vpack.c.b16 %v3337, %v3333
        %v3422 = vpack.c.b16 %v3338, %v3334
        %v3423 = vpack.c.b16 %v3339, %v3335
        %v3424 = vpack.c.b16 %v3344, %v3340
        %v3425 = vpack.c.b16 %v3345, %v3341
        %v3426 = vpack.c.b16 %v3346, %v3342
        %v3427 = vpack.c.b16 %v3347, %v3343
        %v3428 = vpack.c.b16 %v3352, %v3348
        %v3429 = vpack.c.b16 %v3353, %v3349
        %v3430 = vpack.c.b16 %v3354, %v3350
        %v3431 = vpack.c.b16 %v3355, %v3351
        %v3432 = vpack.c.b16 %v3360, %v3356
        %v3433 = vpack.c.b16 %v3361, %v3357
        %v3434 = vpack.c.b16 %v3362, %v3358
        %v3435 = vpack.c.b16 %v3363, %v3359
        %v3436 = vpack.c.b16 %v3368, %v3364
        %v3437 = vpack.c.b16 %v3369, %v3365
        %v3438 = vpack.c.b16 %v3370, %v3366
        %v3439 = vpack.c.b16 %v3371, %v3367
        %v3440 = vpack.c.b16 %v3376, %v3372
        %v3441 = vpack.c.b16 %v3377, %v3373
        %v3442 = vpack.c.b16 %v3378, %v3374
        %v3443 = vpack.c.b16 %v3379, %v3375
        %3508 = vmatprep.subr.bf16.mxu0 %v3381
        %3509 = vmatpush1.bf16.msra.mxu0 %v3380
        %3510 = vmatprep.subr.bf16.mxu0 %v3385
        %3511 = vmatpush1.bf16.msra.mxu0 %v3384
        %3512 = vmatprep.subr.bf16.mxu0 %v3389
        %3513 = vmatpush1.bf16.msra.mxu0 %v3388
        %3514 = vmatprep.subr.bf16.mxu0 %v3393
        %3515 = vmatpush1.bf16.msra.mxu0 %v3392
        %3516 = vmatprep.subr.bf16.mxu0 %v3397
        %3517 = vmatpush1.bf16.msra.mxu0 %v3396
        %3518 = vmatprep.subr.bf16.mxu0 %v3401
        %3519 = vmatpush1.bf16.msra.mxu0 %v3400
        %3520 = vmatprep.subr.bf16.mxu0 %v3405
        %3521 = vmatpush1.bf16.msra.mxu0 %v3404
        %3522 = vmatprep.subr.bf16.mxu0 %v3409
        %3523 = vmatpush1.bf16.msra.mxu0 %v3408
        %3524 = vmatprep.subr.bf16.mxu0 %v3413
        %3525 = vmatpush1.bf16.msra.mxu0 %v3412
        %3526 = vmatprep.subr.bf16.mxu0 %v3417
        %3527 = vmatpush1.bf16.msra.mxu0 %v3416
        %3528 = vmatprep.subr.bf16.mxu0 %v3421
        %3529 = vmatpush1.bf16.msra.mxu0 %v3420
        %3530 = vmatprep.subr.bf16.mxu0 %v3425
        %3531 = vmatpush1.bf16.msra.mxu0 %v3424
        %3532 = vmatprep.subr.bf16.mxu0 %v3429
        %3533 = vmatpush1.bf16.msra.mxu0 %v3428
        %3534 = vmatprep.subr.bf16.mxu0 %v3433
        %3535 = vmatpush1.bf16.msra.mxu0 %v3432
        %3536 = vmatprep.subr.bf16.mxu0 %v3437
        %3537 = vmatpush1.bf16.msra.mxu0 %v3436
        %3538 = vmatprep.subr.bf16.mxu0 %v3441
        %3539 = vmatpush1.bf16.msra.mxu0 %v3440
        %3540 = vmatprep.mubr.bf16.mxu0 %v2055
        %3541 = vmatmul.mubr.bf16.gmra.mrb[0].mxu0 %v2054
        %v3542 = vpop.f32.mrb[0].mxu0
        %v3543 = vadd.f32 0.0, %v3542
        %v3544 = vpop.f32.mrb[0].mxu0
        %v3545 = vadd.f32 0.0, %v3544
        %v3546 = vpop.f32.mrb[0].mxu0
        %v3547 = vadd.f32 0.0, %v3546
        %v3548 = vpop.f32.mrb[0].mxu0
        %v3549 = vadd.f32 0.0, %v3548
        %3550 = vmatprep.mubr.bf16.mxu0 %v2057
        %3551 = vmatmul.mubr.bf16.gmra.mrb[0].mxu0 %v2056
        %v3552 = vpop.f32.mrb[0].mxu0
        %v3553 = vadd.f32 0.0, %v3552
        %v3554 = vpop.f32.mrb[0].mxu0
        %v3555 = vadd.f32 0.0, %v3554
        %v3556 = vpop.f32.mrb[0].mxu0
        %v3557 = vadd.f32 0.0, %v3556
        %v3558 = vpop.f32.mrb[0].mxu0
        %v3559 = vadd.f32 0.0, %v3558
        %3560 = vmatprep.mubr.bf16.mxu0 %v2059
        %3561 = vmatmul.mubr.bf16.gmra.mrb[0].mxu0 %v2058
        %v3562 = vpop.f32.mrb[0].mxu0
        %v3563 = vadd.f32 0.0, %v3562
        %v3564 = vpop.f32.mrb[0].mxu0
        %v3565 = vadd.f32 0.0, %v3564
        %v3566 = vpop.f32.mrb[0].mxu0
        %v3567 = vadd.f32 0.0, %v3566
        %v3568 = vpop.f32.mrb[0].mxu0
        %v3569 = vadd.f32 0.0, %v3568
        %3570 = vmatprep.mubr.bf16.mxu0 %v2061
        %3571 = vmatmul.mubr.bf16.gmra.mrb[0].mxu0 %v2060
        %v3572 = vpop.f32.mrb[0].mxu0
        %v3573 = vadd.f32 0.0, %v3572
        %v3574 = vpop.f32.mrb[0].mxu0
        %v3575 = vadd.f32 0.0, %v3574
        %v3576 = vpop.f32.mrb[0].mxu0
        %v3577 = vadd.f32 0.0, %v3576
        %v3578 = vpop.f32.mrb[0].mxu0
        %v3579 = vadd.f32 0.0, %v3578
        %3580 = vdwg.mxu0
        %3581 = vmatprep.subr.bf16.mxu0 %v3383
        %3582 = vmatpush1.bf16.msra.mxu0 %v3382
        %3583 = vmatprep.subr.bf16.mxu0 %v3387
        %3584 = vmatpush1.bf16.msra.mxu0 %v3386
        %3585 = vmatprep.subr.bf16.mxu0 %v3391
        %3586 = vmatpush1.bf16.msra.mxu0 %v3390
        %3587 = vmatprep.subr.bf16.mxu0 %v3395
        %3588 = vmatpush1.bf16.msra.mxu0 %v3394
        %3589 = vmatprep.subr.bf16.mxu0 %v3399
        %3590 = vmatpush1.bf16.msra.mxu0 %v3398
        %3591 = vmatprep.subr.bf16.mxu0 %v3403
        %3592 = vmatpush1.bf16.msra.mxu0 %v3402
        %3593 = vmatprep.subr.bf16.mxu0 %v3407
        %3594 = vmatpush1.bf16.msra.mxu0 %v3406
        %3595 = vmatprep.subr.bf16.mxu0 %v3411
        %3596 = vmatpush1.bf16.msra.mxu0 %v3410
        %3597 = vmatprep.subr.bf16.mxu0 %v3415
        %3598 = vmatpush1.bf16.msra.mxu0 %v3414
        %3599 = vmatprep.subr.bf16.mxu0 %v3419
        %3600 = vmatpush1.bf16.msra.mxu0 %v3418
        %3601 = vmatprep.subr.bf16.mxu0 %v3423
        %3602 = vmatpush1.bf16.msra.mxu0 %v3422
        %3603 = vmatprep.subr.bf16.mxu0 %v3427
        %3604 = vmatpush1.bf16.msra.mxu0 %v3426
        %3605 = vmatprep.subr.bf16.mxu0 %v3431
        %3606 = vmatpush1.bf16.msra.mxu0 %v3430
        %3607 = vmatprep.subr.bf16.mxu0 %v3435
        %3608 = vmatpush1.bf16.msra.mxu0 %v3434
        %3609 = vmatprep.subr.bf16.mxu0 %v3439
        %3610 = vmatpush1.bf16.msra.mxu0 %v3438
        %3611 = vmatprep.subr.bf16.mxu0 %v3443
        %3612 = vmatpush1.bf16.msra.mxu0 %v3442
        %3613 = vmatprep.mubr.bf16.mxu0 %v2055
        %3614 = vmatmul.mubr.bf16.gmra.mrb[0].mxu0 %v2054
        %v3615 = vpop.f32.mrb[0].mxu0
        %v3616 = vadd.f32 0.0, %v3615
        %v3617 = vpop.f32.mrb[0].mxu0
        %v3618 = vadd.f32 0.0, %v3617
        %v3619 = vpop.f32.mrb[0].mxu0
        %v3620 = vadd.f32 0.0, %v3619
        %v3621 = vpop.f32.mrb[0].mxu0
        %v3622 = vadd.f32 0.0, %v3621
        %3623 = vmatprep.mubr.bf16.mxu0 %v2057
        %3624 = vmatmul.mubr.bf16.gmra.mrb[0].mxu0 %v2056
        %v3625 = vpop.f32.mrb[0].mxu0
        %v3626 = vadd.f32 0.0, %v3625
        %v3627 = vpop.f32.mrb[0].mxu0
        %v3628 = vadd.f32 0.0, %v3627
        %v3629 = vpop.f32.mrb[0].mxu0
        %v3630 = vadd.f32 0.0, %v3629
        %v3631 = vpop.f32.mrb[0].mxu0
        %v3632 = vadd.f32 0.0, %v3631
        %3633 = vmatprep.mubr.bf16.mxu0 %v2059
        %3634 = vmatmul.mubr.bf16.gmra.mrb[0].mxu0 %v2058
        %v3635 = vpop.f32.mrb[0].mxu0
        %v3636 = vadd.f32 0.0, %v3635
        %v3637 = vpop.f32.mrb[0].mxu0
        %v3638 = vadd.f32 0.0, %v3637
        %v3639 = vpop.f32.mrb[0].mxu0
        %v3640 = vadd.f32 0.0, %v3639
        %v3641 = vpop.f32.mrb[0].mxu0
        %v3642 = vadd.f32 0.0, %v3641
        %3643 = vmatprep.mubr.bf16.mxu0 %v2061
        %3644 = vmatmul.mubr.bf16.gmra.mrb[0].mxu0 %v2060
        %v3645 = vpop.f32.mrb[0].mxu0
        %v3646 = vadd.f32 0.0, %v3645
        %v3647 = vpop.f32.mrb[0].mxu0
        %v3648 = vadd.f32 0.0, %v3647
        %v3649 = vpop.f32.mrb[0].mxu0
        %v3650 = vadd.f32 0.0, %v3649
        %v3651 = vpop.f32.mrb[0].mxu0
        %v3652 = vadd.f32 0.0, %v3651
        %3653 = vdwg.mxu0
        %v3654 = vadd.f32 %v3012, %v3543
        %v3655 = vadd.f32 %v3014, %v3545
        %v3656 = vadd.f32 %v3085, %v3616
        %v3657 = vadd.f32 %v3087, %v3618
        %v3658 = vadd.f32 %v3016, %v3547
        %v3659 = vadd.f32 %v3018, %v3549
        %v3660 = vadd.f32 %v3089, %v3620
        %v3661 = vadd.f32 %v3091, %v3622
        %v3662 = vadd.f32 %v3022, %v3553
        %v3663 = vadd.f32 %v3024, %v3555
        %v3664 = vadd.f32 %v3095, %v3626
        %v3665 = vadd.f32 %v3097, %v3628
        %v3666 = vadd.f32 %v3026, %v3557
        %v3667 = vadd.f32 %v3028, %v3559
        %v3668 = vadd.f32 %v3099, %v3630
        %v3669 = vadd.f32 %v3101, %v3632
        %v3670 = vadd.f32 %v3032, %v3563
        %v3671 = vadd.f32 %v3034, %v3565
        %v3672 = vadd.f32 %v3105, %v3636
        %v3673 = vadd.f32 %v3107, %v3638
        %v3674 = vadd.f32 %v3036, %v3567
        %v3675 = vadd.f32 %v3038, %v3569
        %v3676 = vadd.f32 %v3109, %v3640
        %v3677 = vadd.f32 %v3111, %v3642
        %v3678 = vadd.f32 %v3042, %v3573
        %v3679 = vadd.f32 %v3044, %v3575
        %v3680 = vadd.f32 %v3115, %v3646
        %v3681 = vadd.f32 %v3117, %v3648
        %v3682 = vadd.f32 %v3046, %v3577
        %v3683 = vadd.f32 %v3048, %v3579
        %v3684 = vadd.f32 %v3119, %v3650
        %v3685 = vadd.f32 %v3121, %v3652
        %v3686 = vmax.f32 %v3654, %v3655
        %v3687 = vmax.f32 %v3658, %v3659
        %v3688 = vmax.f32 %v3662, %v3663
        %v3689 = vmax.f32 %v3666, %v3667
        %v3690 = vmax.f32 %v3670, %v3671
        %v3691 = vmax.f32 %v3674, %v3675
        %v3692 = vmax.f32 %v3678, %v3679
        %v3693 = vmax.f32 %v3682, %v3683
        %v3694 = vmax.f32 %v3656, %v3657
        %v3695 = vmax.f32 %v3660, %v3661
        %v3696 = vmax.f32 %v3664, %v3665
        %v3697 = vmax.f32 %v3668, %v3669
        %v3698 = vmax.f32 %v3672, %v3673
        %v3699 = vmax.f32 %v3676, %v3677
        %v3700 = vmax.f32 %v3680, %v3681
        %v3701 = vmax.f32 %v3684, %v3685
        %v3702 = vmax.f32 %v3686, %v3694
        %v3703 = vmax.f32 %v3687, %v3695
        %v3704 = vmax.f32 %v3688, %v3696
        %v3705 = vmax.f32 %v3689, %v3697
        %v3706 = vmax.f32 %v3690, %v3698
        %v3707 = vmax.f32 %v3691, %v3699
        %v3708 = vmax.f32 %v3692, %v3700
        %v3709 = vmax.f32 %v3693, %v3701
        %v3710 = vld [vmem:[%s4] sm:$0x1]
        %v3712 = vlaneseq
        %v3713 = vshrl.u32 %v3712, 7
        %v3714 = vsub.s32 0, %v3713
        %v3715 = vrot.slane %v3710, %v3714
        %v3717 = vadd.f32 %v3702, %v3715
        %v3718 = vadd.f32 %v3703, %v3715
        %v3719 = vadd.f32 %v3704, %v3715
        %v3720 = vadd.f32 %v3705, %v3715
        %v3721 = vadd.f32 %v3706, %v3715
        %v3722 = vadd.f32 %v3707, %v3715
        %v3723 = vadd.f32 %v3708, %v3715
        %v3724 = vadd.f32 %v3709, %v3715
        %v3725 = vmax.f32 %v3717, 0.0
        %v3726 = vmax.f32 %v3718, 0.0
        %v3727 = vmax.f32 %v3719, 0.0
        %v3728 = vmax.f32 %v3720, 0.0
        %v3729 = vmax.f32 %v3721, 0.0
        %v3730 = vmax.f32 %v3722, 0.0
        %v3731 = vmax.f32 %v3723, 0.0
        %v3732 = vmax.f32 %v3724, 0.0
        %v3733 = vpack.c.bf16 %v3726, %v3725
        %v3734 = vpack.c.bf16 %v3728, %v3727
        %v3735 = vpack.c.bf16 %v3730, %v3729
        %v3736 = vpack.c.bf16 %v3732, %v3731
        %v3737 = vld [vmem:[%s5] sm:$0xf]
        %v3738 = vld [vmem:[%s5 + $0x4] sm:$0xf]
        %v3739 = vld [vmem:[%s5 + $0x8] sm:$0xf]
        %v3740 = vld [vmem:[%s5 + $0xc] sm:$0xf]
        %v3741 = vld [vmem:[%s5 + $0x10] sm:$0xf]
        %v3742 = vld [vmem:[%s5 + $0x14] sm:$0xf]
        %v3743 = vld [vmem:[%s5 + $0x18] sm:$0xf]
        %v3744 = vld [vmem:[%s5 + $0x1c] sm:$0xf]
        %v3745 = vld [vmem:[%s5 + $0x20] sm:$0xf]
        %v3746 = vld [vmem:[%s5 + $0x24] sm:$0xf]
        %v3747 = vld [vmem:[%s5 + $0x28] sm:$0xf]
        %v3748 = vld [vmem:[%s5 + $0x2c] sm:$0xf]
        %v3749 = vld [vmem:[%s5 + $0x30] sm:$0xf]
        %v3750 = vld [vmem:[%s5 + $0x34] sm:$0xf]
        %v3751 = vld [vmem:[%s5 + $0x38] sm:$0xf]
        %v3752 = vld [vmem:[%s5 + $0x3c] sm:$0xf]
        %s3753 = scalar_lea.vmem %s5, 64
        %v3754 = vld [vmem:[%s3753] sm:$0xf]
        %v3755 = vld [vmem:[%s3753 + $0x4] sm:$0xf]
        %v3756 = vld [vmem:[%s3753 + $0x8] sm:$0xf]
        %v3757 = vld [vmem:[%s3753 + $0xc] sm:$0xf]
        %v3758 = vld [vmem:[%s3753 + $0x10] sm:$0xf]
        %v3759 = vld [vmem:[%s3753 + $0x14] sm:$0xf]
        %v3760 = vld [vmem:[%s3753 + $0x18] sm:$0xf]
        %v3761 = vld [vmem:[%s3753 + $0x1c] sm:$0xf]
        %v3762 = vld [vmem:[%s3753 + $0x20] sm:$0xf]
        %v3763 = vld [vmem:[%s3753 + $0x24] sm:$0xf]
        %v3764 = vld [vmem:[%s3753 + $0x28] sm:$0xf]
        %v3765 = vld [vmem:[%s3753 + $0x2c] sm:$0xf]
        %v3766 = vld [vmem:[%s3753 + $0x30] sm:$0xf]
        %v3767 = vld [vmem:[%s3753 + $0x34] sm:$0xf]
        %v3768 = vld [vmem:[%s3753 + $0x38] sm:$0xf]
        %v3769 = vld [vmem:[%s3753 + $0x3c] sm:$0xf]
        %v3786 = vunpack.c.l.b16 %v3754
        %v3787 = vunpack.c.l.b16 %v3755
        %v3788 = vunpack.c.l.b16 %v3756
        %v3789 = vunpack.c.l.b16 %v3757
        %v3790 = vunpack.c.l.b16 %v3758
        %v3791 = vunpack.c.l.b16 %v3759
        %v3792 = vunpack.c.l.b16 %v3760
        %v3793 = vunpack.c.l.b16 %v3761
        %v3794 = vunpack.c.l.b16 %v3762
        %v3795 = vunpack.c.l.b16 %v3763
        %v3796 = vunpack.c.l.b16 %v3764
        %v3797 = vunpack.c.l.b16 %v3765
        %v3798 = vunpack.c.l.b16 %v3766
        %v3799 = vunpack.c.l.b16 %v3767
        %v3800 = vunpack.c.l.b16 %v3768
        %v3801 = vunpack.c.l.b16 %v3769
        %v3802 = vpack.c.b16 %v3787, %v3786
        %v3803 = vpack.c.b16 %v3789, %v3788
        %v3804 = vpack.c.b16 %v3791, %v3790
        %v3805 = vpack.c.b16 %v3793, %v3792
        %v3806 = vpack.c.b16 %v3795, %v3794
        %v3807 = vpack.c.b16 %v3797, %v3796
        %v3808 = vpack.c.b16 %v3799, %v3798
        %v3809 = vpack.c.b16 %v3801, %v3800
        %3818 = vmatprep.subr.bf16.mxu0 0
        %3819 = vmatpush1.bf16.msra.mxu0 %v3802
        %3820 = vmatprep.subr.bf16.mxu0 0
        %3821 = vmatpush1.bf16.msra.mxu0 %v3803
        %3822 = vmatprep.subr.bf16.mxu0 0
        %3823 = vmatpush1.bf16.msra.mxu0 %v3804
        %3824 = vmatprep.subr.bf16.mxu0 0
        %3825 = vmatpush1.bf16.msra.mxu0 %v3805
        %3826 = vmatprep.subr.bf16.mxu0 0
        %3827 = vmatpush1.bf16.msra.mxu0 %v3806
        %3828 = vmatprep.subr.bf16.mxu0 0
        %3829 = vmatpush1.bf16.msra.mxu0 %v3807
        %3830 = vmatprep.subr.bf16.mxu0 0
        %3831 = vmatpush1.bf16.msra.mxu0 %v3808
        %3832 = vmatprep.subr.bf16.mxu0 0
        %3833 = vmatpush1.bf16.msra.mxu0 %v3809
        %3834 = vmatprep.subr.bf16.mxu0 0
        %3835 = vmatpush1.bf16.msra.mxu0 0
        %3836 = vmatprep.subr.bf16.mxu0 0
        %3837 = vmatpush1.bf16.msra.mxu0 0
        %3838 = vmatprep.subr.bf16.mxu0 0
        %3839 = vmatpush1.bf16.msra.mxu0 0
        %3840 = vmatprep.subr.bf16.mxu0 0
        %3841 = vmatpush1.bf16.msra.mxu0 0
        %3842 = vmatprep.subr.bf16.mxu0 0
        %3843 = vmatpush1.bf16.msra.mxu0 0
        %3844 = vmatprep.subr.bf16.mxu0 0
        %3845 = vmatpush1.bf16.msra.mxu0 0
        %3846 = vmatprep.subr.bf16.mxu0 0
        %3847 = vmatpush1.bf16.msra.mxu0 0
        %3848 = vmatprep.subr.bf16.mxu0 0
        %3849 = vmatpush1.bf16.msra.mxu0 0
        %3850 = vmatprep.mubr.bf16.mxu0 0
        %3851 = vmatmul.mubr.bf16.gmra.mrb[0].mxu0 %v3734
        %v3852 = vpop.f32.mrb[0].mxu0
        %v3853 = vadd.f32 0.0, %v3852
        %v3854 = vpop.f32.mrb[0].mxu0
        %v3855 = vpop.f32.mrb[0].mxu0
        %v3856 = vadd.f32 0.0, %v3855
        %v3857 = vpop.f32.mrb[0].mxu0
        %3858 = vdwg.mxu0
        %v3875 = vunpack.c.l.b16 %v3737
        %v3876 = vunpack.c.l.b16 %v3738
        %v3877 = vunpack.c.l.b16 %v3739
        %v3878 = vunpack.c.l.b16 %v3740
        %v3879 = vunpack.c.l.b16 %v3741
        %v3880 = vunpack.c.l.b16 %v3742
        %v3881 = vunpack.c.l.b16 %v3743
        %v3882 = vunpack.c.l.b16 %v3744
        %v3883 = vunpack.c.l.b16 %v3745
        %v3884 = vunpack.c.l.b16 %v3746
        %v3885 = vunpack.c.l.b16 %v3747
        %v3886 = vunpack.c.l.b16 %v3748
        %v3887 = vunpack.c.l.b16 %v3749
        %v3888 = vunpack.c.l.b16 %v3750
        %v3889 = vunpack.c.l.b16 %v3751
        %v3890 = vunpack.c.l.b16 %v3752
        %v3891 = vpack.c.b16 %v3876, %v3875
        %v3892 = vpack.c.b16 %v3878, %v3877
        %v3893 = vpack.c.b16 %v3880, %v3879
        %v3894 = vpack.c.b16 %v3882, %v3881
        %v3895 = vpack.c.b16 %v3884, %v3883
        %v3896 = vpack.c.b16 %v3886, %v3885
        %v3897 = vpack.c.b16 %v3888, %v3887
        %v3898 = vpack.c.b16 %v3890, %v3889
        %3907 = vmatprep.subr.bf16.mxu0 0
        %3908 = vmatpush1.bf16.msra.mxu0 %v3891
        %3909 = vmatprep.subr.bf16.mxu0 0
        %3910 = vmatpush1.bf16.msra.mxu0 %v3892
        %3911 = vmatprep.subr.bf16.mxu0 0
        %3912 = vmatpush1.bf16.msra.mxu0 %v3893
        %3913 = vmatprep.subr.bf16.mxu0 0
        %3914 = vmatpush1.bf16.msra.mxu0 %v3894
        %3915 = vmatprep.subr.bf16.mxu0 0
        %3916 = vmatpush1.bf16.msra.mxu0 %v3895
        %3917 = vmatprep.subr.bf16.mxu0 0
        %3918 = vmatpush1.bf16.msra.mxu0 %v3896
        %3919 = vmatprep.subr.bf16.mxu0 0
        %3920 = vmatpush1.bf16.msra.mxu0 %v3897
        %3921 = vmatprep.subr.bf16.mxu0 0
        %3922 = vmatpush1.bf16.msra.mxu0 %v3898
        %3923 = vmatprep.subr.bf16.mxu0 0
        %3924 = vmatpush1.bf16.msra.mxu0 0
        %3925 = vmatprep.subr.bf16.mxu0 0
        %3926 = vmatpush1.bf16.msra.mxu0 0
        %3927 = vmatprep.subr.bf16.mxu0 0
        %3928 = vmatpush1.bf16.msra.mxu0 0
        %3929 = vmatprep.subr.bf16.mxu0 0
        %3930 = vmatpush1.bf16.msra.mxu0 0
        %3931 = vmatprep.subr.bf16.mxu0 0
        %3932 = vmatpush1.bf16.msra.mxu0 0
        %3933 = vmatprep.subr.bf16.mxu0 0
        %3934 = vmatpush1.bf16.msra.mxu0 0
        %3935 = vmatprep.subr.bf16.mxu0 0
        %3936 = vmatpush1.bf16.msra.mxu0 0
        %3937 = vmatprep.subr.bf16.mxu0 0
        %3938 = vmatpush1.bf16.msra.mxu0 0
        %3939 = vmatprep.mubr.bf16.mxu0 0
        %3940 = vmatmul.mubr.bf16.gmra.mrb[0].mxu0 %v3733
        %v3941 = vpop.f32.mrb[0].mxu0
        %v3942 = vadd.f32 %v3853, %v3941
        %v3943 = vpop.f32.mrb[0].mxu0
        %v3944 = vpop.f32.mrb[0].mxu0
        %v3945 = vadd.f32 %v3856, %v3944
        %v3946 = vpop.f32.mrb[0].mxu0
        %3947 = vdwg.mxu0
        %s3948 = scalar_lea.vmem %s5, 128
        %v3949 = vld [vmem:[%s3948] sm:$0xf]
        %v3950 = vld [vmem:[%s3948 + $0x4] sm:$0xf]
        %v3951 = vld [vmem:[%s3948 + $0x8] sm:$0xf]
        %v3952 = vld [vmem:[%s3948 + $0xc] sm:$0xf]
        %v3953 = vld [vmem:[%s3948 + $0x10] sm:$0xf]
        %v3954 = vld [vmem:[%s3948 + $0x14] sm:$0xf]
        %v3955 = vld [vmem:[%s3948 + $0x18] sm:$0xf]
        %v3956 = vld [vmem:[%s3948 + $0x1c] sm:$0xf]
        %v3957 = vld [vmem:[%s3948 + $0x20] sm:$0xf]
        %v3958 = vld [vmem:[%s3948 + $0x24] sm:$0xf]
        %v3959 = vld [vmem:[%s3948 + $0x28] sm:$0xf]
        %v3960 = vld [vmem:[%s3948 + $0x2c] sm:$0xf]
        %v3961 = vld [vmem:[%s3948 + $0x30] sm:$0xf]
        %v3962 = vld [vmem:[%s3948 + $0x34] sm:$0xf]
        %v3963 = vld [vmem:[%s3948 + $0x38] sm:$0xf]
        %v3964 = vld [vmem:[%s3948 + $0x3c] sm:$0xf]
        %v3981 = vunpack.c.l.b16 %v3949
        %v3982 = vunpack.c.l.b16 %v3950
        %v3983 = vunpack.c.l.b16 %v3951
        %v3984 = vunpack.c.l.b16 %v3952
        %v3985 = vunpack.c.l.b16 %v3953
        %v3986 = vunpack.c.l.b16 %v3954
        %v3987 = vunpack.c.l.b16 %v3955
        %v3988 = vunpack.c.l.b16 %v3956
        %v3989 = vunpack.c.l.b16 %v3957
        %v3990 = vunpack.c.l.b16 %v3958
        %v3991 = vunpack.c.l.b16 %v3959
        %v3992 = vunpack.c.l.b16 %v3960
        %v3993 = vunpack.c.l.b16 %v3961
        %v3994 = vunpack.c.l.b16 %v3962
        %v3995 = vunpack.c.l.b16 %v3963
        %v3996 = vunpack.c.l.b16 %v3964
        %v3997 = vpack.c.b16 %v3982, %v3981
        %v3998 = vpack.c.b16 %v3984, %v3983
        %v3999 = vpack.c.b16 %v3986, %v3985
        %v4000 = vpack.c.b16 %v3988, %v3987
        %v4001 = vpack.c.b16 %v3990, %v3989
        %v4002 = vpack.c.b16 %v3992, %v3991
        %v4003 = vpack.c.b16 %v3994, %v3993
        %v4004 = vpack.c.b16 %v3996, %v3995
        %4013 = vmatprep.subr.bf16.mxu0 0
        %4014 = vmatpush1.bf16.msra.mxu0 %v3997
        %4015 = vmatprep.subr.bf16.mxu0 0
        %4016 = vmatpush1.bf16.msra.mxu0 %v3998
        %4017 = vmatprep.subr.bf16.mxu0 0
        %4018 = vmatpush1.bf16.msra.mxu0 %v3999
        %4019 = vmatprep.subr.bf16.mxu0 0
        %4020 = vmatpush1.bf16.msra.mxu0 %v4000
        %4021 = vmatprep.subr.bf16.mxu0 0
        %4022 = vmatpush1.bf16.msra.mxu0 %v4001
        %4023 = vmatprep.subr.bf16.mxu0 0
        %4024 = vmatpush1.bf16.msra.mxu0 %v4002
        %4025 = vmatprep.subr.bf16.mxu0 0
        %4026 = vmatpush1.bf16.msra.mxu0 %v4003
        %4027 = vmatprep.subr.bf16.mxu0 0
        %4028 = vmatpush1.bf16.msra.mxu0 %v4004
        %4029 = vmatprep.subr.bf16.mxu0 0
        %4030 = vmatpush1.bf16.msra.mxu0 0
        %4031 = vmatprep.subr.bf16.mxu0 0
        %4032 = vmatpush1.bf16.msra.mxu0 0
        %4033 = vmatprep.subr.bf16.mxu0 0
        %4034 = vmatpush1.bf16.msra.mxu0 0
        %4035 = vmatprep.subr.bf16.mxu0 0
        %4036 = vmatpush1.bf16.msra.mxu0 0
        %4037 = vmatprep.subr.bf16.mxu0 0
        %4038 = vmatpush1.bf16.msra.mxu0 0
        %4039 = vmatprep.subr.bf16.mxu0 0
        %4040 = vmatpush1.bf16.msra.mxu0 0
        %4041 = vmatprep.subr.bf16.mxu0 0
        %4042 = vmatpush1.bf16.msra.mxu0 0
        %4043 = vmatprep.subr.bf16.mxu0 0
        %4044 = vmatpush1.bf16.msra.mxu0 0
        %4045 = vmatprep.mubr.bf16.mxu0 0
        %4046 = vmatmul.mubr.bf16.gmra.mrb[0].mxu0 %v3735
        %v4047 = vpop.f32.mrb[0].mxu0
        %v4048 = vadd.f32 0.0, %v4047
        %v4049 = vpop.f32.mrb[0].mxu0
        %v4050 = vpop.f32.mrb[0].mxu0
        %v4051 = vadd.f32 0.0, %v4050
        %v4052 = vpop.f32.mrb[0].mxu0
        %4053 = vdwg.mxu0
        %v4054 = vadd.f32 %v3942, %v4048
        %v4055 = vadd.f32 %v3945, %v4051
        %s4056 = scalar_lea.vmem %s5, 192
        %v4057 = vld [vmem:[%s4056] sm:$0xf]
        %v4058 = vld [vmem:[%s4056 + $0x4] sm:$0xf]
        %v4059 = vld [vmem:[%s4056 + $0x8] sm:$0xf]
        %v4060 = vld [vmem:[%s4056 + $0xc] sm:$0xf]
        %v4061 = vld [vmem:[%s4056 + $0x10] sm:$0xf]
        %v4062 = vld [vmem:[%s4056 + $0x14] sm:$0xf]
        %v4063 = vld [vmem:[%s4056 + $0x18] sm:$0xf]
        %v4064 = vld [vmem:[%s4056 + $0x1c] sm:$0xf]
        %v4065 = vld [vmem:[%s4056 + $0x20] sm:$0xf]
        %v4066 = vld [vmem:[%s4056 + $0x24] sm:$0xf]
        %v4067 = vld [vmem:[%s4056 + $0x28] sm:$0xf]
        %v4068 = vld [vmem:[%s4056 + $0x2c] sm:$0xf]
        %v4069 = vld [vmem:[%s4056 + $0x30] sm:$0xf]
        %v4070 = vld [vmem:[%s4056 + $0x34] sm:$0xf]
        %v4071 = vld [vmem:[%s4056 + $0x38] sm:$0xf]
        %v4072 = vld [vmem:[%s4056 + $0x3c] sm:$0xf]
        %v4089 = vunpack.c.l.b16 %v4057
        %v4090 = vunpack.c.l.b16 %v4058
        %v4091 = vunpack.c.l.b16 %v4059
        %v4092 = vunpack.c.l.b16 %v4060
        %v4093 = vunpack.c.l.b16 %v4061
        %v4094 = vunpack.c.l.b16 %v4062
        %v4095 = vunpack.c.l.b16 %v4063
        %v4096 = vunpack.c.l.b16 %v4064
        %v4097 = vunpack.c.l.b16 %v4065
        %v4098 = vunpack.c.l.b16 %v4066
        %v4099 = vunpack.c.l.b16 %v4067
        %v4100 = vunpack.c.l.b16 %v4068
        %v4101 = vunpack.c.l.b16 %v4069
        %v4102 = vunpack.c.l.b16 %v4070
        %v4103 = vunpack.c.l.b16 %v4071
        %v4104 = vunpack.c.l.b16 %v4072
        %v4105 = vpack.c.b16 %v4090, %v4089
        %v4106 = vpack.c.b16 %v4092, %v4091
        %v4107 = vpack.c.b16 %v4094, %v4093
        %v4108 = vpack.c.b16 %v4096, %v4095
        %v4109 = vpack.c.b16 %v4098, %v4097
        %v4110 = vpack.c.b16 %v4100, %v4099
        %v4111 = vpack.c.b16 %v4102, %v4101
        %v4112 = vpack.c.b16 %v4104, %v4103
        %4121 = vmatprep.subr.bf16.mxu0 0
        %4122 = vmatpush1.bf16.msra.mxu0 %v4105
        %4123 = vmatprep.subr.bf16.mxu0 0
        %4124 = vmatpush1.bf16.msra.mxu0 %v4106
        %4125 = vmatprep.subr.bf16.mxu0 0
        %4126 = vmatpush1.bf16.msra.mxu0 %v4107
        %4127 = vmatprep.subr.bf16.mxu0 0
        %4128 = vmatpush1.bf16.msra.mxu0 %v4108
        %4129 = vmatprep.subr.bf16.mxu0 0
        %4130 = vmatpush1.bf16.msra.mxu0 %v4109
        %4131 = vmatprep.subr.bf16.mxu0 0
        %4132 = vmatpush1.bf16.msra.mxu0 %v4110
        %4133 = vmatprep.subr.bf16.mxu0 0
        %4134 = vmatpush1.bf16.msra.mxu0 %v4111
        %4135 = vmatprep.subr.bf16.mxu0 0
        %4136 = vmatpush1.bf16.msra.mxu0 %v4112
        %4137 = vmatprep.subr.bf16.mxu0 0
        %4138 = vmatpush1.bf16.msra.mxu0 0
        %4139 = vmatprep.subr.bf16.mxu0 0
        %4140 = vmatpush1.bf16.msra.mxu0 0
        %4141 = vmatprep.subr.bf16.mxu0 0
        %4142 = vmatpush1.bf16.msra.mxu0 0
        %4143 = vmatprep.subr.bf16.mxu0 0
        %4144 = vmatpush1.bf16.msra.mxu0 0
        %4145 = vmatprep.subr.bf16.mxu0 0
        %4146 = vmatpush1.bf16.msra.mxu0 0
        %4147 = vmatprep.subr.bf16.mxu0 0
        %4148 = vmatpush1.bf16.msra.mxu0 0
        %4149 = vmatprep.subr.bf16.mxu0 0
        %4150 = vmatpush1.bf16.msra.mxu0 0
        %4151 = vmatprep.subr.bf16.mxu0 0
        %4152 = vmatpush1.bf16.msra.mxu0 0
        %4153 = vmatprep.mubr.bf16.mxu0 0
        %4154 = vmatmul.mubr.bf16.gmra.mrb[0].mxu0 %v3736
        %v4155 = vpop.f32.mrb[0].mxu0
        %v4156 = vadd.f32 0.0, %v4155
        %v4157 = vpop.f32.mrb[0].mxu0
        %v4158 = vpop.f32.mrb[0].mxu0
        %v4159 = vadd.f32 0.0, %v4158
        %v4160 = vpop.f32.mrb[0].mxu0
        %4161 = vdwg.mxu0
        %v4162 = vadd.f32 %v4054, %v4156
        %v4163 = vadd.f32 %v4055, %v4159
        %v4164 = vld [vmem:[%s6] sm:$0x1]
        %v4166 = vlaneseq
        %v4167 = vshrl.u32 %v4166, 7
        %v4168 = vsub.s32 0, %v4167
        %v4169 = vrot.slane %v4164, %v4168
        %v4171 = vadd.f32 %v4162, %v4169
        %v4172 = vadd.f32 %v4163, %v4169
        %v4173 = vmax.f32 %v4171, 0.0
        %v4174 = vmax.f32 %v4172, 0.0
        %v4175 = vpack.c.bf16 %v4174, %v4173
        %v4176 = vld [vmem:[%s7] sm:$0xf]
        %v4177 = vld [vmem:[%s7 + $0x4] sm:$0xf]
        %v4178 = vld [vmem:[%s7 + $0x8] sm:$0xf]
        %v4179 = vld [vmem:[%s7 + $0xc] sm:$0xf]
        %v4180 = vld [vmem:[%s7 + $0x10] sm:$0xf]
        %v4181 = vld [vmem:[%s7 + $0x14] sm:$0xf]
        %v4182 = vld [vmem:[%s7 + $0x18] sm:$0xf]
        %v4183 = vld [vmem:[%s7 + $0x1c] sm:$0xf]
        %v4184 = vld [vmem:[%s8] sm:$0x1]
        %v4186 = vlaneseq
        %v4187 = vshrl.u32 %v4186, 7
        %v4188 = vsub.s32 0, %v4187
        %v4189 = vrot.slane %v4184, %v4188
        %v4199 = vunpack.c.l.b16 %v4176
        %v4200 = vunpack.c.l.b16 %v4177
        %v4201 = vunpack.c.l.b16 %v4178
        %v4202 = vunpack.c.l.b16 %v4179
        %v4203 = vunpack.c.l.b16 %v4180
        %v4204 = vunpack.c.l.b16 %v4181
        %v4205 = vunpack.c.l.b16 %v4182
        %v4206 = vunpack.c.l.b16 %v4183
        %v4207 = vpack.c.b16 %v4200, %v4199
        %v4208 = vpack.c.b16 %v4202, %v4201
        %v4209 = vpack.c.b16 %v4204, %v4203
        %v4210 = vpack.c.b16 %v4206, %v4205
        %vm4215 = vcmask 523264
        %v4217 = vsel %vm4215, %v4175, 0
        %4219 = vmatprep.subr.bf16.mxu0 0
        %4220 = vmatpush1.bf16.msra.mxu0 %v4207
        %4221 = vmatprep.subr.bf16.mxu0 0
        %4222 = vmatpush1.bf16.msra.mxu0 %v4208
        %4223 = vmatprep.subr.bf16.mxu0 0
        %4224 = vmatpush1.bf16.msra.mxu0 %v4209
        %4225 = vmatprep.subr.bf16.mxu0 0
        %4226 = vmatpush1.bf16.msra.mxu0 %v4210
        %4227 = vmatprep.subr.bf16.mxu0 0
        %4228 = vmatpush1.bf16.msra.mxu0 0
        %4229 = vmatprep.subr.bf16.mxu0 0
        %4230 = vmatpush1.bf16.msra.mxu0 0
        %4231 = vmatprep.subr.bf16.mxu0 0
        %4232 = vmatpush1.bf16.msra.mxu0 0
        %4233 = vmatprep.subr.bf16.mxu0 0
        %4234 = vmatpush1.bf16.msra.mxu0 0
        %4235 = vmatprep.subr.bf16.mxu0 0
        %4236 = vmatpush1.bf16.msra.mxu0 0
        %4237 = vmatprep.subr.bf16.mxu0 0
        %4238 = vmatpush1.bf16.msra.mxu0 0
        %4239 = vmatprep.subr.bf16.mxu0 0
        %4240 = vmatpush1.bf16.msra.mxu0 0
        %4241 = vmatprep.subr.bf16.mxu0 0
        %4242 = vmatpush1.bf16.msra.mxu0 0
        %4243 = vmatprep.subr.bf16.mxu0 0
        %4244 = vmatpush1.bf16.msra.mxu0 0
        %4245 = vmatprep.subr.bf16.mxu0 0
        %4246 = vmatpush1.bf16.msra.mxu0 0
        %4247 = vmatprep.subr.bf16.mxu0 0
        %4248 = vmatpush1.bf16.msra.mxu0 0
        %4249 = vmatprep.subr.bf16.mxu0 0
        %4250 = vmatpush1.bf16.msra.mxu0 0
        %4251 = vmatprep.mubr.bf16.mxu0 0
        %4252 = vmatmul.mubr.bf16.gmra.mrb[0].mxu0 %v4217
        %v4253 = vpop.f32.mrb[0].mxu0
        %v4254 = vadd.f32 %v4189, %v4253
        %v4255 = vpop.f32.mrb[0].mxu0
        %v4256 = vpop.f32.mrb[0].mxu0
        %v4257 = vadd.f32 %v4189, %v4256
        %v4258 = vpop.f32.mrb[0].mxu0
        %4259 = vdwg.mxu0
        %4260 = vmax.xlane.f32.xlu0 %v4254
        %v4261 = vpop.xlane.xlu0 %4260
        %4262 = vmax.xlane.f32.xlu0 %v4257
        %v4263 = vpop.xlane.xlu0 %4262
        %v4264 = vsub.f32 %v4254, %v4261
        %v4265 = vsub.f32 %v4257, %v4263
        %v4266 = vmul.f32 %v4264, 1.442695
        %v4267 = vpow.pop %v4266
        %v4268 = vmul.f32 %v4265, 1.442695
        %v4269 = vpow.pop %v4268
        %4270 = vadd.xlane.f32.xlu0 %v4267
        %v4271 = vpop.xlane.xlu0 %4270
        %4272 = vadd.xlane.f32.xlu0 %v4269
        %v4273 = vpop.xlane.xlu0 %4272
        %v4274 = vlog2.pop %v4271
        %v4275 = vmul.f32 %v4274, 0.6931472
        %v4276 = vlog2.pop %v4273
        %v4277 = vmul.f32 %v4276, 0.6931472
        %v4278 = vadd.f32 %v4261, %v4275
        %v4279 = vadd.f32 %v4263, %v4277
        %v4280 = vsub.f32 %v4254, %v4278
        %v4281 = vsub.f32 %v4257, %v4279
        %4282 = vst [vmem:[%s427] sm:$0xff] %v4280
        %4283 = vst [vmem:[%s427 + $0x8] sm:$0xff] %v4281
        %s4284 = smul.u32 2, %s20
        %p4285 = scmp.lt.s32.totalorder %s4284, 3
        %s4286 = scalar_select %p4285, %s4284, 3
        %s4287 = smul.addr %s4286, 8
        %s4288 = scalar_lea.vmem %s9, %s4287
        // Predicated region
        $region98: #{cnn_forward.1} parent=92 // pred_check
          %p4289 = pneg %p232
        $region99: #{cnn_forward.1} parent=92 // pred_check_branch
          %4291 = sbr.rel (%p4289) target = $region101
        $region100: #{cnn_forward.1} parent=92 // pred_region
          %s4292 = smul.u32 2, %s20
        $region101: #{cnn_forward.1} parent=92 // pred_fallthru
          _
      $region93: #{cnn_forward.1} parent=5 // pred_fallthru
        _
      %p4293 = scmp.le.s32.totalorder 2, %s15
      // Predicated region
      $region102: #{cnn_forward.1} parent=5 // pred_check
        %p4294 = pneg %p4293
      $region103: #{cnn_forward.1} parent=5 // pred_check_branch
        %4296 = sbr.rel (%p4294) target = $region105
      $region104: #{cnn_forward.1} parent=5 // pred_region
        %s4297 = ssub.s32 %s15, 2
        // Predicated region
        $region106: #{cnn_forward.1} parent=104 // pred_check
          %p4298 = pneg %p238
        $region107: #{cnn_forward.1} parent=104 // pred_check_branch
          %4300 = sbr.rel (%p4298) target = $region109
        $region108: #{cnn_forward.1} parent=104 // pred_region
          %s4301 = smul.u32 2, %s21
          %p4302 = scmp.lt.s32.totalorder %s4301, 3
          %s4303 = scalar_select %p4302, %s4301, 3
          %s4304 = smul.addr %s4303, 8
          %s4305 = scalar_lea.vmem %s9, %s4304
        $region109: #{cnn_forward.1} parent=104 // pred_fallthru
          _
      $region105: #{cnn_forward.1} parent=5 // pred_fallthru
        _
    $region6: #{cnn_forward.1} parent=1 // loop_footer
      %s19 = sadd.s32 1, %s15
    $region7: #{cnn_forward.1} parent=1 // loop_footer_branch
      %14 = sbr.rel target = $region3
    $region8: #{cnn_forward.1} parent=1 // loop_exit
      _

</llo_original>
